<compile_context>
chip_gen: v7x
topology: tpu7x:2x2x1
jax: 0.10.0
libtpu: 0.0.40
codegen_flags: <defaults>
</compile_context>

<pallas_src>
import jax
import jax.numpy as jnp
from jax import lax
from jax.experimental import pallas as pl
from jax.experimental.pallas import tpu as pltpu


def multigru_kernel(
    scal_ref,   # [1, 4, TILE_B, TC]  attention-reduced input scalars (f32), one time chunk
    idf_ref,    # [TILE_B, ID]
    u3_ref,     # [4, 1, 3H]          emb @ W_ih, gates (r|z|n) on lanes, f32
    whh_ref,    # [4, H, 3H]          fused hidden weights (r|z|n), matmul dtype
    brz_ref,    # [4, 1, 2H]          b_ih + b_hh for r and z gates, f32
    bin_ref,    # [4, 1, H]           b_ih for the n gate, f32
    bhn_ref,    # [4, 1, H]           b_hh for the n gate, f32
    w1_ref,     # [4H+ID, 2H]         MLP layer 1, matmul dtype
    b1_ref,     # [1, 2H]
    w2_ref,     # [2H, H]
    b2_ref,     # [1, H]
    w3_ref,     # [H, 2]
    b3_ref,     # [1, 2]
    probs_ref,  # out: [TILE_B, 2]
    final_ref,  # out: [TILE_B, 4H+ID]  lane-dense concat(h_week..h_month, id)
    h_scr,      # scratch: [4, TILE_B, H] f32 resident hidden state
):
    c = pl.program_id(1)            # time-chunk index (sequential, "arbitrary")
    n_c = pl.num_programs(1)
    H = whh_ref.shape[1]
    TC = scal_ref.shape[-1]
    mm_dtype = whh_ref.dtype        # f32 or bf16 matmul operands (f32 accumulation)

    @pl.when(c == 0)
    def _init():
        h_scr[...] = jnp.zeros_like(h_scr)   # PyTorch GRU default h0 = 0

    # One GRU per stream (statically unrolled); per stream, the time chunk is
    # statically unrolled with the hidden state carried in registers.
    for s in range(4):
        h = h_scr[s]                         # [TILE_B, H] f32
        whh = whh_ref[s]                     # [H, 3H]
        u = u3_ref[s]                        # [1, 3H]   (emb @ W_ih, r|z|n)
        brz = brz_ref[s]                     # [1, 2H]
        b_in = bin_ref[s]                    # [1, H]
        b_hn = bhn_ref[s]                    # [1, H]
        sc = scal_ref[0, s]                  # [TILE_B, TC]

        for tt in range(TC):
            scol = sc[:, tt:tt + 1]                                   # [TILE_B, 1]
            # single fused MXU matmul for all 3 gates (hidden contribution)
            gh = jnp.dot(h.astype(mm_dtype), whh,
                         preferred_element_type=jnp.float32)          # [TILE_B, 3H]
            # rank-1 hoisted input contribution: scal * (emb @ W_ih)
            gi = scol * u                                             # [TILE_B, 3H]
            rz = jax.nn.sigmoid(gi[:, :2 * H] + gh[:, :2 * H] + brz)  # [TILE_B, 2H]
            r = rz[:, :H]
            z = rz[:, H:]
            n = jnp.tanh(gi[:, 2 * H:] + b_in + r * (gh[:, 2 * H:] + b_hn))
            h = (1.0 - z) * n + z * h

        h_scr[s] = h

    # Epilogue on the last time chunk: lane-dense `final` + classifier MLP + softmax.
    @pl.when(c == n_c - 1)
    def _epilogue():
        idf = idf_ref[...].astype(jnp.float32)
        final_v = jnp.concatenate(
            [h_scr[0], h_scr[1], h_scr[2], h_scr[3], idf], axis=-1)   # [TILE_B, 4H+ID]
        final_ref[...] = final_v.astype(final_ref.dtype)
        h1 = jnp.maximum(
            jnp.dot(final_v.astype(mm_dtype), w1_ref[...],
                    preferred_element_type=jnp.float32) + b1_ref[...], 0.0)
        # Dropout layers: identity in eval mode.
        h2 = jnp.maximum(
            jnp.dot(h1.astype(mm_dtype), w2_ref[...],
                    preferred_element_type=jnp.float32) + b2_ref[...], 0.0)
        logits = jnp.dot(h2.astype(mm_dtype), w3_ref[...],
                         preferred_element_type=jnp.float32) + b3_ref[...]
        m = jnp.max(logits, axis=-1, keepdims=True)
        e = jnp.exp(logits - m)
        probs_ref[...] = (e / jnp.sum(e, axis=-1, keepdims=True)).astype(probs_ref.dtype)


def _pick_tile_b(B):
    cands = [t for t in range(8, min(B, 256) + 1, 8) if B % t == 0]
    if not cands:
        return B                       # tiny / odd batch: single full tile
    two_core = [t for t in cands if B // t >= 2]   # n_b >= 2 keeps both v7x TCs busy
    return max(two_core) if two_core else max(cands)


def _pick_t_chunk(T, max_unroll=16):
    for tc in range(min(T, max_unroll), 0, -1):
        if T % tc == 0:
            return tc
    return 1


def multigru_forward(params, input_week, input_twoweek, input_threeweek, input_month,
                     id_feature, *, tile_b=None, t_chunk=None,
                     matmul_dtype=jnp.float32):
    """Returns (probs [B,2], final [B, 4H+ID]) like MultiGRU.forward (eval mode)."""
    B, T, F = input_week.shape
    H = params["embedding"].shape[1]
    ID = id_feature.shape[1]

    if tile_b is None:
        tile_b = _pick_tile_b(B)
    assert B % tile_b == 0
    n_b = B // tile_b
    if t_chunk is None:
        t_chunk = _pick_t_chunk(T)
    assert T % t_chunk == 0
    n_c = T // t_chunk

    attn = jax.nn.softmax(params["feature_attn"]).astype(jnp.float32)      # [F]
    emb = params["embedding"].astype(jnp.float32)                          # [1, H]

    # feature-attention reduction done once in the wrapper; the lane-sparse F axis
    # never enters the kernel.  scal[s,b,t] = sum_f x[s,b,t,f] * softmax(attn)[f]
    x_all = jnp.stack(
        [input_week, input_twoweek, input_threeweek, input_month], axis=0)  # [4,B,T,F]
    scal = jnp.einsum('sbtf,f->sbt', x_all.astype(jnp.float32), attn)       # [4,B,T]
    scal = scal.reshape(4, B, n_c, t_chunk).transpose(2, 0, 1, 3)           # [n_c,4,B,TC]

    w_ih = params["w_ih"].astype(jnp.float32)   # [4,3,H,H]
    w_hh = params["w_hh"].astype(jnp.float32)   # [4,3,H,H]
    b_ih = params["b_ih"].astype(jnp.float32)   # [4,3,1,H]
    b_hh = params["b_hh"].astype(jnp.float32)   # [4,3,1,H]

    # rank-1 hoist: (scal*emb) @ W_ih == scal * (emb @ W_ih); gates fused on lanes (r|z|n)
    u3 = jnp.einsum('oh,sghk->sgk', emb, w_ih).reshape(4, 1, 3 * H)                 # [4,1,3H]
    whh3 = jnp.transpose(w_hh, (0, 2, 1, 3)).reshape(4, H, 3 * H).astype(matmul_dtype)
    brz = (b_ih[:, :2] + b_hh[:, :2]).transpose(0, 2, 1, 3).reshape(4, 1, 2 * H)    # [4,1,2H]
    b_in = b_ih[:, 2]                                                               # [4,1,H]
    b_hn = b_hh[:, 2]                                                               # [4,1,H]

    w1 = params["w1"].astype(matmul_dtype)      # [4H+ID, 2H]
    b1 = params["b1"].astype(jnp.float32)
    w2 = params["w2"].astype(matmul_dtype)
    b2 = params["b2"].astype(jnp.float32)
    w3 = params["w3"].astype(matmul_dtype)
    b3 = params["b3"].astype(jnp.float32)

    def full(arr):  # resident, constant-index block (weights/biases)
        return pl.BlockSpec(arr.shape, lambda i, c, nd=arr.ndim: (0,) * nd)

    in_specs = [
        pl.BlockSpec((1, 4, tile_b, t_chunk), lambda i, c: (c, 0, i, 0)),  # per time chunk
        pl.BlockSpec((tile_b, ID), lambda i, c: (i, 0)),                   # per batch tile
        full(u3), full(whh3), full(brz), full(b_in), full(b_hn),
        full(w1), full(b1), full(w2), full(b2), full(w3), full(b3),
    ]
    out_specs = [
        pl.BlockSpec((tile_b, 2), lambda i, c: (i, 0)),
        pl.BlockSpec((tile_b, 4 * H + ID), lambda i, c: (i, 0)),           # lane-dense final
    ]
    out_shape = [
        jax.ShapeDtypeStruct((B, 2), jnp.float32),
        jax.ShapeDtypeStruct((B, 4 * H + ID), jnp.float32),
    ]

    probs, final = pl.pallas_call(
        multigru_kernel,
        out_shape=out_shape,
        grid_spec=pltpu.PrefetchScalarGridSpec(
            num_scalar_prefetch=0,
            grid=(n_b, n_c),
            in_specs=in_specs,
            out_specs=out_specs,
            scratch_shapes=[pltpu.VMEM((4, tile_b, H), jnp.float32)],
        ),
        compiler_params=pltpu.CompilerParams(
            dimension_semantics=("parallel", "arbitrary"),
            vmem_limit_bytes=48 * 1024 * 1024,   # > v5e/v6e 16/32 MiB defaults, < v7x 64 MiB
        ),
    )(scal, id_feature.astype(jnp.float32), u3, whh3, brz, b_in, b_hn,
      w1, b1, w2, b2, w3, b3)

    return probs, final


# ------------------------------- init + reference -------------------------------

def init_params(key, num_features, hidden_size, id_feature_size):
    H = hidden_size
    ks = jax.random.split(key, 6)
    embedding = jax.random.uniform(ks[0], (1, H), jnp.float32)            # torch.rand
    feature_attn = jax.random.uniform(ks[1], (num_features,), jnp.float32)

    def gru(k):
        bound = 1.0 / jnp.sqrt(H)
        kk = jax.random.split(k, 4)
        w_ih = jax.random.uniform(kk[0], (3, H, H), jnp.float32, -bound, bound)
        w_hh = jax.random.uniform(kk[1], (3, H, H), jnp.float32, -bound, bound)
        b_ih = jax.random.uniform(kk[2], (3, 1, H), jnp.float32, -bound, bound)
        b_hh = jax.random.uniform(kk[3], (3, 1, H), jnp.float32, -bound, bound)
        return w_ih, w_hh, b_ih, b_hh

    grus = [gru(k) for k in jax.random.split(ks[2], 4)]
    w_ih = jnp.stack([g[0] for g in grus])
    w_hh = jnp.stack([g[1] for g in grus])
    b_ih = jnp.stack([g[2] for g in grus])
    b_hh = jnp.stack([g[3] for g in grus])

    def linear(k, fan_in, fan_out):
        kw, kb = jax.random.split(k)
        bound = 1.0 / jnp.sqrt(fan_in)
        w = jax.random.uniform(kw, (fan_in, fan_out), jnp.float32, -bound, bound)
        b = jax.random.uniform(kb, (1, fan_out), jnp.float32, -bound, bound)
        return w, b

    d_in = 4 * H + id_feature_size
    w1, b1 = linear(ks[3], d_in, 2 * H)
    w2, b2 = linear(ks[4], 2 * H, H)
    w3, b3 = linear(ks[5], H, 2)
    return dict(embedding=embedding, feature_attn=feature_attn,
                w_ih=w_ih, w_hh=w_hh, b_ih=b_ih, b_hh=b_hh,
                w1=w1, b1=b1, w2=w2, b2=b2, w3=w3, b3=b3)


def _gru_final_ref(x_seq, wih, whh, bih, bhh):
    B, T, H = x_seq.shape

    def step(h, x_t):
        r = jax.nn.sigmoid(x_t @ wih[0] + bih[0] + h @ whh[0] + bhh[0])
        z = jax.nn.sigmoid(x_t @ wih[1] + bih[1] + h @ whh[1] + bhh[1])
        n = jnp.tanh(x_t @ wih[2] + bih[2] + r * (h @ whh[2] + bhh[2]))
        return (1.0 - z) * n + z * h, None

    h0 = jnp.zeros((B, H), jnp.float32)
    hT, _ = lax.scan(step, h0, jnp.transpose(x_seq, (1, 0, 2)))
    return hT


def multigru_reference(params, xw, x2w, x3w, xm, idf):
    attn = jax.nn.softmax(params["feature_attn"])
    emb = params["embedding"]

    def project(x):  # [B,T,F] -> [B,T,H]
        scal = jnp.sum(x * attn[None, None, :], axis=-1)
        return scal[..., None] * emb[0]

    finals = []
    for s, x in enumerate([xw, x2w, x3w, xm]):
        finals.append(_gru_final_ref(project(x), params["w_ih"][s], params["w_hh"][s],
                                     params["b_ih"][s], params["b_hh"][s]))
    final = jnp.concatenate(finals + [idf], axis=-1)
    h1 = jnp.maximum(final @ params["w1"] + params["b1"], 0.0)
    h2 = jnp.maximum(h1 @ params["w2"] + params["b2"], 0.0)
    logits = h2 @ params["w3"] + params["b3"]
    return jax.nn.softmax(logits, axis=-1), final


if __name__ == "__main__":
    B, T, F, H, ID = 8, 8, 4, 32, 16   # batch, seq len, num_features, hidden_size, id_feature_size

    key = jax.random.PRNGKey(0)
    kp, k1, k2, k3, k4, k5 = jax.random.split(key, 6)
    params = init_params(kp, F, H, ID)
    xw = jax.random.normal(k1, (B, T, F), jnp.float32)
    x2w = jax.random.normal(k2, (B, T, F), jnp.float32)
    x3w = jax.random.normal(k3, (B, T, F), jnp.float32)
    xm = jax.random.normal(k4, (B, T, F), jnp.float32)
    idf = jax.random.normal(k5, (B, ID), jnp.float32)

    # f32 path: exact-parity check against the pure-JAX reference.
    probs, final = multigru_forward(params, xw, x2w, x3w, xm, idf)
    probs, final = jax.block_until_ready((probs, final))

    ref_probs, ref_final = multigru_reference(params, xw, x2w, x3w, xm, idf)
    assert probs.shape == (B, 2) and final.shape == (B, 4 * H + ID)
    assert jnp.allclose(final, ref_final, atol=5e-4, rtol=5e-4), "final mismatch vs reference"
    assert jnp.allclose(probs, ref_probs, atol=5e-4, rtol=5e-4), "probs mismatch vs reference"

    # bf16 matmul-operand path (production path on v6e/v7x): compile/run + sanity checks.
    probs_bf, final_bf = multigru_forward(params, xw, x2w, x3w, xm, idf,
                                          matmul_dtype=jnp.bfloat16)
    probs_bf, final_bf = jax.block_until_ready((probs_bf, final_bf))
    assert probs_bf.shape == (B, 2) and final_bf.shape == (B, 4 * H + ID)
    assert bool(jnp.all(jnp.isfinite(probs_bf))) and bool(jnp.all(jnp.isfinite(final_bf)))
    assert jnp.allclose(jnp.sum(probs_bf, axis=-1), 1.0, atol=1e-3)

    print("KERNEL_OK")
</pallas_src>

<mosaic_0001>
module attributes {stable_mosaic.version = 11 : i64} {
  func.func @multigru_kernel(%arg0: i32, %arg1: i32, %arg2: memref<1x4x8x8xf32, #tpu.memory_space<vmem>>, %arg3: memref<8x16xf32, #tpu.memory_space<vmem>>, %arg4: memref<4x1x96xf32, #tpu.memory_space<vmem>>, %arg5: memref<4x32x96xf32, #tpu.memory_space<vmem>>, %arg6: memref<4x1x64xf32, #tpu.memory_space<vmem>>, %arg7: memref<4x1x32xf32, #tpu.memory_space<vmem>>, %arg8: memref<4x1x32xf32, #tpu.memory_space<vmem>>, %arg9: memref<144x64xf32, #tpu.memory_space<vmem>>, %arg10: memref<1x64xf32, #tpu.memory_space<vmem>>, %arg11: memref<64x32xf32, #tpu.memory_space<vmem>>, %arg12: memref<1x32xf32, #tpu.memory_space<vmem>>, %arg13: memref<32x2xf32, #tpu.memory_space<vmem>>, %arg14: memref<1x2xf32, #tpu.memory_space<vmem>>, %arg15: memref<8x2xf32, #tpu.memory_space<vmem>>, %arg16: memref<8x144xf32, #tpu.memory_space<vmem>>, %arg17: memref<4x8x32xf32, #tpu.memory_space<vmem>>) attributes {dimension_semantics = [#tpu.dimension_semantics<parallel>, #tpu.dimension_semantics<arbitrary>], iteration_bounds = array<i64: 1, 1>, scalar_prefetch = 0 : i64, scratch_operands = 1 : i64, tpu.core_type = #tpu.core_type<tc>, window_params = [{transform_indices = @transform_0, window_bounds = array<i64: 1, 4, 8, 8>}, {transform_indices = @transform_1, window_bounds = array<i64: 8, 16>}, {pipeline_mode = #tpu.pipeline_mode<synchronous>, transform_indices = @transform_2, window_bounds = array<i64: 4, 1, 96>}, {pipeline_mode = #tpu.pipeline_mode<synchronous>, transform_indices = @transform_3, window_bounds = array<i64: 4, 32, 96>}, {pipeline_mode = #tpu.pipeline_mode<synchronous>, transform_indices = @transform_4, window_bounds = array<i64: 4, 1, 64>}, {pipeline_mode = #tpu.pipeline_mode<synchronous>, transform_indices = @transform_5, window_bounds = array<i64: 4, 1, 32>}, {pipeline_mode = #tpu.pipeline_mode<synchronous>, transform_indices = @transform_6, window_bounds = array<i64: 4, 1, 32>}, {pipeline_mode = #tpu.pipeline_mode<synchronous>, transform_indices = @transform_7, window_bounds = array<i64: 144, 64>}, {pipeline_mode = #tpu.pipeline_mode<synchronous>, transform_indices = @transform_8, window_bounds = array<i64: 1, 64>}, {pipeline_mode = #tpu.pipeline_mode<synchronous>, transform_indices = @transform_9, window_bounds = array<i64: 64, 32>}, {pipeline_mode = #tpu.pipeline_mode<synchronous>, transform_indices = @transform_10, window_bounds = array<i64: 1, 32>}, {pipeline_mode = #tpu.pipeline_mode<synchronous>, transform_indices = @transform_11, window_bounds = array<i64: 32, 2>}, {pipeline_mode = #tpu.pipeline_mode<synchronous>, transform_indices = @transform_12, window_bounds = array<i64: 1, 2>}, {transform_indices = @transform_13, window_bounds = array<i64: 8, 2>}, {transform_indices = @transform_14, window_bounds = array<i64: 8, 144>}]} {
    %c0_i32 = arith.constant 0 : i32
    %0 = arith.cmpi eq, %arg1, %c0_i32 : i32
    %1 = arith.extui %0 : i1 to i32
    %c0_i32_0 = arith.constant 0 : i32
    %2 = arith.cmpi ne, %1, %c0_i32_0 : i32
    scf.if %2 {
      %cst_194 = arith.constant 0.000000e+00 : f32
      %1066 = vector.broadcast %cst_194 : f32 to vector<4x8x32xf32>
      %c0_195 = arith.constant 0 : index
      %c0_196 = arith.constant 0 : index
      %c0_197 = arith.constant 0 : index
      %1067 = vector.load %arg17[%c0_195, %c0_196, %c0_197] : memref<4x8x32xf32, #tpu.memory_space<vmem>>, vector<4x8x32xf32>
      tpu.vector_store %arg17[%c0_195, %c0_196, %c0_197], %1066 {strides = array<i32>} : memref<4x8x32xf32, #tpu.memory_space<vmem>>, vector<4x8x32xf32>,
    } else {
    }
    %c0 = arith.constant 0 : index
    %c0_1 = arith.constant 0 : index
    %c0_2 = arith.constant 0 : index
    %3 = vector.load %arg17[%c0, %c0_1, %c0_2] : memref<4x8x32xf32, #tpu.memory_space<vmem>>, vector<1x8x32xf32>
    %4 = vector.shape_cast %3 : vector<1x8x32xf32> to vector<8x32xf32>
    %c0_3 = arith.constant 0 : index
    %c0_4 = arith.constant 0 : index
    %c0_5 = arith.constant 0 : index
    %5 = vector.load %arg5[%c0_3, %c0_4, %c0_5] : memref<4x32x96xf32, #tpu.memory_space<vmem>>, vector<1x32x96xf32>
    %6 = vector.shape_cast %5 : vector<1x32x96xf32> to vector<32x96xf32>
    %c0_6 = arith.constant 0 : index
    %c0_7 = arith.constant 0 : index
    %c0_8 = arith.constant 0 : index
    %7 = vector.load %arg4[%c0_6, %c0_7, %c0_8] : memref<4x1x96xf32, #tpu.memory_space<vmem>>, vector<1x1x96xf32>
    %8 = vector.shape_cast %7 : vector<1x1x96xf32> to vector<1x96xf32>
    %c0_9 = arith.constant 0 : index
    %c0_10 = arith.constant 0 : index
    %c0_11 = arith.constant 0 : index
    %9 = vector.load %arg6[%c0_9, %c0_10, %c0_11] : memref<4x1x64xf32, #tpu.memory_space<vmem>>, vector<1x1x64xf32>
    %10 = vector.shape_cast %9 : vector<1x1x64xf32> to vector<1x64xf32>
    %c0_12 = arith.constant 0 : index
    %c0_13 = arith.constant 0 : index
    %c0_14 = arith.constant 0 : index
    %11 = vector.load %arg7[%c0_12, %c0_13, %c0_14] : memref<4x1x32xf32, #tpu.memory_space<vmem>>, vector<1x1x32xf32>
    %12 = vector.shape_cast %11 : vector<1x1x32xf32> to vector<1x32xf32>
    %c0_15 = arith.constant 0 : index
    %c0_16 = arith.constant 0 : index
    %c0_17 = arith.constant 0 : index
    %13 = vector.load %arg8[%c0_15, %c0_16, %c0_17] : memref<4x1x32xf32, #tpu.memory_space<vmem>>, vector<1x1x32xf32>
    %14 = vector.shape_cast %13 : vector<1x1x32xf32> to vector<1x32xf32>
    %c0_18 = arith.constant 0 : index
    %c0_19 = arith.constant 0 : index
    %c0_20 = arith.constant 0 : index
    %c0_21 = arith.constant 0 : index
    %15 = vector.load %arg2[%c0_18, %c0_19, %c0_20, %c0_21] : memref<1x4x8x8xf32, #tpu.memory_space<vmem>>, vector<1x1x8x8xf32>
    %16 = vector.shape_cast %15 : vector<1x1x8x8xf32> to vector<8x8xf32>
    %17 = vector.extract_strided_slice %16 {offsets = [0, 0], sizes = [8, 1], strides = [1, 1]} : vector<8x8xf32> to vector<8x1xf32>
    %cst = arith.constant dense<0.000000e+00> : vector<8x96xf32>
    %18 = tpu.matmul %4, %6, %cst {dimension_numbers = #tpu.dot_dimension_numbers<[1], [0], [0], [1], [0, 0, 1, 1], [], []>} : vector<8x32xf32>, vector<32x96xf32>, vector<8x96xf32> -> vector<8x96xf32>
    %19 = vector.broadcast %17 : vector<8x1xf32> to vector<8x96xf32>
    %20 = vector.broadcast %8 : vector<1x96xf32> to vector<8x96xf32>
    %21 = arith.mulf %19, %20 : vector<8x96xf32>
    %22 = vector.extract_strided_slice %21 {offsets = [0, 0], sizes = [8, 64], strides = [1, 1]} : vector<8x96xf32> to vector<8x64xf32>
    %23 = vector.extract_strided_slice %18 {offsets = [0, 0], sizes = [8, 64], strides = [1, 1]} : vector<8x96xf32> to vector<8x64xf32>
    %24 = arith.addf %22, %23 : vector<8x64xf32>
    %25 = vector.broadcast %10 : vector<1x64xf32> to vector<8x64xf32>
    %26 = arith.addf %24, %25 : vector<8x64xf32>
    %27 = arith.negf %26 : vector<8x64xf32>
    %28 = math.exp %27 : vector<8x64xf32>
    %cst_22 = arith.constant 1.000000e+00 : f32
    %29 = vector.broadcast %cst_22 : f32 to vector<8x64xf32>
    %30 = arith.addf %29, %28 : vector<8x64xf32>
    %31 = arith.divf %29, %30 : vector<8x64xf32>
    %32 = vector.extract_strided_slice %31 {offsets = [0, 0], sizes = [8, 32], strides = [1, 1]} : vector<8x64xf32> to vector<8x32xf32>
    %33 = vector.extract_strided_slice %31 {offsets = [0, 32], sizes = [8, 32], strides = [1, 1]} : vector<8x64xf32> to vector<8x32xf32>
    %34 = vector.extract_strided_slice %21 {offsets = [0, 64], sizes = [8, 32], strides = [1, 1]} : vector<8x96xf32> to vector<8x32xf32>
    %35 = vector.broadcast %12 : vector<1x32xf32> to vector<8x32xf32>
    %36 = arith.addf %34, %35 : vector<8x32xf32>
    %37 = vector.extract_strided_slice %18 {offsets = [0, 64], sizes = [8, 32], strides = [1, 1]} : vector<8x96xf32> to vector<8x32xf32>
    %38 = vector.broadcast %14 : vector<1x32xf32> to vector<8x32xf32>
    %39 = arith.addf %37, %38 : vector<8x32xf32>
    %40 = arith.mulf %32, %39 : vector<8x32xf32>
    %41 = arith.addf %36, %40 : vector<8x32xf32>
    %42 = math.tanh %41 : vector<8x32xf32>
    %cst_23 = arith.constant 1.000000e+00 : f32
    %43 = vector.broadcast %cst_23 : f32 to vector<8x32xf32>
    %44 = arith.subf %43, %33 : vector<8x32xf32>
    %45 = arith.mulf %44, %42 : vector<8x32xf32>
    %46 = arith.mulf %33, %4 : vector<8x32xf32>
    %47 = arith.addf %45, %46 : vector<8x32xf32>
    %48 = vector.extract_strided_slice %16 {offsets = [0, 1], sizes = [8, 1], strides = [1, 1]} : vector<8x8xf32> to vector<8x1xf32>
    %cst_24 = arith.constant dense<0.000000e+00> : vector<8x96xf32>
    %49 = tpu.matmul %47, %6, %cst_24 {dimension_numbers = #tpu.dot_dimension_numbers<[1], [0], [0], [1], [0, 0, 1, 1], [], []>} : vector<8x32xf32>, vector<32x96xf32>, vector<8x96xf32> -> vector<8x96xf32>
    %50 = vector.broadcast %48 : vector<8x1xf32> to vector<8x96xf32>
    %51 = vector.broadcast %8 : vector<1x96xf32> to vector<8x96xf32>
    %52 = arith.mulf %50, %51 : vector<8x96xf32>
    %53 = vector.extract_strided_slice %52 {offsets = [0, 0], sizes = [8, 64], strides = [1, 1]} : vector<8x96xf32> to vector<8x64xf32>
    %54 = vector.extract_strided_slice %49 {offsets = [0, 0], sizes = [8, 64], strides = [1, 1]} : vector<8x96xf32> to vector<8x64xf32>
    %55 = arith.addf %53, %54 : vector<8x64xf32>
    %56 = vector.broadcast %10 : vector<1x64xf32> to vector<8x64xf32>
    %57 = arith.addf %55, %56 : vector<8x64xf32>
    %58 = arith.negf %57 : vector<8x64xf32>
    %59 = math.exp %58 : vector<8x64xf32>
    %cst_25 = arith.constant 1.000000e+00 : f32
    %60 = vector.broadcast %cst_25 : f32 to vector<8x64xf32>
    %61 = arith.addf %60, %59 : vector<8x64xf32>
    %62 = arith.divf %60, %61 : vector<8x64xf32>
    %63 = vector.extract_strided_slice %62 {offsets = [0, 0], sizes = [8, 32], strides = [1, 1]} : vector<8x64xf32> to vector<8x32xf32>
    %64 = vector.extract_strided_slice %62 {offsets = [0, 32], sizes = [8, 32], strides = [1, 1]} : vector<8x64xf32> to vector<8x32xf32>
    %65 = vector.extract_strided_slice %52 {offsets = [0, 64], sizes = [8, 32], strides = [1, 1]} : vector<8x96xf32> to vector<8x32xf32>
    %66 = vector.broadcast %12 : vector<1x32xf32> to vector<8x32xf32>
    %67 = arith.addf %65, %66 : vector<8x32xf32>
    %68 = vector.extract_strided_slice %49 {offsets = [0, 64], sizes = [8, 32], strides = [1, 1]} : vector<8x96xf32> to vector<8x32xf32>
    %69 = vector.broadcast %14 : vector<1x32xf32> to vector<8x32xf32>
    %70 = arith.addf %68, %69 : vector<8x32xf32>
    %71 = arith.mulf %63, %70 : vector<8x32xf32>
    %72 = arith.addf %67, %71 : vector<8x32xf32>
    %73 = math.tanh %72 : vector<8x32xf32>
    %cst_26 = arith.constant 1.000000e+00 : f32
    %74 = vector.broadcast %cst_26 : f32 to vector<8x32xf32>
    %75 = arith.subf %74, %64 : vector<8x32xf32>
    %76 = arith.mulf %75, %73 : vector<8x32xf32>
    %77 = arith.mulf %64, %47 : vector<8x32xf32>
    %78 = arith.addf %76, %77 : vector<8x32xf32>
    %79 = vector.extract_strided_slice %16 {offsets = [0, 2], sizes = [8, 1], strides = [1, 1]} : vector<8x8xf32> to vector<8x1xf32>
    %cst_27 = arith.constant dense<0.000000e+00> : vector<8x96xf32>
    %80 = tpu.matmul %78, %6, %cst_27 {dimension_numbers = #tpu.dot_dimension_numbers<[1], [0], [0], [1], [0, 0, 1, 1], [], []>} : vector<8x32xf32>, vector<32x96xf32>, vector<8x96xf32> -> vector<8x96xf32>
    %81 = vector.broadcast %79 : vector<8x1xf32> to vector<8x96xf32>
    %82 = vector.broadcast %8 : vector<1x96xf32> to vector<8x96xf32>
    %83 = arith.mulf %81, %82 : vector<8x96xf32>
    %84 = vector.extract_strided_slice %83 {offsets = [0, 0], sizes = [8, 64], strides = [1, 1]} : vector<8x96xf32> to vector<8x64xf32>
    %85 = vector.extract_strided_slice %80 {offsets = [0, 0], sizes = [8, 64], strides = [1, 1]} : vector<8x96xf32> to vector<8x64xf32>
    %86 = arith.addf %84, %85 : vector<8x64xf32>
    %87 = vector.broadcast %10 : vector<1x64xf32> to vector<8x64xf32>
    %88 = arith.addf %86, %87 : vector<8x64xf32>
    %89 = arith.negf %88 : vector<8x64xf32>
    %90 = math.exp %89 : vector<8x64xf32>
    %cst_28 = arith.constant 1.000000e+00 : f32
    %91 = vector.broadcast %cst_28 : f32 to vector<8x64xf32>
    %92 = arith.addf %91, %90 : vector<8x64xf32>
    %93 = arith.divf %91, %92 : vector<8x64xf32>
    %94 = vector.extract_strided_slice %93 {offsets = [0, 0], sizes = [8, 32], strides = [1, 1]} : vector<8x64xf32> to vector<8x32xf32>
    %95 = vector.extract_strided_slice %93 {offsets = [0, 32], sizes = [8, 32], strides = [1, 1]} : vector<8x64xf32> to vector<8x32xf32>
    %96 = vector.extract_strided_slice %83 {offsets = [0, 64], sizes = [8, 32], strides = [1, 1]} : vector<8x96xf32> to vector<8x32xf32>
    %97 = vector.broadcast %12 : vector<1x32xf32> to vector<8x32xf32>
    %98 = arith.addf %96, %97 : vector<8x32xf32>
    %99 = vector.extract_strided_slice %80 {offsets = [0, 64], sizes = [8, 32], strides = [1, 1]} : vector<8x96xf32> to vector<8x32xf32>
    %100 = vector.broadcast %14 : vector<1x32xf32> to vector<8x32xf32>
    %101 = arith.addf %99, %100 : vector<8x32xf32>
    %102 = arith.mulf %94, %101 : vector<8x32xf32>
    %103 = arith.addf %98, %102 : vector<8x32xf32>
    %104 = math.tanh %103 : vector<8x32xf32>
    %cst_29 = arith.constant 1.000000e+00 : f32
    %105 = vector.broadcast %cst_29 : f32 to vector<8x32xf32>
    %106 = arith.subf %105, %95 : vector<8x32xf32>
    %107 = arith.mulf %106, %104 : vector<8x32xf32>
    %108 = arith.mulf %95, %78 : vector<8x32xf32>
    %109 = arith.addf %107, %108 : vector<8x32xf32>
    %110 = vector.extract_strided_slice %16 {offsets = [0, 3], sizes = [8, 1], strides = [1, 1]} : vector<8x8xf32> to vector<8x1xf32>
    %cst_30 = arith.constant dense<0.000000e+00> : vector<8x96xf32>
    %111 = tpu.matmul %109, %6, %cst_30 {dimension_numbers = #tpu.dot_dimension_numbers<[1], [0], [0], [1], [0, 0, 1, 1], [], []>} : vector<8x32xf32>, vector<32x96xf32>, vector<8x96xf32> -> vector<8x96xf32>
    %112 = vector.broadcast %110 : vector<8x1xf32> to vector<8x96xf32>
    %113 = vector.broadcast %8 : vector<1x96xf32> to vector<8x96xf32>
    %114 = arith.mulf %112, %113 : vector<8x96xf32>
    %115 = vector.extract_strided_slice %114 {offsets = [0, 0], sizes = [8, 64], strides = [1, 1]} : vector<8x96xf32> to vector<8x64xf32>
    %116 = vector.extract_strided_slice %111 {offsets = [0, 0], sizes = [8, 64], strides = [1, 1]} : vector<8x96xf32> to vector<8x64xf32>
    %117 = arith.addf %115, %116 : vector<8x64xf32>
    %118 = vector.broadcast %10 : vector<1x64xf32> to vector<8x64xf32>
    %119 = arith.addf %117, %118 : vector<8x64xf32>
    %120 = arith.negf %119 : vector<8x64xf32>
    %121 = math.exp %120 : vector<8x64xf32>
    %cst_31 = arith.constant 1.000000e+00 : f32
    %122 = vector.broadcast %cst_31 : f32 to vector<8x64xf32>
    %123 = arith.addf %122, %121 : vector<8x64xf32>
    %124 = arith.divf %122, %123 : vector<8x64xf32>
    %125 = vector.extract_strided_slice %124 {offsets = [0, 0], sizes = [8, 32], strides = [1, 1]} : vector<8x64xf32> to vector<8x32xf32>
    %126 = vector.extract_strided_slice %124 {offsets = [0, 32], sizes = [8, 32], strides = [1, 1]} : vector<8x64xf32> to vector<8x32xf32>
    %127 = vector.extract_strided_slice %114 {offsets = [0, 64], sizes = [8, 32], strides = [1, 1]} : vector<8x96xf32> to vector<8x32xf32>
    %128 = vector.broadcast %12 : vector<1x32xf32> to vector<8x32xf32>
    %129 = arith.addf %127, %128 : vector<8x32xf32>
    %130 = vector.extract_strided_slice %111 {offsets = [0, 64], sizes = [8, 32], strides = [1, 1]} : vector<8x96xf32> to vector<8x32xf32>
    %131 = vector.broadcast %14 : vector<1x32xf32> to vector<8x32xf32>
    %132 = arith.addf %130, %131 : vector<8x32xf32>
    %133 = arith.mulf %125, %132 : vector<8x32xf32>
    %134 = arith.addf %129, %133 : vector<8x32xf32>
    %135 = math.tanh %134 : vector<8x32xf32>
    %cst_32 = arith.constant 1.000000e+00 : f32
    %136 = vector.broadcast %cst_32 : f32 to vector<8x32xf32>
    %137 = arith.subf %136, %126 : vector<8x32xf32>
    %138 = arith.mulf %137, %135 : vector<8x32xf32>
    %139 = arith.mulf %126, %109 : vector<8x32xf32>
    %140 = arith.addf %138, %139 : vector<8x32xf32>
    %141 = vector.extract_strided_slice %16 {offsets = [0, 4], sizes = [8, 1], strides = [1, 1]} : vector<8x8xf32> to vector<8x1xf32>
    %cst_33 = arith.constant dense<0.000000e+00> : vector<8x96xf32>
    %142 = tpu.matmul %140, %6, %cst_33 {dimension_numbers = #tpu.dot_dimension_numbers<[1], [0], [0], [1], [0, 0, 1, 1], [], []>} : vector<8x32xf32>, vector<32x96xf32>, vector<8x96xf32> -> vector<8x96xf32>
    %143 = vector.broadcast %141 : vector<8x1xf32> to vector<8x96xf32>
    %144 = vector.broadcast %8 : vector<1x96xf32> to vector<8x96xf32>
    %145 = arith.mulf %143, %144 : vector<8x96xf32>
    %146 = vector.extract_strided_slice %145 {offsets = [0, 0], sizes = [8, 64], strides = [1, 1]} : vector<8x96xf32> to vector<8x64xf32>
    %147 = vector.extract_strided_slice %142 {offsets = [0, 0], sizes = [8, 64], strides = [1, 1]} : vector<8x96xf32> to vector<8x64xf32>
    %148 = arith.addf %146, %147 : vector<8x64xf32>
    %149 = vector.broadcast %10 : vector<1x64xf32> to vector<8x64xf32>
    %150 = arith.addf %148, %149 : vector<8x64xf32>
    %151 = arith.negf %150 : vector<8x64xf32>
    %152 = math.exp %151 : vector<8x64xf32>
    %cst_34 = arith.constant 1.000000e+00 : f32
    %153 = vector.broadcast %cst_34 : f32 to vector<8x64xf32>
    %154 = arith.addf %153, %152 : vector<8x64xf32>
    %155 = arith.divf %153, %154 : vector<8x64xf32>
    %156 = vector.extract_strided_slice %155 {offsets = [0, 0], sizes = [8, 32], strides = [1, 1]} : vector<8x64xf32> to vector<8x32xf32>
    %157 = vector.extract_strided_slice %155 {offsets = [0, 32], sizes = [8, 32], strides = [1, 1]} : vector<8x64xf32> to vector<8x32xf32>
    %158 = vector.extract_strided_slice %145 {offsets = [0, 64], sizes = [8, 32], strides = [1, 1]} : vector<8x96xf32> to vector<8x32xf32>
    %159 = vector.broadcast %12 : vector<1x32xf32> to vector<8x32xf32>
    %160 = arith.addf %158, %159 : vector<8x32xf32>
    %161 = vector.extract_strided_slice %142 {offsets = [0, 64], sizes = [8, 32], strides = [1, 1]} : vector<8x96xf32> to vector<8x32xf32>
    %162 = vector.broadcast %14 : vector<1x32xf32> to vector<8x32xf32>
    %163 = arith.addf %161, %162 : vector<8x32xf32>
    %164 = arith.mulf %156, %163 : vector<8x32xf32>
    %165 = arith.addf %160, %164 : vector<8x32xf32>
    %166 = math.tanh %165 : vector<8x32xf32>
    %cst_35 = arith.constant 1.000000e+00 : f32
    %167 = vector.broadcast %cst_35 : f32 to vector<8x32xf32>
    %168 = arith.subf %167, %157 : vector<8x32xf32>
    %169 = arith.mulf %168, %166 : vector<8x32xf32>
    %170 = arith.mulf %157, %140 : vector<8x32xf32>
    %171 = arith.addf %169, %170 : vector<8x32xf32>
    %172 = vector.extract_strided_slice %16 {offsets = [0, 5], sizes = [8, 1], strides = [1, 1]} : vector<8x8xf32> to vector<8x1xf32>
    %cst_36 = arith.constant dense<0.000000e+00> : vector<8x96xf32>
    %173 = tpu.matmul %171, %6, %cst_36 {dimension_numbers = #tpu.dot_dimension_numbers<[1], [0], [0], [1], [0, 0, 1, 1], [], []>} : vector<8x32xf32>, vector<32x96xf32>, vector<8x96xf32> -> vector<8x96xf32>
    %174 = vector.broadcast %172 : vector<8x1xf32> to vector<8x96xf32>
    %175 = vector.broadcast %8 : vector<1x96xf32> to vector<8x96xf32>
    %176 = arith.mulf %174, %175 : vector<8x96xf32>
    %177 = vector.extract_strided_slice %176 {offsets = [0, 0], sizes = [8, 64], strides = [1, 1]} : vector<8x96xf32> to vector<8x64xf32>
    %178 = vector.extract_strided_slice %173 {offsets = [0, 0], sizes = [8, 64], strides = [1, 1]} : vector<8x96xf32> to vector<8x64xf32>
    %179 = arith.addf %177, %178 : vector<8x64xf32>
    %180 = vector.broadcast %10 : vector<1x64xf32> to vector<8x64xf32>
    %181 = arith.addf %179, %180 : vector<8x64xf32>
    %182 = arith.negf %181 : vector<8x64xf32>
    %183 = math.exp %182 : vector<8x64xf32>
    %cst_37 = arith.constant 1.000000e+00 : f32
    %184 = vector.broadcast %cst_37 : f32 to vector<8x64xf32>
    %185 = arith.addf %184, %183 : vector<8x64xf32>
    %186 = arith.divf %184, %185 : vector<8x64xf32>
    %187 = vector.extract_strided_slice %186 {offsets = [0, 0], sizes = [8, 32], strides = [1, 1]} : vector<8x64xf32> to vector<8x32xf32>
    %188 = vector.extract_strided_slice %186 {offsets = [0, 32], sizes = [8, 32], strides = [1, 1]} : vector<8x64xf32> to vector<8x32xf32>
    %189 = vector.extract_strided_slice %176 {offsets = [0, 64], sizes = [8, 32], strides = [1, 1]} : vector<8x96xf32> to vector<8x32xf32>
    %190 = vector.broadcast %12 : vector<1x32xf32> to vector<8x32xf32>
    %191 = arith.addf %189, %190 : vector<8x32xf32>
    %192 = vector.extract_strided_slice %173 {offsets = [0, 64], sizes = [8, 32], strides = [1, 1]} : vector<8x96xf32> to vector<8x32xf32>
    %193 = vector.broadcast %14 : vector<1x32xf32> to vector<8x32xf32>
    %194 = arith.addf %192, %193 : vector<8x32xf32>
    %195 = arith.mulf %187, %194 : vector<8x32xf32>
    %196 = arith.addf %191, %195 : vector<8x32xf32>
    %197 = math.tanh %196 : vector<8x32xf32>
    %cst_38 = arith.constant 1.000000e+00 : f32
    %198 = vector.broadcast %cst_38 : f32 to vector<8x32xf32>
    %199 = arith.subf %198, %188 : vector<8x32xf32>
    %200 = arith.mulf %199, %197 : vector<8x32xf32>
    %201 = arith.mulf %188, %171 : vector<8x32xf32>
    %202 = arith.addf %200, %201 : vector<8x32xf32>
    %203 = vector.extract_strided_slice %16 {offsets = [0, 6], sizes = [8, 1], strides = [1, 1]} : vector<8x8xf32> to vector<8x1xf32>
    %cst_39 = arith.constant dense<0.000000e+00> : vector<8x96xf32>
    %204 = tpu.matmul %202, %6, %cst_39 {dimension_numbers = #tpu.dot_dimension_numbers<[1], [0], [0], [1], [0, 0, 1, 1], [], []>} : vector<8x32xf32>, vector<32x96xf32>, vector<8x96xf32> -> vector<8x96xf32>
    %205 = vector.broadcast %203 : vector<8x1xf32> to vector<8x96xf32>
    %206 = vector.broadcast %8 : vector<1x96xf32> to vector<8x96xf32>
    %207 = arith.mulf %205, %206 : vector<8x96xf32>
    %208 = vector.extract_strided_slice %207 {offsets = [0, 0], sizes = [8, 64], strides = [1, 1]} : vector<8x96xf32> to vector<8x64xf32>
    %209 = vector.extract_strided_slice %204 {offsets = [0, 0], sizes = [8, 64], strides = [1, 1]} : vector<8x96xf32> to vector<8x64xf32>
    %210 = arith.addf %208, %209 : vector<8x64xf32>
    %211 = vector.broadcast %10 : vector<1x64xf32> to vector<8x64xf32>
    %212 = arith.addf %210, %211 : vector<8x64xf32>
    %213 = arith.negf %212 : vector<8x64xf32>
    %214 = math.exp %213 : vector<8x64xf32>
    %cst_40 = arith.constant 1.000000e+00 : f32
    %215 = vector.broadcast %cst_40 : f32 to vector<8x64xf32>
    %216 = arith.addf %215, %214 : vector<8x64xf32>
    %217 = arith.divf %215, %216 : vector<8x64xf32>
    %218 = vector.extract_strided_slice %217 {offsets = [0, 0], sizes = [8, 32], strides = [1, 1]} : vector<8x64xf32> to vector<8x32xf32>
    %219 = vector.extract_strided_slice %217 {offsets = [0, 32], sizes = [8, 32], strides = [1, 1]} : vector<8x64xf32> to vector<8x32xf32>
    %220 = vector.extract_strided_slice %207 {offsets = [0, 64], sizes = [8, 32], strides = [1, 1]} : vector<8x96xf32> to vector<8x32xf32>
    %221 = vector.broadcast %12 : vector<1x32xf32> to vector<8x32xf32>
    %222 = arith.addf %220, %221 : vector<8x32xf32>
    %223 = vector.extract_strided_slice %204 {offsets = [0, 64], sizes = [8, 32], strides = [1, 1]} : vector<8x96xf32> to vector<8x32xf32>
    %224 = vector.broadcast %14 : vector<1x32xf32> to vector<8x32xf32>
    %225 = arith.addf %223, %224 : vector<8x32xf32>
    %226 = arith.mulf %218, %225 : vector<8x32xf32>
    %227 = arith.addf %222, %226 : vector<8x32xf32>
    %228 = math.tanh %227 : vector<8x32xf32>
    %cst_41 = arith.constant 1.000000e+00 : f32
    %229 = vector.broadcast %cst_41 : f32 to vector<8x32xf32>
    %230 = arith.subf %229, %219 : vector<8x32xf32>
    %231 = arith.mulf %230, %228 : vector<8x32xf32>
    %232 = arith.mulf %219, %202 : vector<8x32xf32>
    %233 = arith.addf %231, %232 : vector<8x32xf32>
    %234 = vector.extract_strided_slice %16 {offsets = [0, 7], sizes = [8, 1], strides = [1, 1]} : vector<8x8xf32> to vector<8x1xf32>
    %cst_42 = arith.constant dense<0.000000e+00> : vector<8x96xf32>
    %235 = tpu.matmul %233, %6, %cst_42 {dimension_numbers = #tpu.dot_dimension_numbers<[1], [0], [0], [1], [0, 0, 1, 1], [], []>} : vector<8x32xf32>, vector<32x96xf32>, vector<8x96xf32> -> vector<8x96xf32>
    %236 = vector.broadcast %234 : vector<8x1xf32> to vector<8x96xf32>
    %237 = vector.broadcast %8 : vector<1x96xf32> to vector<8x96xf32>
    %238 = arith.mulf %236, %237 : vector<8x96xf32>
    %239 = vector.extract_strided_slice %238 {offsets = [0, 0], sizes = [8, 64], strides = [1, 1]} : vector<8x96xf32> to vector<8x64xf32>
    %240 = vector.extract_strided_slice %235 {offsets = [0, 0], sizes = [8, 64], strides = [1, 1]} : vector<8x96xf32> to vector<8x64xf32>
    %241 = arith.addf %239, %240 : vector<8x64xf32>
    %242 = vector.broadcast %10 : vector<1x64xf32> to vector<8x64xf32>
    %243 = arith.addf %241, %242 : vector<8x64xf32>
    %244 = arith.negf %243 : vector<8x64xf32>
    %245 = math.exp %244 : vector<8x64xf32>
    %cst_43 = arith.constant 1.000000e+00 : f32
    %246 = vector.broadcast %cst_43 : f32 to vector<8x64xf32>
    %247 = arith.addf %246, %245 : vector<8x64xf32>
    %248 = arith.divf %246, %247 : vector<8x64xf32>
    %249 = vector.extract_strided_slice %248 {offsets = [0, 0], sizes = [8, 32], strides = [1, 1]} : vector<8x64xf32> to vector<8x32xf32>
    %250 = vector.extract_strided_slice %248 {offsets = [0, 32], sizes = [8, 32], strides = [1, 1]} : vector<8x64xf32> to vector<8x32xf32>
    %251 = vector.extract_strided_slice %238 {offsets = [0, 64], sizes = [8, 32], strides = [1, 1]} : vector<8x96xf32> to vector<8x32xf32>
    %252 = vector.broadcast %12 : vector<1x32xf32> to vector<8x32xf32>
    %253 = arith.addf %251, %252 : vector<8x32xf32>
    %254 = vector.extract_strided_slice %235 {offsets = [0, 64], sizes = [8, 32], strides = [1, 1]} : vector<8x96xf32> to vector<8x32xf32>
    %255 = vector.broadcast %14 : vector<1x32xf32> to vector<8x32xf32>
    %256 = arith.addf %254, %255 : vector<8x32xf32>
    %257 = arith.mulf %249, %256 : vector<8x32xf32>
    %258 = arith.addf %253, %257 : vector<8x32xf32>
    %259 = math.tanh %258 : vector<8x32xf32>
    %cst_44 = arith.constant 1.000000e+00 : f32
    %260 = vector.broadcast %cst_44 : f32 to vector<8x32xf32>
    %261 = arith.subf %260, %250 : vector<8x32xf32>
    %262 = arith.mulf %261, %259 : vector<8x32xf32>
    %263 = arith.mulf %250, %233 : vector<8x32xf32>
    %264 = arith.addf %262, %263 : vector<8x32xf32>
    %c0_45 = arith.constant 0 : index
    %c0_46 = arith.constant 0 : index
    %c0_47 = arith.constant 0 : index
    %265 = vector.load %arg17[%c0_45, %c0_46, %c0_47] : memref<4x8x32xf32, #tpu.memory_space<vmem>>, vector<1x8x32xf32>
    %266 = vector.shape_cast %265 : vector<1x8x32xf32> to vector<8x32xf32>
    %267 = vector.shape_cast %264 : vector<8x32xf32> to vector<1x8x32xf32>
    tpu.vector_store %arg17[%c0_45, %c0_46, %c0_47], %267 {strides = array<i32>} : memref<4x8x32xf32, #tpu.memory_space<vmem>>, vector<1x8x32xf32>,
    %c1 = arith.constant 1 : index
    %c0_48 = arith.constant 0 : index
    %c0_49 = arith.constant 0 : index
    %268 = vector.load %arg17[%c1, %c0_48, %c0_49] : memref<4x8x32xf32, #tpu.memory_space<vmem>>, vector<1x8x32xf32>
    %269 = vector.shape_cast %268 : vector<1x8x32xf32> to vector<8x32xf32>
    %c1_50 = arith.constant 1 : index
    %c0_51 = arith.constant 0 : index
    %c0_52 = arith.constant 0 : index
    %270 = vector.load %arg5[%c1_50, %c0_51, %c0_52] : memref<4x32x96xf32, #tpu.memory_space<vmem>>, vector<1x32x96xf32>
    %271 = vector.shape_cast %270 : vector<1x32x96xf32> to vector<32x96xf32>
    %c1_53 = arith.constant 1 : index
    %c0_54 = arith.constant 0 : index
    %c0_55 = arith.constant 0 : index
    %272 = vector.load %arg4[%c1_53, %c0_54, %c0_55] : memref<4x1x96xf32, #tpu.memory_space<vmem>>, vector<1x1x96xf32>
    %273 = vector.shape_cast %272 : vector<1x1x96xf32> to vector<1x96xf32>
    %c1_56 = arith.constant 1 : index
    %c0_57 = arith.constant 0 : index
    %c0_58 = arith.constant 0 : index
    %274 = vector.load %arg6[%c1_56, %c0_57, %c0_58] : memref<4x1x64xf32, #tpu.memory_space<vmem>>, vector<1x1x64xf32>
    %275 = vector.shape_cast %274 : vector<1x1x64xf32> to vector<1x64xf32>
    %c1_59 = arith.constant 1 : index
    %c0_60 = arith.constant 0 : index
    %c0_61 = arith.constant 0 : index
    %276 = vector.load %arg7[%c1_59, %c0_60, %c0_61] : memref<4x1x32xf32, #tpu.memory_space<vmem>>, vector<1x1x32xf32>
    %277 = vector.shape_cast %276 : vector<1x1x32xf32> to vector<1x32xf32>
    %c1_62 = arith.constant 1 : index
    %c0_63 = arith.constant 0 : index
    %c0_64 = arith.constant 0 : index
    %278 = vector.load %arg8[%c1_62, %c0_63, %c0_64] : memref<4x1x32xf32, #tpu.memory_space<vmem>>, vector<1x1x32xf32>
    %279 = vector.shape_cast %278 : vector<1x1x32xf32> to vector<1x32xf32>
    %c0_65 = arith.constant 0 : index
    %c1_66 = arith.constant 1 : index
    %c0_67 = arith.constant 0 : index
    %c0_68 = arith.constant 0 : index
    %280 = vector.load %arg2[%c0_65, %c1_66, %c0_67, %c0_68] : memref<1x4x8x8xf32, #tpu.memory_space<vmem>>, vector<1x1x8x8xf32>
    %281 = vector.shape_cast %280 : vector<1x1x8x8xf32> to vector<8x8xf32>
    %282 = vector.extract_strided_slice %281 {offsets = [0, 0], sizes = [8, 1], strides = [1, 1]} : vector<8x8xf32> to vector<8x1xf32>
    %cst_69 = arith.constant dense<0.000000e+00> : vector<8x96xf32>
    %283 = tpu.matmul %269, %271, %cst_69 {dimension_numbers = #tpu.dot_dimension_numbers<[1], [0], [0], [1], [0, 0, 1, 1], [], []>} : vector<8x32xf32>, vector<32x96xf32>, vector<8x96xf32> -> vector<8x96xf32>
    %284 = vector.broadcast %282 : vector<8x1xf32> to vector<8x96xf32>
    %285 = vector.broadcast %273 : vector<1x96xf32> to vector<8x96xf32>
    %286 = arith.mulf %284, %285 : vector<8x96xf32>
    %287 = vector.extract_strided_slice %286 {offsets = [0, 0], sizes = [8, 64], strides = [1, 1]} : vector<8x96xf32> to vector<8x64xf32>
    %288 = vector.extract_strided_slice %283 {offsets = [0, 0], sizes = [8, 64], strides = [1, 1]} : vector<8x96xf32> to vector<8x64xf32>
    %289 = arith.addf %287, %288 : vector<8x64xf32>
    %290 = vector.broadcast %275 : vector<1x64xf32> to vector<8x64xf32>
    %291 = arith.addf %289, %290 : vector<8x64xf32>
    %292 = arith.negf %291 : vector<8x64xf32>
    %293 = math.exp %292 : vector<8x64xf32>
    %cst_70 = arith.constant 1.000000e+00 : f32
    %294 = vector.broadcast %cst_70 : f32 to vector<8x64xf32>
    %295 = arith.addf %294, %293 : vector<8x64xf32>
    %296 = arith.divf %294, %295 : vector<8x64xf32>
    %297 = vector.extract_strided_slice %296 {offsets = [0, 0], sizes = [8, 32], strides = [1, 1]} : vector<8x64xf32> to vector<8x32xf32>
    %298 = vector.extract_strided_slice %296 {offsets = [0, 32], sizes = [8, 32], strides = [1, 1]} : vector<8x64xf32> to vector<8x32xf32>
    %299 = vector.extract_strided_slice %286 {offsets = [0, 64], sizes = [8, 32], strides = [1, 1]} : vector<8x96xf32> to vector<8x32xf32>
    %300 = vector.broadcast %277 : vector<1x32xf32> to vector<8x32xf32>
    %301 = arith.addf %299, %300 : vector<8x32xf32>
    %302 = vector.extract_strided_slice %283 {offsets = [0, 64], sizes = [8, 32], strides = [1, 1]} : vector<8x96xf32> to vector<8x32xf32>
    %303 = vector.broadcast %279 : vector<1x32xf32> to vector<8x32xf32>
    %304 = arith.addf %302, %303 : vector<8x32xf32>
    %305 = arith.mulf %297, %304 : vector<8x32xf32>
    %306 = arith.addf %301, %305 : vector<8x32xf32>
    %307 = math.tanh %306 : vector<8x32xf32>
    %cst_71 = arith.constant 1.000000e+00 : f32
    %308 = vector.broadcast %cst_71 : f32 to vector<8x32xf32>
    %309 = arith.subf %308, %298 : vector<8x32xf32>
    %310 = arith.mulf %309, %307 : vector<8x32xf32>
    %311 = arith.mulf %298, %269 : vector<8x32xf32>
    %312 = arith.addf %310, %311 : vector<8x32xf32>
    %313 = vector.extract_strided_slice %281 {offsets = [0, 1], sizes = [8, 1], strides = [1, 1]} : vector<8x8xf32> to vector<8x1xf32>
    %cst_72 = arith.constant dense<0.000000e+00> : vector<8x96xf32>
    %314 = tpu.matmul %312, %271, %cst_72 {dimension_numbers = #tpu.dot_dimension_numbers<[1], [0], [0], [1], [0, 0, 1, 1], [], []>} : vector<8x32xf32>, vector<32x96xf32>, vector<8x96xf32> -> vector<8x96xf32>
    %315 = vector.broadcast %313 : vector<8x1xf32> to vector<8x96xf32>
    %316 = vector.broadcast %273 : vector<1x96xf32> to vector<8x96xf32>
    %317 = arith.mulf %315, %316 : vector<8x96xf32>
    %318 = vector.extract_strided_slice %317 {offsets = [0, 0], sizes = [8, 64], strides = [1, 1]} : vector<8x96xf32> to vector<8x64xf32>
    %319 = vector.extract_strided_slice %314 {offsets = [0, 0], sizes = [8, 64], strides = [1, 1]} : vector<8x96xf32> to vector<8x64xf32>
    %320 = arith.addf %318, %319 : vector<8x64xf32>
    %321 = vector.broadcast %275 : vector<1x64xf32> to vector<8x64xf32>
    %322 = arith.addf %320, %321 : vector<8x64xf32>
    %323 = arith.negf %322 : vector<8x64xf32>
    %324 = math.exp %323 : vector<8x64xf32>
    %cst_73 = arith.constant 1.000000e+00 : f32
    %325 = vector.broadcast %cst_73 : f32 to vector<8x64xf32>
    %326 = arith.addf %325, %324 : vector<8x64xf32>
    %327 = arith.divf %325, %326 : vector<8x64xf32>
    %328 = vector.extract_strided_slice %327 {offsets = [0, 0], sizes = [8, 32], strides = [1, 1]} : vector<8x64xf32> to vector<8x32xf32>
    %329 = vector.extract_strided_slice %327 {offsets = [0, 32], sizes = [8, 32], strides = [1, 1]} : vector<8x64xf32> to vector<8x32xf32>
    %330 = vector.extract_strided_slice %317 {offsets = [0, 64], sizes = [8, 32], strides = [1, 1]} : vector<8x96xf32> to vector<8x32xf32>
    %331 = vector.broadcast %277 : vector<1x32xf32> to vector<8x32xf32>
    %332 = arith.addf %330, %331 : vector<8x32xf32>
    %333 = vector.extract_strided_slice %314 {offsets = [0, 64], sizes = [8, 32], strides = [1, 1]} : vector<8x96xf32> to vector<8x32xf32>
    %334 = vector.broadcast %279 : vector<1x32xf32> to vector<8x32xf32>
    %335 = arith.addf %333, %334 : vector<8x32xf32>
    %336 = arith.mulf %328, %335 : vector<8x32xf32>
    %337 = arith.addf %332, %336 : vector<8x32xf32>
    %338 = math.tanh %337 : vector<8x32xf32>
    %cst_74 = arith.constant 1.000000e+00 : f32
    %339 = vector.broadcast %cst_74 : f32 to vector<8x32xf32>
    %340 = arith.subf %339, %329 : vector<8x32xf32>
    %341 = arith.mulf %340, %338 : vector<8x32xf32>
    %342 = arith.mulf %329, %312 : vector<8x32xf32>
    %343 = arith.addf %341, %342 : vector<8x32xf32>
    %344 = vector.extract_strided_slice %281 {offsets = [0, 2], sizes = [8, 1], strides = [1, 1]} : vector<8x8xf32> to vector<8x1xf32>
    %cst_75 = arith.constant dense<0.000000e+00> : vector<8x96xf32>
    %345 = tpu.matmul %343, %271, %cst_75 {dimension_numbers = #tpu.dot_dimension_numbers<[1], [0], [0], [1], [0, 0, 1, 1], [], []>} : vector<8x32xf32>, vector<32x96xf32>, vector<8x96xf32> -> vector<8x96xf32>
    %346 = vector.broadcast %344 : vector<8x1xf32> to vector<8x96xf32>
    %347 = vector.broadcast %273 : vector<1x96xf32> to vector<8x96xf32>
    %348 = arith.mulf %346, %347 : vector<8x96xf32>
    %349 = vector.extract_strided_slice %348 {offsets = [0, 0], sizes = [8, 64], strides = [1, 1]} : vector<8x96xf32> to vector<8x64xf32>
    %350 = vector.extract_strided_slice %345 {offsets = [0, 0], sizes = [8, 64], strides = [1, 1]} : vector<8x96xf32> to vector<8x64xf32>
    %351 = arith.addf %349, %350 : vector<8x64xf32>
    %352 = vector.broadcast %275 : vector<1x64xf32> to vector<8x64xf32>
    %353 = arith.addf %351, %352 : vector<8x64xf32>
    %354 = arith.negf %353 : vector<8x64xf32>
    %355 = math.exp %354 : vector<8x64xf32>
    %cst_76 = arith.constant 1.000000e+00 : f32
    %356 = vector.broadcast %cst_76 : f32 to vector<8x64xf32>
    %357 = arith.addf %356, %355 : vector<8x64xf32>
    %358 = arith.divf %356, %357 : vector<8x64xf32>
    %359 = vector.extract_strided_slice %358 {offsets = [0, 0], sizes = [8, 32], strides = [1, 1]} : vector<8x64xf32> to vector<8x32xf32>
    %360 = vector.extract_strided_slice %358 {offsets = [0, 32], sizes = [8, 32], strides = [1, 1]} : vector<8x64xf32> to vector<8x32xf32>
    %361 = vector.extract_strided_slice %348 {offsets = [0, 64], sizes = [8, 32], strides = [1, 1]} : vector<8x96xf32> to vector<8x32xf32>
    %362 = vector.broadcast %277 : vector<1x32xf32> to vector<8x32xf32>
    %363 = arith.addf %361, %362 : vector<8x32xf32>
    %364 = vector.extract_strided_slice %345 {offsets = [0, 64], sizes = [8, 32], strides = [1, 1]} : vector<8x96xf32> to vector<8x32xf32>
    %365 = vector.broadcast %279 : vector<1x32xf32> to vector<8x32xf32>
    %366 = arith.addf %364, %365 : vector<8x32xf32>
    %367 = arith.mulf %359, %366 : vector<8x32xf32>
    %368 = arith.addf %363, %367 : vector<8x32xf32>
    %369 = math.tanh %368 : vector<8x32xf32>
    %cst_77 = arith.constant 1.000000e+00 : f32
    %370 = vector.broadcast %cst_77 : f32 to vector<8x32xf32>
    %371 = arith.subf %370, %360 : vector<8x32xf32>
    %372 = arith.mulf %371, %369 : vector<8x32xf32>
    %373 = arith.mulf %360, %343 : vector<8x32xf32>
    %374 = arith.addf %372, %373 : vector<8x32xf32>
    %375 = vector.extract_strided_slice %281 {offsets = [0, 3], sizes = [8, 1], strides = [1, 1]} : vector<8x8xf32> to vector<8x1xf32>
    %cst_78 = arith.constant dense<0.000000e+00> : vector<8x96xf32>
    %376 = tpu.matmul %374, %271, %cst_78 {dimension_numbers = #tpu.dot_dimension_numbers<[1], [0], [0], [1], [0, 0, 1, 1], [], []>} : vector<8x32xf32>, vector<32x96xf32>, vector<8x96xf32> -> vector<8x96xf32>
    %377 = vector.broadcast %375 : vector<8x1xf32> to vector<8x96xf32>
    %378 = vector.broadcast %273 : vector<1x96xf32> to vector<8x96xf32>
    %379 = arith.mulf %377, %378 : vector<8x96xf32>
    %380 = vector.extract_strided_slice %379 {offsets = [0, 0], sizes = [8, 64], strides = [1, 1]} : vector<8x96xf32> to vector<8x64xf32>
    %381 = vector.extract_strided_slice %376 {offsets = [0, 0], sizes = [8, 64], strides = [1, 1]} : vector<8x96xf32> to vector<8x64xf32>
    %382 = arith.addf %380, %381 : vector<8x64xf32>
    %383 = vector.broadcast %275 : vector<1x64xf32> to vector<8x64xf32>
    %384 = arith.addf %382, %383 : vector<8x64xf32>
    %385 = arith.negf %384 : vector<8x64xf32>
    %386 = math.exp %385 : vector<8x64xf32>
    %cst_79 = arith.constant 1.000000e+00 : f32
    %387 = vector.broadcast %cst_79 : f32 to vector<8x64xf32>
    %388 = arith.addf %387, %386 : vector<8x64xf32>
    %389 = arith.divf %387, %388 : vector<8x64xf32>
    %390 = vector.extract_strided_slice %389 {offsets = [0, 0], sizes = [8, 32], strides = [1, 1]} : vector<8x64xf32> to vector<8x32xf32>
    %391 = vector.extract_strided_slice %389 {offsets = [0, 32], sizes = [8, 32], strides = [1, 1]} : vector<8x64xf32> to vector<8x32xf32>
    %392 = vector.extract_strided_slice %379 {offsets = [0, 64], sizes = [8, 32], strides = [1, 1]} : vector<8x96xf32> to vector<8x32xf32>
    %393 = vector.broadcast %277 : vector<1x32xf32> to vector<8x32xf32>
    %394 = arith.addf %392, %393 : vector<8x32xf32>
    %395 = vector.extract_strided_slice %376 {offsets = [0, 64], sizes = [8, 32], strides = [1, 1]} : vector<8x96xf32> to vector<8x32xf32>
    %396 = vector.broadcast %279 : vector<1x32xf32> to vector<8x32xf32>
    %397 = arith.addf %395, %396 : vector<8x32xf32>
    %398 = arith.mulf %390, %397 : vector<8x32xf32>
    %399 = arith.addf %394, %398 : vector<8x32xf32>
    %400 = math.tanh %399 : vector<8x32xf32>
    %cst_80 = arith.constant 1.000000e+00 : f32
    %401 = vector.broadcast %cst_80 : f32 to vector<8x32xf32>
    %402 = arith.subf %401, %391 : vector<8x32xf32>
    %403 = arith.mulf %402, %400 : vector<8x32xf32>
    %404 = arith.mulf %391, %374 : vector<8x32xf32>
    %405 = arith.addf %403, %404 : vector<8x32xf32>
    %406 = vector.extract_strided_slice %281 {offsets = [0, 4], sizes = [8, 1], strides = [1, 1]} : vector<8x8xf32> to vector<8x1xf32>
    %cst_81 = arith.constant dense<0.000000e+00> : vector<8x96xf32>
    %407 = tpu.matmul %405, %271, %cst_81 {dimension_numbers = #tpu.dot_dimension_numbers<[1], [0], [0], [1], [0, 0, 1, 1], [], []>} : vector<8x32xf32>, vector<32x96xf32>, vector<8x96xf32> -> vector<8x96xf32>
    %408 = vector.broadcast %406 : vector<8x1xf32> to vector<8x96xf32>
    %409 = vector.broadcast %273 : vector<1x96xf32> to vector<8x96xf32>
    %410 = arith.mulf %408, %409 : vector<8x96xf32>
    %411 = vector.extract_strided_slice %410 {offsets = [0, 0], sizes = [8, 64], strides = [1, 1]} : vector<8x96xf32> to vector<8x64xf32>
    %412 = vector.extract_strided_slice %407 {offsets = [0, 0], sizes = [8, 64], strides = [1, 1]} : vector<8x96xf32> to vector<8x64xf32>
    %413 = arith.addf %411, %412 : vector<8x64xf32>
    %414 = vector.broadcast %275 : vector<1x64xf32> to vector<8x64xf32>
    %415 = arith.addf %413, %414 : vector<8x64xf32>
    %416 = arith.negf %415 : vector<8x64xf32>
    %417 = math.exp %416 : vector<8x64xf32>
    %cst_82 = arith.constant 1.000000e+00 : f32
    %418 = vector.broadcast %cst_82 : f32 to vector<8x64xf32>
    %419 = arith.addf %418, %417 : vector<8x64xf32>
    %420 = arith.divf %418, %419 : vector<8x64xf32>
    %421 = vector.extract_strided_slice %420 {offsets = [0, 0], sizes = [8, 32], strides = [1, 1]} : vector<8x64xf32> to vector<8x32xf32>
    %422 = vector.extract_strided_slice %420 {offsets = [0, 32], sizes = [8, 32], strides = [1, 1]} : vector<8x64xf32> to vector<8x32xf32>
    %423 = vector.extract_strided_slice %410 {offsets = [0, 64], sizes = [8, 32], strides = [1, 1]} : vector<8x96xf32> to vector<8x32xf32>
    %424 = vector.broadcast %277 : vector<1x32xf32> to vector<8x32xf32>
    %425 = arith.addf %423, %424 : vector<8x32xf32>
    %426 = vector.extract_strided_slice %407 {offsets = [0, 64], sizes = [8, 32], strides = [1, 1]} : vector<8x96xf32> to vector<8x32xf32>
    %427 = vector.broadcast %279 : vector<1x32xf32> to vector<8x32xf32>
    %428 = arith.addf %426, %427 : vector<8x32xf32>
    %429 = arith.mulf %421, %428 : vector<8x32xf32>
    %430 = arith.addf %425, %429 : vector<8x32xf32>
    %431 = math.tanh %430 : vector<8x32xf32>
    %cst_83 = arith.constant 1.000000e+00 : f32
    %432 = vector.broadcast %cst_83 : f32 to vector<8x32xf32>
    %433 = arith.subf %432, %422 : vector<8x32xf32>
    %434 = arith.mulf %433, %431 : vector<8x32xf32>
    %435 = arith.mulf %422, %405 : vector<8x32xf32>
    %436 = arith.addf %434, %435 : vector<8x32xf32>
    %437 = vector.extract_strided_slice %281 {offsets = [0, 5], sizes = [8, 1], strides = [1, 1]} : vector<8x8xf32> to vector<8x1xf32>
    %cst_84 = arith.constant dense<0.000000e+00> : vector<8x96xf32>
    %438 = tpu.matmul %436, %271, %cst_84 {dimension_numbers = #tpu.dot_dimension_numbers<[1], [0], [0], [1], [0, 0, 1, 1], [], []>} : vector<8x32xf32>, vector<32x96xf32>, vector<8x96xf32> -> vector<8x96xf32>
    %439 = vector.broadcast %437 : vector<8x1xf32> to vector<8x96xf32>
    %440 = vector.broadcast %273 : vector<1x96xf32> to vector<8x96xf32>
    %441 = arith.mulf %439, %440 : vector<8x96xf32>
    %442 = vector.extract_strided_slice %441 {offsets = [0, 0], sizes = [8, 64], strides = [1, 1]} : vector<8x96xf32> to vector<8x64xf32>
    %443 = vector.extract_strided_slice %438 {offsets = [0, 0], sizes = [8, 64], strides = [1, 1]} : vector<8x96xf32> to vector<8x64xf32>
    %444 = arith.addf %442, %443 : vector<8x64xf32>
    %445 = vector.broadcast %275 : vector<1x64xf32> to vector<8x64xf32>
    %446 = arith.addf %444, %445 : vector<8x64xf32>
    %447 = arith.negf %446 : vector<8x64xf32>
    %448 = math.exp %447 : vector<8x64xf32>
    %cst_85 = arith.constant 1.000000e+00 : f32
    %449 = vector.broadcast %cst_85 : f32 to vector<8x64xf32>
    %450 = arith.addf %449, %448 : vector<8x64xf32>
    %451 = arith.divf %449, %450 : vector<8x64xf32>
    %452 = vector.extract_strided_slice %451 {offsets = [0, 0], sizes = [8, 32], strides = [1, 1]} : vector<8x64xf32> to vector<8x32xf32>
    %453 = vector.extract_strided_slice %451 {offsets = [0, 32], sizes = [8, 32], strides = [1, 1]} : vector<8x64xf32> to vector<8x32xf32>
    %454 = vector.extract_strided_slice %441 {offsets = [0, 64], sizes = [8, 32], strides = [1, 1]} : vector<8x96xf32> to vector<8x32xf32>
    %455 = vector.broadcast %277 : vector<1x32xf32> to vector<8x32xf32>
    %456 = arith.addf %454, %455 : vector<8x32xf32>
    %457 = vector.extract_strided_slice %438 {offsets = [0, 64], sizes = [8, 32], strides = [1, 1]} : vector<8x96xf32> to vector<8x32xf32>
    %458 = vector.broadcast %279 : vector<1x32xf32> to vector<8x32xf32>
    %459 = arith.addf %457, %458 : vector<8x32xf32>
    %460 = arith.mulf %452, %459 : vector<8x32xf32>
    %461 = arith.addf %456, %460 : vector<8x32xf32>
    %462 = math.tanh %461 : vector<8x32xf32>
    %cst_86 = arith.constant 1.000000e+00 : f32
    %463 = vector.broadcast %cst_86 : f32 to vector<8x32xf32>
    %464 = arith.subf %463, %453 : vector<8x32xf32>
    %465 = arith.mulf %464, %462 : vector<8x32xf32>
    %466 = arith.mulf %453, %436 : vector<8x32xf32>
    %467 = arith.addf %465, %466 : vector<8x32xf32>
    %468 = vector.extract_strided_slice %281 {offsets = [0, 6], sizes = [8, 1], strides = [1, 1]} : vector<8x8xf32> to vector<8x1xf32>
    %cst_87 = arith.constant dense<0.000000e+00> : vector<8x96xf32>
    %469 = tpu.matmul %467, %271, %cst_87 {dimension_numbers = #tpu.dot_dimension_numbers<[1], [0], [0], [1], [0, 0, 1, 1], [], []>} : vector<8x32xf32>, vector<32x96xf32>, vector<8x96xf32> -> vector<8x96xf32>
    %470 = vector.broadcast %468 : vector<8x1xf32> to vector<8x96xf32>
    %471 = vector.broadcast %273 : vector<1x96xf32> to vector<8x96xf32>
    %472 = arith.mulf %470, %471 : vector<8x96xf32>
    %473 = vector.extract_strided_slice %472 {offsets = [0, 0], sizes = [8, 64], strides = [1, 1]} : vector<8x96xf32> to vector<8x64xf32>
    %474 = vector.extract_strided_slice %469 {offsets = [0, 0], sizes = [8, 64], strides = [1, 1]} : vector<8x96xf32> to vector<8x64xf32>
    %475 = arith.addf %473, %474 : vector<8x64xf32>
    %476 = vector.broadcast %275 : vector<1x64xf32> to vector<8x64xf32>
    %477 = arith.addf %475, %476 : vector<8x64xf32>
    %478 = arith.negf %477 : vector<8x64xf32>
    %479 = math.exp %478 : vector<8x64xf32>
    %cst_88 = arith.constant 1.000000e+00 : f32
    %480 = vector.broadcast %cst_88 : f32 to vector<8x64xf32>
    %481 = arith.addf %480, %479 : vector<8x64xf32>
    %482 = arith.divf %480, %481 : vector<8x64xf32>
    %483 = vector.extract_strided_slice %482 {offsets = [0, 0], sizes = [8, 32], strides = [1, 1]} : vector<8x64xf32> to vector<8x32xf32>
    %484 = vector.extract_strided_slice %482 {offsets = [0, 32], sizes = [8, 32], strides = [1, 1]} : vector<8x64xf32> to vector<8x32xf32>
    %485 = vector.extract_strided_slice %472 {offsets = [0, 64], sizes = [8, 32], strides = [1, 1]} : vector<8x96xf32> to vector<8x32xf32>
    %486 = vector.broadcast %277 : vector<1x32xf32> to vector<8x32xf32>
    %487 = arith.addf %485, %486 : vector<8x32xf32>
    %488 = vector.extract_strided_slice %469 {offsets = [0, 64], sizes = [8, 32], strides = [1, 1]} : vector<8x96xf32> to vector<8x32xf32>
    %489 = vector.broadcast %279 : vector<1x32xf32> to vector<8x32xf32>
    %490 = arith.addf %488, %489 : vector<8x32xf32>
    %491 = arith.mulf %483, %490 : vector<8x32xf32>
    %492 = arith.addf %487, %491 : vector<8x32xf32>
    %493 = math.tanh %492 : vector<8x32xf32>
    %cst_89 = arith.constant 1.000000e+00 : f32
    %494 = vector.broadcast %cst_89 : f32 to vector<8x32xf32>
    %495 = arith.subf %494, %484 : vector<8x32xf32>
    %496 = arith.mulf %495, %493 : vector<8x32xf32>
    %497 = arith.mulf %484, %467 : vector<8x32xf32>
    %498 = arith.addf %496, %497 : vector<8x32xf32>
    %499 = vector.extract_strided_slice %281 {offsets = [0, 7], sizes = [8, 1], strides = [1, 1]} : vector<8x8xf32> to vector<8x1xf32>
    %cst_90 = arith.constant dense<0.000000e+00> : vector<8x96xf32>
    %500 = tpu.matmul %498, %271, %cst_90 {dimension_numbers = #tpu.dot_dimension_numbers<[1], [0], [0], [1], [0, 0, 1, 1], [], []>} : vector<8x32xf32>, vector<32x96xf32>, vector<8x96xf32> -> vector<8x96xf32>
    %501 = vector.broadcast %499 : vector<8x1xf32> to vector<8x96xf32>
    %502 = vector.broadcast %273 : vector<1x96xf32> to vector<8x96xf32>
    %503 = arith.mulf %501, %502 : vector<8x96xf32>
    %504 = vector.extract_strided_slice %503 {offsets = [0, 0], sizes = [8, 64], strides = [1, 1]} : vector<8x96xf32> to vector<8x64xf32>
    %505 = vector.extract_strided_slice %500 {offsets = [0, 0], sizes = [8, 64], strides = [1, 1]} : vector<8x96xf32> to vector<8x64xf32>
    %506 = arith.addf %504, %505 : vector<8x64xf32>
    %507 = vector.broadcast %275 : vector<1x64xf32> to vector<8x64xf32>
    %508 = arith.addf %506, %507 : vector<8x64xf32>
    %509 = arith.negf %508 : vector<8x64xf32>
    %510 = math.exp %509 : vector<8x64xf32>
    %cst_91 = arith.constant 1.000000e+00 : f32
    %511 = vector.broadcast %cst_91 : f32 to vector<8x64xf32>
    %512 = arith.addf %511, %510 : vector<8x64xf32>
    %513 = arith.divf %511, %512 : vector<8x64xf32>
    %514 = vector.extract_strided_slice %513 {offsets = [0, 0], sizes = [8, 32], strides = [1, 1]} : vector<8x64xf32> to vector<8x32xf32>
    %515 = vector.extract_strided_slice %513 {offsets = [0, 32], sizes = [8, 32], strides = [1, 1]} : vector<8x64xf32> to vector<8x32xf32>
    %516 = vector.extract_strided_slice %503 {offsets = [0, 64], sizes = [8, 32], strides = [1, 1]} : vector<8x96xf32> to vector<8x32xf32>
    %517 = vector.broadcast %277 : vector<1x32xf32> to vector<8x32xf32>
    %518 = arith.addf %516, %517 : vector<8x32xf32>
    %519 = vector.extract_strided_slice %500 {offsets = [0, 64], sizes = [8, 32], strides = [1, 1]} : vector<8x96xf32> to vector<8x32xf32>
    %520 = vector.broadcast %279 : vector<1x32xf32> to vector<8x32xf32>
    %521 = arith.addf %519, %520 : vector<8x32xf32>
    %522 = arith.mulf %514, %521 : vector<8x32xf32>
    %523 = arith.addf %518, %522 : vector<8x32xf32>
    %524 = math.tanh %523 : vector<8x32xf32>
    %cst_92 = arith.constant 1.000000e+00 : f32
    %525 = vector.broadcast %cst_92 : f32 to vector<8x32xf32>
    %526 = arith.subf %525, %515 : vector<8x32xf32>
    %527 = arith.mulf %526, %524 : vector<8x32xf32>
    %528 = arith.mulf %515, %498 : vector<8x32xf32>
    %529 = arith.addf %527, %528 : vector<8x32xf32>
    %c1_93 = arith.constant 1 : index
    %c0_94 = arith.constant 0 : index
    %c0_95 = arith.constant 0 : index
    %530 = vector.load %arg17[%c1_93, %c0_94, %c0_95] : memref<4x8x32xf32, #tpu.memory_space<vmem>>, vector<1x8x32xf32>
    %531 = vector.shape_cast %530 : vector<1x8x32xf32> to vector<8x32xf32>
    %532 = vector.shape_cast %529 : vector<8x32xf32> to vector<1x8x32xf32>
    tpu.vector_store %arg17[%c1_93, %c0_94, %c0_95], %532 {strides = array<i32>} : memref<4x8x32xf32, #tpu.memory_space<vmem>>, vector<1x8x32xf32>,
    %c2 = arith.constant 2 : index
    %c0_96 = arith.constant 0 : index
    %c0_97 = arith.constant 0 : index
    %533 = vector.load %arg17[%c2, %c0_96, %c0_97] : memref<4x8x32xf32, #tpu.memory_space<vmem>>, vector<1x8x32xf32>
    %534 = vector.shape_cast %533 : vector<1x8x32xf32> to vector<8x32xf32>
    %c2_98 = arith.constant 2 : index
    %c0_99 = arith.constant 0 : index
    %c0_100 = arith.constant 0 : index
    %535 = vector.load %arg5[%c2_98, %c0_99, %c0_100] : memref<4x32x96xf32, #tpu.memory_space<vmem>>, vector<1x32x96xf32>
    %536 = vector.shape_cast %535 : vector<1x32x96xf32> to vector<32x96xf32>
    %c2_101 = arith.constant 2 : index
    %c0_102 = arith.constant 0 : index
    %c0_103 = arith.constant 0 : index
    %537 = vector.load %arg4[%c2_101, %c0_102, %c0_103] : memref<4x1x96xf32, #tpu.memory_space<vmem>>, vector<1x1x96xf32>
    %538 = vector.shape_cast %537 : vector<1x1x96xf32> to vector<1x96xf32>
    %c2_104 = arith.constant 2 : index
    %c0_105 = arith.constant 0 : index
    %c0_106 = arith.constant 0 : index
    %539 = vector.load %arg6[%c2_104, %c0_105, %c0_106] : memref<4x1x64xf32, #tpu.memory_space<vmem>>, vector<1x1x64xf32>
    %540 = vector.shape_cast %539 : vector<1x1x64xf32> to vector<1x64xf32>
    %c2_107 = arith.constant 2 : index
    %c0_108 = arith.constant 0 : index
    %c0_109 = arith.constant 0 : index
    %541 = vector.load %arg7[%c2_107, %c0_108, %c0_109] : memref<4x1x32xf32, #tpu.memory_space<vmem>>, vector<1x1x32xf32>
    %542 = vector.shape_cast %541 : vector<1x1x32xf32> to vector<1x32xf32>
    %c2_110 = arith.constant 2 : index
    %c0_111 = arith.constant 0 : index
    %c0_112 = arith.constant 0 : index
    %543 = vector.load %arg8[%c2_110, %c0_111, %c0_112] : memref<4x1x32xf32, #tpu.memory_space<vmem>>, vector<1x1x32xf32>
    %544 = vector.shape_cast %543 : vector<1x1x32xf32> to vector<1x32xf32>
    %c0_113 = arith.constant 0 : index
    %c2_114 = arith.constant 2 : index
    %c0_115 = arith.constant 0 : index
    %c0_116 = arith.constant 0 : index
    %545 = vector.load %arg2[%c0_113, %c2_114, %c0_115, %c0_116] : memref<1x4x8x8xf32, #tpu.memory_space<vmem>>, vector<1x1x8x8xf32>
    %546 = vector.shape_cast %545 : vector<1x1x8x8xf32> to vector<8x8xf32>
    %547 = vector.extract_strided_slice %546 {offsets = [0, 0], sizes = [8, 1], strides = [1, 1]} : vector<8x8xf32> to vector<8x1xf32>
    %cst_117 = arith.constant dense<0.000000e+00> : vector<8x96xf32>
    %548 = tpu.matmul %534, %536, %cst_117 {dimension_numbers = #tpu.dot_dimension_numbers<[1], [0], [0], [1], [0, 0, 1, 1], [], []>} : vector<8x32xf32>, vector<32x96xf32>, vector<8x96xf32> -> vector<8x96xf32>
    %549 = vector.broadcast %547 : vector<8x1xf32> to vector<8x96xf32>
    %550 = vector.broadcast %538 : vector<1x96xf32> to vector<8x96xf32>
    %551 = arith.mulf %549, %550 : vector<8x96xf32>
    %552 = vector.extract_strided_slice %551 {offsets = [0, 0], sizes = [8, 64], strides = [1, 1]} : vector<8x96xf32> to vector<8x64xf32>
    %553 = vector.extract_strided_slice %548 {offsets = [0, 0], sizes = [8, 64], strides = [1, 1]} : vector<8x96xf32> to vector<8x64xf32>
    %554 = arith.addf %552, %553 : vector<8x64xf32>
    %555 = vector.broadcast %540 : vector<1x64xf32> to vector<8x64xf32>
    %556 = arith.addf %554, %555 : vector<8x64xf32>
    %557 = arith.negf %556 : vector<8x64xf32>
    %558 = math.exp %557 : vector<8x64xf32>
    %cst_118 = arith.constant 1.000000e+00 : f32
    %559 = vector.broadcast %cst_118 : f32 to vector<8x64xf32>
    %560 = arith.addf %559, %558 : vector<8x64xf32>
    %561 = arith.divf %559, %560 : vector<8x64xf32>
    %562 = vector.extract_strided_slice %561 {offsets = [0, 0], sizes = [8, 32], strides = [1, 1]} : vector<8x64xf32> to vector<8x32xf32>
    %563 = vector.extract_strided_slice %561 {offsets = [0, 32], sizes = [8, 32], strides = [1, 1]} : vector<8x64xf32> to vector<8x32xf32>
    %564 = vector.extract_strided_slice %551 {offsets = [0, 64], sizes = [8, 32], strides = [1, 1]} : vector<8x96xf32> to vector<8x32xf32>
    %565 = vector.broadcast %542 : vector<1x32xf32> to vector<8x32xf32>
    %566 = arith.addf %564, %565 : vector<8x32xf32>
    %567 = vector.extract_strided_slice %548 {offsets = [0, 64], sizes = [8, 32], strides = [1, 1]} : vector<8x96xf32> to vector<8x32xf32>
    %568 = vector.broadcast %544 : vector<1x32xf32> to vector<8x32xf32>
    %569 = arith.addf %567, %568 : vector<8x32xf32>
    %570 = arith.mulf %562, %569 : vector<8x32xf32>
    %571 = arith.addf %566, %570 : vector<8x32xf32>
    %572 = math.tanh %571 : vector<8x32xf32>
    %cst_119 = arith.constant 1.000000e+00 : f32
    %573 = vector.broadcast %cst_119 : f32 to vector<8x32xf32>
    %574 = arith.subf %573, %563 : vector<8x32xf32>
    %575 = arith.mulf %574, %572 : vector<8x32xf32>
    %576 = arith.mulf %563, %534 : vector<8x32xf32>
    %577 = arith.addf %575, %576 : vector<8x32xf32>
    %578 = vector.extract_strided_slice %546 {offsets = [0, 1], sizes = [8, 1], strides = [1, 1]} : vector<8x8xf32> to vector<8x1xf32>
    %cst_120 = arith.constant dense<0.000000e+00> : vector<8x96xf32>
    %579 = tpu.matmul %577, %536, %cst_120 {dimension_numbers = #tpu.dot_dimension_numbers<[1], [0], [0], [1], [0, 0, 1, 1], [], []>} : vector<8x32xf32>, vector<32x96xf32>, vector<8x96xf32> -> vector<8x96xf32>
    %580 = vector.broadcast %578 : vector<8x1xf32> to vector<8x96xf32>
    %581 = vector.broadcast %538 : vector<1x96xf32> to vector<8x96xf32>
    %582 = arith.mulf %580, %581 : vector<8x96xf32>
    %583 = vector.extract_strided_slice %582 {offsets = [0, 0], sizes = [8, 64], strides = [1, 1]} : vector<8x96xf32> to vector<8x64xf32>
    %584 = vector.extract_strided_slice %579 {offsets = [0, 0], sizes = [8, 64], strides = [1, 1]} : vector<8x96xf32> to vector<8x64xf32>
    %585 = arith.addf %583, %584 : vector<8x64xf32>
    %586 = vector.broadcast %540 : vector<1x64xf32> to vector<8x64xf32>
    %587 = arith.addf %585, %586 : vector<8x64xf32>
    %588 = arith.negf %587 : vector<8x64xf32>
    %589 = math.exp %588 : vector<8x64xf32>
    %cst_121 = arith.constant 1.000000e+00 : f32
    %590 = vector.broadcast %cst_121 : f32 to vector<8x64xf32>
    %591 = arith.addf %590, %589 : vector<8x64xf32>
    %592 = arith.divf %590, %591 : vector<8x64xf32>
    %593 = vector.extract_strided_slice %592 {offsets = [0, 0], sizes = [8, 32], strides = [1, 1]} : vector<8x64xf32> to vector<8x32xf32>
    %594 = vector.extract_strided_slice %592 {offsets = [0, 32], sizes = [8, 32], strides = [1, 1]} : vector<8x64xf32> to vector<8x32xf32>
    %595 = vector.extract_strided_slice %582 {offsets = [0, 64], sizes = [8, 32], strides = [1, 1]} : vector<8x96xf32> to vector<8x32xf32>
    %596 = vector.broadcast %542 : vector<1x32xf32> to vector<8x32xf32>
    %597 = arith.addf %595, %596 : vector<8x32xf32>
    %598 = vector.extract_strided_slice %579 {offsets = [0, 64], sizes = [8, 32], strides = [1, 1]} : vector<8x96xf32> to vector<8x32xf32>
    %599 = vector.broadcast %544 : vector<1x32xf32> to vector<8x32xf32>
    %600 = arith.addf %598, %599 : vector<8x32xf32>
    %601 = arith.mulf %593, %600 : vector<8x32xf32>
    %602 = arith.addf %597, %601 : vector<8x32xf32>
    %603 = math.tanh %602 : vector<8x32xf32>
    %cst_122 = arith.constant 1.000000e+00 : f32
    %604 = vector.broadcast %cst_122 : f32 to vector<8x32xf32>
    %605 = arith.subf %604, %594 : vector<8x32xf32>
    %606 = arith.mulf %605, %603 : vector<8x32xf32>
    %607 = arith.mulf %594, %577 : vector<8x32xf32>
    %608 = arith.addf %606, %607 : vector<8x32xf32>
    %609 = vector.extract_strided_slice %546 {offsets = [0, 2], sizes = [8, 1], strides = [1, 1]} : vector<8x8xf32> to vector<8x1xf32>
    %cst_123 = arith.constant dense<0.000000e+00> : vector<8x96xf32>
    %610 = tpu.matmul %608, %536, %cst_123 {dimension_numbers = #tpu.dot_dimension_numbers<[1], [0], [0], [1], [0, 0, 1, 1], [], []>} : vector<8x32xf32>, vector<32x96xf32>, vector<8x96xf32> -> vector<8x96xf32>
    %611 = vector.broadcast %609 : vector<8x1xf32> to vector<8x96xf32>
    %612 = vector.broadcast %538 : vector<1x96xf32> to vector<8x96xf32>
    %613 = arith.mulf %611, %612 : vector<8x96xf32>
    %614 = vector.extract_strided_slice %613 {offsets = [0, 0], sizes = [8, 64], strides = [1, 1]} : vector<8x96xf32> to vector<8x64xf32>
    %615 = vector.extract_strided_slice %610 {offsets = [0, 0], sizes = [8, 64], strides = [1, 1]} : vector<8x96xf32> to vector<8x64xf32>
    %616 = arith.addf %614, %615 : vector<8x64xf32>
    %617 = vector.broadcast %540 : vector<1x64xf32> to vector<8x64xf32>
    %618 = arith.addf %616, %617 : vector<8x64xf32>
    %619 = arith.negf %618 : vector<8x64xf32>
    %620 = math.exp %619 : vector<8x64xf32>
    %cst_124 = arith.constant 1.000000e+00 : f32
    %621 = vector.broadcast %cst_124 : f32 to vector<8x64xf32>
    %622 = arith.addf %621, %620 : vector<8x64xf32>
    %623 = arith.divf %621, %622 : vector<8x64xf32>
    %624 = vector.extract_strided_slice %623 {offsets = [0, 0], sizes = [8, 32], strides = [1, 1]} : vector<8x64xf32> to vector<8x32xf32>
    %625 = vector.extract_strided_slice %623 {offsets = [0, 32], sizes = [8, 32], strides = [1, 1]} : vector<8x64xf32> to vector<8x32xf32>
    %626 = vector.extract_strided_slice %613 {offsets = [0, 64], sizes = [8, 32], strides = [1, 1]} : vector<8x96xf32> to vector<8x32xf32>
    %627 = vector.broadcast %542 : vector<1x32xf32> to vector<8x32xf32>
    %628 = arith.addf %626, %627 : vector<8x32xf32>
    %629 = vector.extract_strided_slice %610 {offsets = [0, 64], sizes = [8, 32], strides = [1, 1]} : vector<8x96xf32> to vector<8x32xf32>
    %630 = vector.broadcast %544 : vector<1x32xf32> to vector<8x32xf32>
    %631 = arith.addf %629, %630 : vector<8x32xf32>
    %632 = arith.mulf %624, %631 : vector<8x32xf32>
    %633 = arith.addf %628, %632 : vector<8x32xf32>
    %634 = math.tanh %633 : vector<8x32xf32>
    %cst_125 = arith.constant 1.000000e+00 : f32
    %635 = vector.broadcast %cst_125 : f32 to vector<8x32xf32>
    %636 = arith.subf %635, %625 : vector<8x32xf32>
    %637 = arith.mulf %636, %634 : vector<8x32xf32>
    %638 = arith.mulf %625, %608 : vector<8x32xf32>
    %639 = arith.addf %637, %638 : vector<8x32xf32>
    %640 = vector.extract_strided_slice %546 {offsets = [0, 3], sizes = [8, 1], strides = [1, 1]} : vector<8x8xf32> to vector<8x1xf32>
    %cst_126 = arith.constant dense<0.000000e+00> : vector<8x96xf32>
    %641 = tpu.matmul %639, %536, %cst_126 {dimension_numbers = #tpu.dot_dimension_numbers<[1], [0], [0], [1], [0, 0, 1, 1], [], []>} : vector<8x32xf32>, vector<32x96xf32>, vector<8x96xf32> -> vector<8x96xf32>
    %642 = vector.broadcast %640 : vector<8x1xf32> to vector<8x96xf32>
    %643 = vector.broadcast %538 : vector<1x96xf32> to vector<8x96xf32>
    %644 = arith.mulf %642, %643 : vector<8x96xf32>
    %645 = vector.extract_strided_slice %644 {offsets = [0, 0], sizes = [8, 64], strides = [1, 1]} : vector<8x96xf32> to vector<8x64xf32>
    %646 = vector.extract_strided_slice %641 {offsets = [0, 0], sizes = [8, 64], strides = [1, 1]} : vector<8x96xf32> to vector<8x64xf32>
    %647 = arith.addf %645, %646 : vector<8x64xf32>
    %648 = vector.broadcast %540 : vector<1x64xf32> to vector<8x64xf32>
    %649 = arith.addf %647, %648 : vector<8x64xf32>
    %650 = arith.negf %649 : vector<8x64xf32>
    %651 = math.exp %650 : vector<8x64xf32>
    %cst_127 = arith.constant 1.000000e+00 : f32
    %652 = vector.broadcast %cst_127 : f32 to vector<8x64xf32>
    %653 = arith.addf %652, %651 : vector<8x64xf32>
    %654 = arith.divf %652, %653 : vector<8x64xf32>
    %655 = vector.extract_strided_slice %654 {offsets = [0, 0], sizes = [8, 32], strides = [1, 1]} : vector<8x64xf32> to vector<8x32xf32>
    %656 = vector.extract_strided_slice %654 {offsets = [0, 32], sizes = [8, 32], strides = [1, 1]} : vector<8x64xf32> to vector<8x32xf32>
    %657 = vector.extract_strided_slice %644 {offsets = [0, 64], sizes = [8, 32], strides = [1, 1]} : vector<8x96xf32> to vector<8x32xf32>
    %658 = vector.broadcast %542 : vector<1x32xf32> to vector<8x32xf32>
    %659 = arith.addf %657, %658 : vector<8x32xf32>
    %660 = vector.extract_strided_slice %641 {offsets = [0, 64], sizes = [8, 32], strides = [1, 1]} : vector<8x96xf32> to vector<8x32xf32>
    %661 = vector.broadcast %544 : vector<1x32xf32> to vector<8x32xf32>
    %662 = arith.addf %660, %661 : vector<8x32xf32>
    %663 = arith.mulf %655, %662 : vector<8x32xf32>
    %664 = arith.addf %659, %663 : vector<8x32xf32>
    %665 = math.tanh %664 : vector<8x32xf32>
    %cst_128 = arith.constant 1.000000e+00 : f32
    %666 = vector.broadcast %cst_128 : f32 to vector<8x32xf32>
    %667 = arith.subf %666, %656 : vector<8x32xf32>
    %668 = arith.mulf %667, %665 : vector<8x32xf32>
    %669 = arith.mulf %656, %639 : vector<8x32xf32>
    %670 = arith.addf %668, %669 : vector<8x32xf32>
    %671 = vector.extract_strided_slice %546 {offsets = [0, 4], sizes = [8, 1], strides = [1, 1]} : vector<8x8xf32> to vector<8x1xf32>
    %cst_129 = arith.constant dense<0.000000e+00> : vector<8x96xf32>
    %672 = tpu.matmul %670, %536, %cst_129 {dimension_numbers = #tpu.dot_dimension_numbers<[1], [0], [0], [1], [0, 0, 1, 1], [], []>} : vector<8x32xf32>, vector<32x96xf32>, vector<8x96xf32> -> vector<8x96xf32>
    %673 = vector.broadcast %671 : vector<8x1xf32> to vector<8x96xf32>
    %674 = vector.broadcast %538 : vector<1x96xf32> to vector<8x96xf32>
    %675 = arith.mulf %673, %674 : vector<8x96xf32>
    %676 = vector.extract_strided_slice %675 {offsets = [0, 0], sizes = [8, 64], strides = [1, 1]} : vector<8x96xf32> to vector<8x64xf32>
    %677 = vector.extract_strided_slice %672 {offsets = [0, 0], sizes = [8, 64], strides = [1, 1]} : vector<8x96xf32> to vector<8x64xf32>
    %678 = arith.addf %676, %677 : vector<8x64xf32>
    %679 = vector.broadcast %540 : vector<1x64xf32> to vector<8x64xf32>
    %680 = arith.addf %678, %679 : vector<8x64xf32>
    %681 = arith.negf %680 : vector<8x64xf32>
    %682 = math.exp %681 : vector<8x64xf32>
    %cst_130 = arith.constant 1.000000e+00 : f32
    %683 = vector.broadcast %cst_130 : f32 to vector<8x64xf32>
    %684 = arith.addf %683, %682 : vector<8x64xf32>
    %685 = arith.divf %683, %684 : vector<8x64xf32>
    %686 = vector.extract_strided_slice %685 {offsets = [0, 0], sizes = [8, 32], strides = [1, 1]} : vector<8x64xf32> to vector<8x32xf32>
    %687 = vector.extract_strided_slice %685 {offsets = [0, 32], sizes = [8, 32], strides = [1, 1]} : vector<8x64xf32> to vector<8x32xf32>
    %688 = vector.extract_strided_slice %675 {offsets = [0, 64], sizes = [8, 32], strides = [1, 1]} : vector<8x96xf32> to vector<8x32xf32>
    %689 = vector.broadcast %542 : vector<1x32xf32> to vector<8x32xf32>
    %690 = arith.addf %688, %689 : vector<8x32xf32>
    %691 = vector.extract_strided_slice %672 {offsets = [0, 64], sizes = [8, 32], strides = [1, 1]} : vector<8x96xf32> to vector<8x32xf32>
    %692 = vector.broadcast %544 : vector<1x32xf32> to vector<8x32xf32>
    %693 = arith.addf %691, %692 : vector<8x32xf32>
    %694 = arith.mulf %686, %693 : vector<8x32xf32>
    %695 = arith.addf %690, %694 : vector<8x32xf32>
    %696 = math.tanh %695 : vector<8x32xf32>
    %cst_131 = arith.constant 1.000000e+00 : f32
    %697 = vector.broadcast %cst_131 : f32 to vector<8x32xf32>
    %698 = arith.subf %697, %687 : vector<8x32xf32>
    %699 = arith.mulf %698, %696 : vector<8x32xf32>
    %700 = arith.mulf %687, %670 : vector<8x32xf32>
    %701 = arith.addf %699, %700 : vector<8x32xf32>
    %702 = vector.extract_strided_slice %546 {offsets = [0, 5], sizes = [8, 1], strides = [1, 1]} : vector<8x8xf32> to vector<8x1xf32>
    %cst_132 = arith.constant dense<0.000000e+00> : vector<8x96xf32>
    %703 = tpu.matmul %701, %536, %cst_132 {dimension_numbers = #tpu.dot_dimension_numbers<[1], [0], [0], [1], [0, 0, 1, 1], [], []>} : vector<8x32xf32>, vector<32x96xf32>, vector<8x96xf32> -> vector<8x96xf32>
    %704 = vector.broadcast %702 : vector<8x1xf32> to vector<8x96xf32>
    %705 = vector.broadcast %538 : vector<1x96xf32> to vector<8x96xf32>
    %706 = arith.mulf %704, %705 : vector<8x96xf32>
    %707 = vector.extract_strided_slice %706 {offsets = [0, 0], sizes = [8, 64], strides = [1, 1]} : vector<8x96xf32> to vector<8x64xf32>
    %708 = vector.extract_strided_slice %703 {offsets = [0, 0], sizes = [8, 64], strides = [1, 1]} : vector<8x96xf32> to vector<8x64xf32>
    %709 = arith.addf %707, %708 : vector<8x64xf32>
    %710 = vector.broadcast %540 : vector<1x64xf32> to vector<8x64xf32>
    %711 = arith.addf %709, %710 : vector<8x64xf32>
    %712 = arith.negf %711 : vector<8x64xf32>
    %713 = math.exp %712 : vector<8x64xf32>
    %cst_133 = arith.constant 1.000000e+00 : f32
    %714 = vector.broadcast %cst_133 : f32 to vector<8x64xf32>
    %715 = arith.addf %714, %713 : vector<8x64xf32>
    %716 = arith.divf %714, %715 : vector<8x64xf32>
    %717 = vector.extract_strided_slice %716 {offsets = [0, 0], sizes = [8, 32], strides = [1, 1]} : vector<8x64xf32> to vector<8x32xf32>
    %718 = vector.extract_strided_slice %716 {offsets = [0, 32], sizes = [8, 32], strides = [1, 1]} : vector<8x64xf32> to vector<8x32xf32>
    %719 = vector.extract_strided_slice %706 {offsets = [0, 64], sizes = [8, 32], strides = [1, 1]} : vector<8x96xf32> to vector<8x32xf32>
    %720 = vector.broadcast %542 : vector<1x32xf32> to vector<8x32xf32>
    %721 = arith.addf %719, %720 : vector<8x32xf32>
    %722 = vector.extract_strided_slice %703 {offsets = [0, 64], sizes = [8, 32], strides = [1, 1]} : vector<8x96xf32> to vector<8x32xf32>
    %723 = vector.broadcast %544 : vector<1x32xf32> to vector<8x32xf32>
    %724 = arith.addf %722, %723 : vector<8x32xf32>
    %725 = arith.mulf %717, %724 : vector<8x32xf32>
    %726 = arith.addf %721, %725 : vector<8x32xf32>
    %727 = math.tanh %726 : vector<8x32xf32>
    %cst_134 = arith.constant 1.000000e+00 : f32
    %728 = vector.broadcast %cst_134 : f32 to vector<8x32xf32>
    %729 = arith.subf %728, %718 : vector<8x32xf32>
    %730 = arith.mulf %729, %727 : vector<8x32xf32>
    %731 = arith.mulf %718, %701 : vector<8x32xf32>
    %732 = arith.addf %730, %731 : vector<8x32xf32>
    %733 = vector.extract_strided_slice %546 {offsets = [0, 6], sizes = [8, 1], strides = [1, 1]} : vector<8x8xf32> to vector<8x1xf32>
    %cst_135 = arith.constant dense<0.000000e+00> : vector<8x96xf32>
    %734 = tpu.matmul %732, %536, %cst_135 {dimension_numbers = #tpu.dot_dimension_numbers<[1], [0], [0], [1], [0, 0, 1, 1], [], []>} : vector<8x32xf32>, vector<32x96xf32>, vector<8x96xf32> -> vector<8x96xf32>
    %735 = vector.broadcast %733 : vector<8x1xf32> to vector<8x96xf32>
    %736 = vector.broadcast %538 : vector<1x96xf32> to vector<8x96xf32>
    %737 = arith.mulf %735, %736 : vector<8x96xf32>
    %738 = vector.extract_strided_slice %737 {offsets = [0, 0], sizes = [8, 64], strides = [1, 1]} : vector<8x96xf32> to vector<8x64xf32>
    %739 = vector.extract_strided_slice %734 {offsets = [0, 0], sizes = [8, 64], strides = [1, 1]} : vector<8x96xf32> to vector<8x64xf32>
    %740 = arith.addf %738, %739 : vector<8x64xf32>
    %741 = vector.broadcast %540 : vector<1x64xf32> to vector<8x64xf32>
    %742 = arith.addf %740, %741 : vector<8x64xf32>
    %743 = arith.negf %742 : vector<8x64xf32>
    %744 = math.exp %743 : vector<8x64xf32>
    %cst_136 = arith.constant 1.000000e+00 : f32
    %745 = vector.broadcast %cst_136 : f32 to vector<8x64xf32>
    %746 = arith.addf %745, %744 : vector<8x64xf32>
    %747 = arith.divf %745, %746 : vector<8x64xf32>
    %748 = vector.extract_strided_slice %747 {offsets = [0, 0], sizes = [8, 32], strides = [1, 1]} : vector<8x64xf32> to vector<8x32xf32>
    %749 = vector.extract_strided_slice %747 {offsets = [0, 32], sizes = [8, 32], strides = [1, 1]} : vector<8x64xf32> to vector<8x32xf32>
    %750 = vector.extract_strided_slice %737 {offsets = [0, 64], sizes = [8, 32], strides = [1, 1]} : vector<8x96xf32> to vector<8x32xf32>
    %751 = vector.broadcast %542 : vector<1x32xf32> to vector<8x32xf32>
    %752 = arith.addf %750, %751 : vector<8x32xf32>
    %753 = vector.extract_strided_slice %734 {offsets = [0, 64], sizes = [8, 32], strides = [1, 1]} : vector<8x96xf32> to vector<8x32xf32>
    %754 = vector.broadcast %544 : vector<1x32xf32> to vector<8x32xf32>
    %755 = arith.addf %753, %754 : vector<8x32xf32>
    %756 = arith.mulf %748, %755 : vector<8x32xf32>
    %757 = arith.addf %752, %756 : vector<8x32xf32>
    %758 = math.tanh %757 : vector<8x32xf32>
    %cst_137 = arith.constant 1.000000e+00 : f32
    %759 = vector.broadcast %cst_137 : f32 to vector<8x32xf32>
    %760 = arith.subf %759, %749 : vector<8x32xf32>
    %761 = arith.mulf %760, %758 : vector<8x32xf32>
    %762 = arith.mulf %749, %732 : vector<8x32xf32>
    %763 = arith.addf %761, %762 : vector<8x32xf32>
    %764 = vector.extract_strided_slice %546 {offsets = [0, 7], sizes = [8, 1], strides = [1, 1]} : vector<8x8xf32> to vector<8x1xf32>
    %cst_138 = arith.constant dense<0.000000e+00> : vector<8x96xf32>
    %765 = tpu.matmul %763, %536, %cst_138 {dimension_numbers = #tpu.dot_dimension_numbers<[1], [0], [0], [1], [0, 0, 1, 1], [], []>} : vector<8x32xf32>, vector<32x96xf32>, vector<8x96xf32> -> vector<8x96xf32>
    %766 = vector.broadcast %764 : vector<8x1xf32> to vector<8x96xf32>
    %767 = vector.broadcast %538 : vector<1x96xf32> to vector<8x96xf32>
    %768 = arith.mulf %766, %767 : vector<8x96xf32>
    %769 = vector.extract_strided_slice %768 {offsets = [0, 0], sizes = [8, 64], strides = [1, 1]} : vector<8x96xf32> to vector<8x64xf32>
    %770 = vector.extract_strided_slice %765 {offsets = [0, 0], sizes = [8, 64], strides = [1, 1]} : vector<8x96xf32> to vector<8x64xf32>
    %771 = arith.addf %769, %770 : vector<8x64xf32>
    %772 = vector.broadcast %540 : vector<1x64xf32> to vector<8x64xf32>
    %773 = arith.addf %771, %772 : vector<8x64xf32>
    %774 = arith.negf %773 : vector<8x64xf32>
    %775 = math.exp %774 : vector<8x64xf32>
    %cst_139 = arith.constant 1.000000e+00 : f32
    %776 = vector.broadcast %cst_139 : f32 to vector<8x64xf32>
    %777 = arith.addf %776, %775 : vector<8x64xf32>
    %778 = arith.divf %776, %777 : vector<8x64xf32>
    %779 = vector.extract_strided_slice %778 {offsets = [0, 0], sizes = [8, 32], strides = [1, 1]} : vector<8x64xf32> to vector<8x32xf32>
    %780 = vector.extract_strided_slice %778 {offsets = [0, 32], sizes = [8, 32], strides = [1, 1]} : vector<8x64xf32> to vector<8x32xf32>
    %781 = vector.extract_strided_slice %768 {offsets = [0, 64], sizes = [8, 32], strides = [1, 1]} : vector<8x96xf32> to vector<8x32xf32>
    %782 = vector.broadcast %542 : vector<1x32xf32> to vector<8x32xf32>
    %783 = arith.addf %781, %782 : vector<8x32xf32>
    %784 = vector.extract_strided_slice %765 {offsets = [0, 64], sizes = [8, 32], strides = [1, 1]} : vector<8x96xf32> to vector<8x32xf32>
    %785 = vector.broadcast %544 : vector<1x32xf32> to vector<8x32xf32>
    %786 = arith.addf %784, %785 : vector<8x32xf32>
    %787 = arith.mulf %779, %786 : vector<8x32xf32>
    %788 = arith.addf %783, %787 : vector<8x32xf32>
    %789 = math.tanh %788 : vector<8x32xf32>
    %cst_140 = arith.constant 1.000000e+00 : f32
    %790 = vector.broadcast %cst_140 : f32 to vector<8x32xf32>
    %791 = arith.subf %790, %780 : vector<8x32xf32>
    %792 = arith.mulf %791, %789 : vector<8x32xf32>
    %793 = arith.mulf %780, %763 : vector<8x32xf32>
    %794 = arith.addf %792, %793 : vector<8x32xf32>
    %c2_141 = arith.constant 2 : index
    %c0_142 = arith.constant 0 : index
    %c0_143 = arith.constant 0 : index
    %795 = vector.load %arg17[%c2_141, %c0_142, %c0_143] : memref<4x8x32xf32, #tpu.memory_space<vmem>>, vector<1x8x32xf32>
    %796 = vector.shape_cast %795 : vector<1x8x32xf32> to vector<8x32xf32>
    %797 = vector.shape_cast %794 : vector<8x32xf32> to vector<1x8x32xf32>
    tpu.vector_store %arg17[%c2_141, %c0_142, %c0_143], %797 {strides = array<i32>} : memref<4x8x32xf32, #tpu.memory_space<vmem>>, vector<1x8x32xf32>,
    %c3 = arith.constant 3 : index
    %c0_144 = arith.constant 0 : index
    %c0_145 = arith.constant 0 : index
    %798 = vector.load %arg17[%c3, %c0_144, %c0_145] : memref<4x8x32xf32, #tpu.memory_space<vmem>>, vector<1x8x32xf32>
    %799 = vector.shape_cast %798 : vector<1x8x32xf32> to vector<8x32xf32>
    %c3_146 = arith.constant 3 : index
    %c0_147 = arith.constant 0 : index
    %c0_148 = arith.constant 0 : index
    %800 = vector.load %arg5[%c3_146, %c0_147, %c0_148] : memref<4x32x96xf32, #tpu.memory_space<vmem>>, vector<1x32x96xf32>
    %801 = vector.shape_cast %800 : vector<1x32x96xf32> to vector<32x96xf32>
    %c3_149 = arith.constant 3 : index
    %c0_150 = arith.constant 0 : index
    %c0_151 = arith.constant 0 : index
    %802 = vector.load %arg4[%c3_149, %c0_150, %c0_151] : memref<4x1x96xf32, #tpu.memory_space<vmem>>, vector<1x1x96xf32>
    %803 = vector.shape_cast %802 : vector<1x1x96xf32> to vector<1x96xf32>
    %c3_152 = arith.constant 3 : index
    %c0_153 = arith.constant 0 : index
    %c0_154 = arith.constant 0 : index
    %804 = vector.load %arg6[%c3_152, %c0_153, %c0_154] : memref<4x1x64xf32, #tpu.memory_space<vmem>>, vector<1x1x64xf32>
    %805 = vector.shape_cast %804 : vector<1x1x64xf32> to vector<1x64xf32>
    %c3_155 = arith.constant 3 : index
    %c0_156 = arith.constant 0 : index
    %c0_157 = arith.constant 0 : index
    %806 = vector.load %arg7[%c3_155, %c0_156, %c0_157] : memref<4x1x32xf32, #tpu.memory_space<vmem>>, vector<1x1x32xf32>
    %807 = vector.shape_cast %806 : vector<1x1x32xf32> to vector<1x32xf32>
    %c3_158 = arith.constant 3 : index
    %c0_159 = arith.constant 0 : index
    %c0_160 = arith.constant 0 : index
    %808 = vector.load %arg8[%c3_158, %c0_159, %c0_160] : memref<4x1x32xf32, #tpu.memory_space<vmem>>, vector<1x1x32xf32>
    %809 = vector.shape_cast %808 : vector<1x1x32xf32> to vector<1x32xf32>
    %c0_161 = arith.constant 0 : index
    %c3_162 = arith.constant 3 : index
    %c0_163 = arith.constant 0 : index
    %c0_164 = arith.constant 0 : index
    %810 = vector.load %arg2[%c0_161, %c3_162, %c0_163, %c0_164] : memref<1x4x8x8xf32, #tpu.memory_space<vmem>>, vector<1x1x8x8xf32>
    %811 = vector.shape_cast %810 : vector<1x1x8x8xf32> to vector<8x8xf32>
    %812 = vector.extract_strided_slice %811 {offsets = [0, 0], sizes = [8, 1], strides = [1, 1]} : vector<8x8xf32> to vector<8x1xf32>
    %cst_165 = arith.constant dense<0.000000e+00> : vector<8x96xf32>
    %813 = tpu.matmul %799, %801, %cst_165 {dimension_numbers = #tpu.dot_dimension_numbers<[1], [0], [0], [1], [0, 0, 1, 1], [], []>} : vector<8x32xf32>, vector<32x96xf32>, vector<8x96xf32> -> vector<8x96xf32>
    %814 = vector.broadcast %812 : vector<8x1xf32> to vector<8x96xf32>
    %815 = vector.broadcast %803 : vector<1x96xf32> to vector<8x96xf32>
    %816 = arith.mulf %814, %815 : vector<8x96xf32>
    %817 = vector.extract_strided_slice %816 {offsets = [0, 0], sizes = [8, 64], strides = [1, 1]} : vector<8x96xf32> to vector<8x64xf32>
    %818 = vector.extract_strided_slice %813 {offsets = [0, 0], sizes = [8, 64], strides = [1, 1]} : vector<8x96xf32> to vector<8x64xf32>
    %819 = arith.addf %817, %818 : vector<8x64xf32>
    %820 = vector.broadcast %805 : vector<1x64xf32> to vector<8x64xf32>
    %821 = arith.addf %819, %820 : vector<8x64xf32>
    %822 = arith.negf %821 : vector<8x64xf32>
    %823 = math.exp %822 : vector<8x64xf32>
    %cst_166 = arith.constant 1.000000e+00 : f32
    %824 = vector.broadcast %cst_166 : f32 to vector<8x64xf32>
    %825 = arith.addf %824, %823 : vector<8x64xf32>
    %826 = arith.divf %824, %825 : vector<8x64xf32>
    %827 = vector.extract_strided_slice %826 {offsets = [0, 0], sizes = [8, 32], strides = [1, 1]} : vector<8x64xf32> to vector<8x32xf32>
    %828 = vector.extract_strided_slice %826 {offsets = [0, 32], sizes = [8, 32], strides = [1, 1]} : vector<8x64xf32> to vector<8x32xf32>
    %829 = vector.extract_strided_slice %816 {offsets = [0, 64], sizes = [8, 32], strides = [1, 1]} : vector<8x96xf32> to vector<8x32xf32>
    %830 = vector.broadcast %807 : vector<1x32xf32> to vector<8x32xf32>
    %831 = arith.addf %829, %830 : vector<8x32xf32>
    %832 = vector.extract_strided_slice %813 {offsets = [0, 64], sizes = [8, 32], strides = [1, 1]} : vector<8x96xf32> to vector<8x32xf32>
    %833 = vector.broadcast %809 : vector<1x32xf32> to vector<8x32xf32>
    %834 = arith.addf %832, %833 : vector<8x32xf32>
    %835 = arith.mulf %827, %834 : vector<8x32xf32>
    %836 = arith.addf %831, %835 : vector<8x32xf32>
    %837 = math.tanh %836 : vector<8x32xf32>
    %cst_167 = arith.constant 1.000000e+00 : f32
    %838 = vector.broadcast %cst_167 : f32 to vector<8x32xf32>
    %839 = arith.subf %838, %828 : vector<8x32xf32>
    %840 = arith.mulf %839, %837 : vector<8x32xf32>
    %841 = arith.mulf %828, %799 : vector<8x32xf32>
    %842 = arith.addf %840, %841 : vector<8x32xf32>
    %843 = vector.extract_strided_slice %811 {offsets = [0, 1], sizes = [8, 1], strides = [1, 1]} : vector<8x8xf32> to vector<8x1xf32>
    %cst_168 = arith.constant dense<0.000000e+00> : vector<8x96xf32>
    %844 = tpu.matmul %842, %801, %cst_168 {dimension_numbers = #tpu.dot_dimension_numbers<[1], [0], [0], [1], [0, 0, 1, 1], [], []>} : vector<8x32xf32>, vector<32x96xf32>, vector<8x96xf32> -> vector<8x96xf32>
    %845 = vector.broadcast %843 : vector<8x1xf32> to vector<8x96xf32>
    %846 = vector.broadcast %803 : vector<1x96xf32> to vector<8x96xf32>
    %847 = arith.mulf %845, %846 : vector<8x96xf32>
    %848 = vector.extract_strided_slice %847 {offsets = [0, 0], sizes = [8, 64], strides = [1, 1]} : vector<8x96xf32> to vector<8x64xf32>
    %849 = vector.extract_strided_slice %844 {offsets = [0, 0], sizes = [8, 64], strides = [1, 1]} : vector<8x96xf32> to vector<8x64xf32>
    %850 = arith.addf %848, %849 : vector<8x64xf32>
    %851 = vector.broadcast %805 : vector<1x64xf32> to vector<8x64xf32>
    %852 = arith.addf %850, %851 : vector<8x64xf32>
    %853 = arith.negf %852 : vector<8x64xf32>
    %854 = math.exp %853 : vector<8x64xf32>
    %cst_169 = arith.constant 1.000000e+00 : f32
    %855 = vector.broadcast %cst_169 : f32 to vector<8x64xf32>
    %856 = arith.addf %855, %854 : vector<8x64xf32>
    %857 = arith.divf %855, %856 : vector<8x64xf32>
    %858 = vector.extract_strided_slice %857 {offsets = [0, 0], sizes = [8, 32], strides = [1, 1]} : vector<8x64xf32> to vector<8x32xf32>
    %859 = vector.extract_strided_slice %857 {offsets = [0, 32], sizes = [8, 32], strides = [1, 1]} : vector<8x64xf32> to vector<8x32xf32>
    %860 = vector.extract_strided_slice %847 {offsets = [0, 64], sizes = [8, 32], strides = [1, 1]} : vector<8x96xf32> to vector<8x32xf32>
    %861 = vector.broadcast %807 : vector<1x32xf32> to vector<8x32xf32>
    %862 = arith.addf %860, %861 : vector<8x32xf32>
    %863 = vector.extract_strided_slice %844 {offsets = [0, 64], sizes = [8, 32], strides = [1, 1]} : vector<8x96xf32> to vector<8x32xf32>
    %864 = vector.broadcast %809 : vector<1x32xf32> to vector<8x32xf32>
    %865 = arith.addf %863, %864 : vector<8x32xf32>
    %866 = arith.mulf %858, %865 : vector<8x32xf32>
    %867 = arith.addf %862, %866 : vector<8x32xf32>
    %868 = math.tanh %867 : vector<8x32xf32>
    %cst_170 = arith.constant 1.000000e+00 : f32
    %869 = vector.broadcast %cst_170 : f32 to vector<8x32xf32>
    %870 = arith.subf %869, %859 : vector<8x32xf32>
    %871 = arith.mulf %870, %868 : vector<8x32xf32>
    %872 = arith.mulf %859, %842 : vector<8x32xf32>
    %873 = arith.addf %871, %872 : vector<8x32xf32>
    %874 = vector.extract_strided_slice %811 {offsets = [0, 2], sizes = [8, 1], strides = [1, 1]} : vector<8x8xf32> to vector<8x1xf32>
    %cst_171 = arith.constant dense<0.000000e+00> : vector<8x96xf32>
    %875 = tpu.matmul %873, %801, %cst_171 {dimension_numbers = #tpu.dot_dimension_numbers<[1], [0], [0], [1], [0, 0, 1, 1], [], []>} : vector<8x32xf32>, vector<32x96xf32>, vector<8x96xf32> -> vector<8x96xf32>
    %876 = vector.broadcast %874 : vector<8x1xf32> to vector<8x96xf32>
    %877 = vector.broadcast %803 : vector<1x96xf32> to vector<8x96xf32>
    %878 = arith.mulf %876, %877 : vector<8x96xf32>
    %879 = vector.extract_strided_slice %878 {offsets = [0, 0], sizes = [8, 64], strides = [1, 1]} : vector<8x96xf32> to vector<8x64xf32>
    %880 = vector.extract_strided_slice %875 {offsets = [0, 0], sizes = [8, 64], strides = [1, 1]} : vector<8x96xf32> to vector<8x64xf32>
    %881 = arith.addf %879, %880 : vector<8x64xf32>
    %882 = vector.broadcast %805 : vector<1x64xf32> to vector<8x64xf32>
    %883 = arith.addf %881, %882 : vector<8x64xf32>
    %884 = arith.negf %883 : vector<8x64xf32>
    %885 = math.exp %884 : vector<8x64xf32>
    %cst_172 = arith.constant 1.000000e+00 : f32
    %886 = vector.broadcast %cst_172 : f32 to vector<8x64xf32>
    %887 = arith.addf %886, %885 : vector<8x64xf32>
    %888 = arith.divf %886, %887 : vector<8x64xf32>
    %889 = vector.extract_strided_slice %888 {offsets = [0, 0], sizes = [8, 32], strides = [1, 1]} : vector<8x64xf32> to vector<8x32xf32>
    %890 = vector.extract_strided_slice %888 {offsets = [0, 32], sizes = [8, 32], strides = [1, 1]} : vector<8x64xf32> to vector<8x32xf32>
    %891 = vector.extract_strided_slice %878 {offsets = [0, 64], sizes = [8, 32], strides = [1, 1]} : vector<8x96xf32> to vector<8x32xf32>
    %892 = vector.broadcast %807 : vector<1x32xf32> to vector<8x32xf32>
    %893 = arith.addf %891, %892 : vector<8x32xf32>
    %894 = vector.extract_strided_slice %875 {offsets = [0, 64], sizes = [8, 32], strides = [1, 1]} : vector<8x96xf32> to vector<8x32xf32>
    %895 = vector.broadcast %809 : vector<1x32xf32> to vector<8x32xf32>
    %896 = arith.addf %894, %895 : vector<8x32xf32>
    %897 = arith.mulf %889, %896 : vector<8x32xf32>
    %898 = arith.addf %893, %897 : vector<8x32xf32>
    %899 = math.tanh %898 : vector<8x32xf32>
    %cst_173 = arith.constant 1.000000e+00 : f32
    %900 = vector.broadcast %cst_173 : f32 to vector<8x32xf32>
    %901 = arith.subf %900, %890 : vector<8x32xf32>
    %902 = arith.mulf %901, %899 : vector<8x32xf32>
    %903 = arith.mulf %890, %873 : vector<8x32xf32>
    %904 = arith.addf %902, %903 : vector<8x32xf32>
    %905 = vector.extract_strided_slice %811 {offsets = [0, 3], sizes = [8, 1], strides = [1, 1]} : vector<8x8xf32> to vector<8x1xf32>
    %cst_174 = arith.constant dense<0.000000e+00> : vector<8x96xf32>
    %906 = tpu.matmul %904, %801, %cst_174 {dimension_numbers = #tpu.dot_dimension_numbers<[1], [0], [0], [1], [0, 0, 1, 1], [], []>} : vector<8x32xf32>, vector<32x96xf32>, vector<8x96xf32> -> vector<8x96xf32>
    %907 = vector.broadcast %905 : vector<8x1xf32> to vector<8x96xf32>
    %908 = vector.broadcast %803 : vector<1x96xf32> to vector<8x96xf32>
    %909 = arith.mulf %907, %908 : vector<8x96xf32>
    %910 = vector.extract_strided_slice %909 {offsets = [0, 0], sizes = [8, 64], strides = [1, 1]} : vector<8x96xf32> to vector<8x64xf32>
    %911 = vector.extract_strided_slice %906 {offsets = [0, 0], sizes = [8, 64], strides = [1, 1]} : vector<8x96xf32> to vector<8x64xf32>
    %912 = arith.addf %910, %911 : vector<8x64xf32>
    %913 = vector.broadcast %805 : vector<1x64xf32> to vector<8x64xf32>
    %914 = arith.addf %912, %913 : vector<8x64xf32>
    %915 = arith.negf %914 : vector<8x64xf32>
    %916 = math.exp %915 : vector<8x64xf32>
    %cst_175 = arith.constant 1.000000e+00 : f32
    %917 = vector.broadcast %cst_175 : f32 to vector<8x64xf32>
    %918 = arith.addf %917, %916 : vector<8x64xf32>
    %919 = arith.divf %917, %918 : vector<8x64xf32>
    %920 = vector.extract_strided_slice %919 {offsets = [0, 0], sizes = [8, 32], strides = [1, 1]} : vector<8x64xf32> to vector<8x32xf32>
    %921 = vector.extract_strided_slice %919 {offsets = [0, 32], sizes = [8, 32], strides = [1, 1]} : vector<8x64xf32> to vector<8x32xf32>
    %922 = vector.extract_strided_slice %909 {offsets = [0, 64], sizes = [8, 32], strides = [1, 1]} : vector<8x96xf32> to vector<8x32xf32>
    %923 = vector.broadcast %807 : vector<1x32xf32> to vector<8x32xf32>
    %924 = arith.addf %922, %923 : vector<8x32xf32>
    %925 = vector.extract_strided_slice %906 {offsets = [0, 64], sizes = [8, 32], strides = [1, 1]} : vector<8x96xf32> to vector<8x32xf32>
    %926 = vector.broadcast %809 : vector<1x32xf32> to vector<8x32xf32>
    %927 = arith.addf %925, %926 : vector<8x32xf32>
    %928 = arith.mulf %920, %927 : vector<8x32xf32>
    %929 = arith.addf %924, %928 : vector<8x32xf32>
    %930 = math.tanh %929 : vector<8x32xf32>
    %cst_176 = arith.constant 1.000000e+00 : f32
    %931 = vector.broadcast %cst_176 : f32 to vector<8x32xf32>
    %932 = arith.subf %931, %921 : vector<8x32xf32>
    %933 = arith.mulf %932, %930 : vector<8x32xf32>
    %934 = arith.mulf %921, %904 : vector<8x32xf32>
    %935 = arith.addf %933, %934 : vector<8x32xf32>
    %936 = vector.extract_strided_slice %811 {offsets = [0, 4], sizes = [8, 1], strides = [1, 1]} : vector<8x8xf32> to vector<8x1xf32>
    %cst_177 = arith.constant dense<0.000000e+00> : vector<8x96xf32>
    %937 = tpu.matmul %935, %801, %cst_177 {dimension_numbers = #tpu.dot_dimension_numbers<[1], [0], [0], [1], [0, 0, 1, 1], [], []>} : vector<8x32xf32>, vector<32x96xf32>, vector<8x96xf32> -> vector<8x96xf32>
    %938 = vector.broadcast %936 : vector<8x1xf32> to vector<8x96xf32>
    %939 = vector.broadcast %803 : vector<1x96xf32> to vector<8x96xf32>
    %940 = arith.mulf %938, %939 : vector<8x96xf32>
    %941 = vector.extract_strided_slice %940 {offsets = [0, 0], sizes = [8, 64], strides = [1, 1]} : vector<8x96xf32> to vector<8x64xf32>
    %942 = vector.extract_strided_slice %937 {offsets = [0, 0], sizes = [8, 64], strides = [1, 1]} : vector<8x96xf32> to vector<8x64xf32>
    %943 = arith.addf %941, %942 : vector<8x64xf32>
    %944 = vector.broadcast %805 : vector<1x64xf32> to vector<8x64xf32>
    %945 = arith.addf %943, %944 : vector<8x64xf32>
    %946 = arith.negf %945 : vector<8x64xf32>
    %947 = math.exp %946 : vector<8x64xf32>
    %cst_178 = arith.constant 1.000000e+00 : f32
    %948 = vector.broadcast %cst_178 : f32 to vector<8x64xf32>
    %949 = arith.addf %948, %947 : vector<8x64xf32>
    %950 = arith.divf %948, %949 : vector<8x64xf32>
    %951 = vector.extract_strided_slice %950 {offsets = [0, 0], sizes = [8, 32], strides = [1, 1]} : vector<8x64xf32> to vector<8x32xf32>
    %952 = vector.extract_strided_slice %950 {offsets = [0, 32], sizes = [8, 32], strides = [1, 1]} : vector<8x64xf32> to vector<8x32xf32>
    %953 = vector.extract_strided_slice %940 {offsets = [0, 64], sizes = [8, 32], strides = [1, 1]} : vector<8x96xf32> to vector<8x32xf32>
    %954 = vector.broadcast %807 : vector<1x32xf32> to vector<8x32xf32>
    %955 = arith.addf %953, %954 : vector<8x32xf32>
    %956 = vector.extract_strided_slice %937 {offsets = [0, 64], sizes = [8, 32], strides = [1, 1]} : vector<8x96xf32> to vector<8x32xf32>
    %957 = vector.broadcast %809 : vector<1x32xf32> to vector<8x32xf32>
    %958 = arith.addf %956, %957 : vector<8x32xf32>
    %959 = arith.mulf %951, %958 : vector<8x32xf32>
    %960 = arith.addf %955, %959 : vector<8x32xf32>
    %961 = math.tanh %960 : vector<8x32xf32>
    %cst_179 = arith.constant 1.000000e+00 : f32
    %962 = vector.broadcast %cst_179 : f32 to vector<8x32xf32>
    %963 = arith.subf %962, %952 : vector<8x32xf32>
    %964 = arith.mulf %963, %961 : vector<8x32xf32>
    %965 = arith.mulf %952, %935 : vector<8x32xf32>
    %966 = arith.addf %964, %965 : vector<8x32xf32>
    %967 = vector.extract_strided_slice %811 {offsets = [0, 5], sizes = [8, 1], strides = [1, 1]} : vector<8x8xf32> to vector<8x1xf32>
    %cst_180 = arith.constant dense<0.000000e+00> : vector<8x96xf32>
    %968 = tpu.matmul %966, %801, %cst_180 {dimension_numbers = #tpu.dot_dimension_numbers<[1], [0], [0], [1], [0, 0, 1, 1], [], []>} : vector<8x32xf32>, vector<32x96xf32>, vector<8x96xf32> -> vector<8x96xf32>
    %969 = vector.broadcast %967 : vector<8x1xf32> to vector<8x96xf32>
    %970 = vector.broadcast %803 : vector<1x96xf32> to vector<8x96xf32>
    %971 = arith.mulf %969, %970 : vector<8x96xf32>
    %972 = vector.extract_strided_slice %971 {offsets = [0, 0], sizes = [8, 64], strides = [1, 1]} : vector<8x96xf32> to vector<8x64xf32>
    %973 = vector.extract_strided_slice %968 {offsets = [0, 0], sizes = [8, 64], strides = [1, 1]} : vector<8x96xf32> to vector<8x64xf32>
    %974 = arith.addf %972, %973 : vector<8x64xf32>
    %975 = vector.broadcast %805 : vector<1x64xf32> to vector<8x64xf32>
    %976 = arith.addf %974, %975 : vector<8x64xf32>
    %977 = arith.negf %976 : vector<8x64xf32>
    %978 = math.exp %977 : vector<8x64xf32>
    %cst_181 = arith.constant 1.000000e+00 : f32
    %979 = vector.broadcast %cst_181 : f32 to vector<8x64xf32>
    %980 = arith.addf %979, %978 : vector<8x64xf32>
    %981 = arith.divf %979, %980 : vector<8x64xf32>
    %982 = vector.extract_strided_slice %981 {offsets = [0, 0], sizes = [8, 32], strides = [1, 1]} : vector<8x64xf32> to vector<8x32xf32>
    %983 = vector.extract_strided_slice %981 {offsets = [0, 32], sizes = [8, 32], strides = [1, 1]} : vector<8x64xf32> to vector<8x32xf32>
    %984 = vector.extract_strided_slice %971 {offsets = [0, 64], sizes = [8, 32], strides = [1, 1]} : vector<8x96xf32> to vector<8x32xf32>
    %985 = vector.broadcast %807 : vector<1x32xf32> to vector<8x32xf32>
    %986 = arith.addf %984, %985 : vector<8x32xf32>
    %987 = vector.extract_strided_slice %968 {offsets = [0, 64], sizes = [8, 32], strides = [1, 1]} : vector<8x96xf32> to vector<8x32xf32>
    %988 = vector.broadcast %809 : vector<1x32xf32> to vector<8x32xf32>
    %989 = arith.addf %987, %988 : vector<8x32xf32>
    %990 = arith.mulf %982, %989 : vector<8x32xf32>
    %991 = arith.addf %986, %990 : vector<8x32xf32>
    %992 = math.tanh %991 : vector<8x32xf32>
    %cst_182 = arith.constant 1.000000e+00 : f32
    %993 = vector.broadcast %cst_182 : f32 to vector<8x32xf32>
    %994 = arith.subf %993, %983 : vector<8x32xf32>
    %995 = arith.mulf %994, %992 : vector<8x32xf32>
    %996 = arith.mulf %983, %966 : vector<8x32xf32>
    %997 = arith.addf %995, %996 : vector<8x32xf32>
    %998 = vector.extract_strided_slice %811 {offsets = [0, 6], sizes = [8, 1], strides = [1, 1]} : vector<8x8xf32> to vector<8x1xf32>
    %cst_183 = arith.constant dense<0.000000e+00> : vector<8x96xf32>
    %999 = tpu.matmul %997, %801, %cst_183 {dimension_numbers = #tpu.dot_dimension_numbers<[1], [0], [0], [1], [0, 0, 1, 1], [], []>} : vector<8x32xf32>, vector<32x96xf32>, vector<8x96xf32> -> vector<8x96xf32>
    %1000 = vector.broadcast %998 : vector<8x1xf32> to vector<8x96xf32>
    %1001 = vector.broadcast %803 : vector<1x96xf32> to vector<8x96xf32>
    %1002 = arith.mulf %1000, %1001 : vector<8x96xf32>
    %1003 = vector.extract_strided_slice %1002 {offsets = [0, 0], sizes = [8, 64], strides = [1, 1]} : vector<8x96xf32> to vector<8x64xf32>
    %1004 = vector.extract_strided_slice %999 {offsets = [0, 0], sizes = [8, 64], strides = [1, 1]} : vector<8x96xf32> to vector<8x64xf32>
    %1005 = arith.addf %1003, %1004 : vector<8x64xf32>
    %1006 = vector.broadcast %805 : vector<1x64xf32> to vector<8x64xf32>
    %1007 = arith.addf %1005, %1006 : vector<8x64xf32>
    %1008 = arith.negf %1007 : vector<8x64xf32>
    %1009 = math.exp %1008 : vector<8x64xf32>
    %cst_184 = arith.constant 1.000000e+00 : f32
    %1010 = vector.broadcast %cst_184 : f32 to vector<8x64xf32>
    %1011 = arith.addf %1010, %1009 : vector<8x64xf32>
    %1012 = arith.divf %1010, %1011 : vector<8x64xf32>
    %1013 = vector.extract_strided_slice %1012 {offsets = [0, 0], sizes = [8, 32], strides = [1, 1]} : vector<8x64xf32> to vector<8x32xf32>
    %1014 = vector.extract_strided_slice %1012 {offsets = [0, 32], sizes = [8, 32], strides = [1, 1]} : vector<8x64xf32> to vector<8x32xf32>
    %1015 = vector.extract_strided_slice %1002 {offsets = [0, 64], sizes = [8, 32], strides = [1, 1]} : vector<8x96xf32> to vector<8x32xf32>
    %1016 = vector.broadcast %807 : vector<1x32xf32> to vector<8x32xf32>
    %1017 = arith.addf %1015, %1016 : vector<8x32xf32>
    %1018 = vector.extract_strided_slice %999 {offsets = [0, 64], sizes = [8, 32], strides = [1, 1]} : vector<8x96xf32> to vector<8x32xf32>
    %1019 = vector.broadcast %809 : vector<1x32xf32> to vector<8x32xf32>
    %1020 = arith.addf %1018, %1019 : vector<8x32xf32>
    %1021 = arith.mulf %1013, %1020 : vector<8x32xf32>
    %1022 = arith.addf %1017, %1021 : vector<8x32xf32>
    %1023 = math.tanh %1022 : vector<8x32xf32>
    %cst_185 = arith.constant 1.000000e+00 : f32
    %1024 = vector.broadcast %cst_185 : f32 to vector<8x32xf32>
    %1025 = arith.subf %1024, %1014 : vector<8x32xf32>
    %1026 = arith.mulf %1025, %1023 : vector<8x32xf32>
    %1027 = arith.mulf %1014, %997 : vector<8x32xf32>
    %1028 = arith.addf %1026, %1027 : vector<8x32xf32>
    %1029 = vector.extract_strided_slice %811 {offsets = [0, 7], sizes = [8, 1], strides = [1, 1]} : vector<8x8xf32> to vector<8x1xf32>
    %cst_186 = arith.constant dense<0.000000e+00> : vector<8x96xf32>
    %1030 = tpu.matmul %1028, %801, %cst_186 {dimension_numbers = #tpu.dot_dimension_numbers<[1], [0], [0], [1], [0, 0, 1, 1], [], []>} : vector<8x32xf32>, vector<32x96xf32>, vector<8x96xf32> -> vector<8x96xf32>
    %1031 = vector.broadcast %1029 : vector<8x1xf32> to vector<8x96xf32>
    %1032 = vector.broadcast %803 : vector<1x96xf32> to vector<8x96xf32>
    %1033 = arith.mulf %1031, %1032 : vector<8x96xf32>
    %1034 = vector.extract_strided_slice %1033 {offsets = [0, 0], sizes = [8, 64], strides = [1, 1]} : vector<8x96xf32> to vector<8x64xf32>
    %1035 = vector.extract_strided_slice %1030 {offsets = [0, 0], sizes = [8, 64], strides = [1, 1]} : vector<8x96xf32> to vector<8x64xf32>
    %1036 = arith.addf %1034, %1035 : vector<8x64xf32>
    %1037 = vector.broadcast %805 : vector<1x64xf32> to vector<8x64xf32>
    %1038 = arith.addf %1036, %1037 : vector<8x64xf32>
    %1039 = arith.negf %1038 : vector<8x64xf32>
    %1040 = math.exp %1039 : vector<8x64xf32>
    %cst_187 = arith.constant 1.000000e+00 : f32
    %1041 = vector.broadcast %cst_187 : f32 to vector<8x64xf32>
    %1042 = arith.addf %1041, %1040 : vector<8x64xf32>
    %1043 = arith.divf %1041, %1042 : vector<8x64xf32>
    %1044 = vector.extract_strided_slice %1043 {offsets = [0, 0], sizes = [8, 32], strides = [1, 1]} : vector<8x64xf32> to vector<8x32xf32>
    %1045 = vector.extract_strided_slice %1043 {offsets = [0, 32], sizes = [8, 32], strides = [1, 1]} : vector<8x64xf32> to vector<8x32xf32>
    %1046 = vector.extract_strided_slice %1033 {offsets = [0, 64], sizes = [8, 32], strides = [1, 1]} : vector<8x96xf32> to vector<8x32xf32>
    %1047 = vector.broadcast %807 : vector<1x32xf32> to vector<8x32xf32>
    %1048 = arith.addf %1046, %1047 : vector<8x32xf32>
    %1049 = vector.extract_strided_slice %1030 {offsets = [0, 64], sizes = [8, 32], strides = [1, 1]} : vector<8x96xf32> to vector<8x32xf32>
    %1050 = vector.broadcast %809 : vector<1x32xf32> to vector<8x32xf32>
    %1051 = arith.addf %1049, %1050 : vector<8x32xf32>
    %1052 = arith.mulf %1044, %1051 : vector<8x32xf32>
    %1053 = arith.addf %1048, %1052 : vector<8x32xf32>
    %1054 = math.tanh %1053 : vector<8x32xf32>
    %cst_188 = arith.constant 1.000000e+00 : f32
    %1055 = vector.broadcast %cst_188 : f32 to vector<8x32xf32>
    %1056 = arith.subf %1055, %1045 : vector<8x32xf32>
    %1057 = arith.mulf %1056, %1054 : vector<8x32xf32>
    %1058 = arith.mulf %1045, %1028 : vector<8x32xf32>
    %1059 = arith.addf %1057, %1058 : vector<8x32xf32>
    %c3_189 = arith.constant 3 : index
    %c0_190 = arith.constant 0 : index
    %c0_191 = arith.constant 0 : index
    %1060 = vector.load %arg17[%c3_189, %c0_190, %c0_191] : memref<4x8x32xf32, #tpu.memory_space<vmem>>, vector<1x8x32xf32>
    %1061 = vector.shape_cast %1060 : vector<1x8x32xf32> to vector<8x32xf32>
    %1062 = vector.shape_cast %1059 : vector<8x32xf32> to vector<1x8x32xf32>
    tpu.vector_store %arg17[%c3_189, %c0_190, %c0_191], %1062 {strides = array<i32>} : memref<4x8x32xf32, #tpu.memory_space<vmem>>, vector<1x8x32xf32>,
    %c0_i32_192 = arith.constant 0 : i32
    %1063 = arith.cmpi eq, %arg1, %c0_i32_192 : i32
    %1064 = arith.extui %1063 : i1 to i32
    %c0_i32_193 = arith.constant 0 : i32
    %1065 = arith.cmpi ne, %1064, %c0_i32_193 : i32
    scf.if %1065 {
      %c0_194 = arith.constant 0 : index
      %c0_195 = arith.constant 0 : index
      %1066 = vector.load %arg3[%c0_194, %c0_195] : memref<8x16xf32, #tpu.memory_space<vmem>>, vector<8x16xf32>
      %c0_196 = arith.constant 0 : index
      %c0_197 = arith.constant 0 : index
      %c0_198 = arith.constant 0 : index
      %1067 = vector.load %arg17[%c0_196, %c0_197, %c0_198] : memref<4x8x32xf32, #tpu.memory_space<vmem>>, vector<1x8x32xf32>
      %1068 = vector.shape_cast %1067 : vector<1x8x32xf32> to vector<8x32xf32>
      %c1_199 = arith.constant 1 : index
      %c0_200 = arith.constant 0 : index
      %c0_201 = arith.constant 0 : index
      %1069 = vector.load %arg17[%c1_199, %c0_200, %c0_201] : memref<4x8x32xf32, #tpu.memory_space<vmem>>, vector<1x8x32xf32>
      %1070 = vector.shape_cast %1069 : vector<1x8x32xf32> to vector<8x32xf32>
      %c2_202 = arith.constant 2 : index
      %c0_203 = arith.constant 0 : index
      %c0_204 = arith.constant 0 : index
      %1071 = vector.load %arg17[%c2_202, %c0_203, %c0_204] : memref<4x8x32xf32, #tpu.memory_space<vmem>>, vector<1x8x32xf32>
      %1072 = vector.shape_cast %1071 : vector<1x8x32xf32> to vector<8x32xf32>
      %c3_205 = arith.constant 3 : index
      %c0_206 = arith.constant 0 : index
      %c0_207 = arith.constant 0 : index
      %1073 = vector.load %arg17[%c3_205, %c0_206, %c0_207] : memref<4x8x32xf32, #tpu.memory_space<vmem>>, vector<1x8x32xf32>
      %1074 = vector.shape_cast %1073 : vector<1x8x32xf32> to vector<8x32xf32>
      %1075 = tpu.concatenate %1068, %1070, %1072, %1074, %1066 in 1 : vector<8x32xf32>, vector<8x32xf32>, vector<8x32xf32>, vector<8x32xf32>, vector<8x16xf32> -> vector<8x144xf32>
      %c0_208 = arith.constant 0 : index
      %c0_209 = arith.constant 0 : index
      %1076 = vector.load %arg16[%c0_208, %c0_209] : memref<8x144xf32, #tpu.memory_space<vmem>>, vector<8x144xf32>
      tpu.vector_store %arg16[%c0_208, %c0_209], %1075 {strides = array<i32>} : memref<8x144xf32, #tpu.memory_space<vmem>>, vector<8x144xf32>,
      %c0_210 = arith.constant 0 : index
      %c0_211 = arith.constant 0 : index
      %1077 = vector.load %arg9[%c0_210, %c0_211] : memref<144x64xf32, #tpu.memory_space<vmem>>, vector<144x64xf32>
      %cst_212 = arith.constant dense<0.000000e+00> : vector<8x64xf32>
      %1078 = tpu.matmul %1075, %1077, %cst_212 {dimension_numbers = #tpu.dot_dimension_numbers<[1], [0], [0], [1], [0, 0, 1, 1], [], []>} : vector<8x144xf32>, vector<144x64xf32>, vector<8x64xf32> -> vector<8x64xf32>
      %c0_213 = arith.constant 0 : index
      %c0_214 = arith.constant 0 : index
      %1079 = vector.load %arg10[%c0_213, %c0_214] : memref<1x64xf32, #tpu.memory_space<vmem>>, vector<1x64xf32>
      %1080 = vector.broadcast %1079 : vector<1x64xf32> to vector<8x64xf32>
      %1081 = arith.addf %1078, %1080 : vector<8x64xf32>
      %cst_215 = arith.constant 0.000000e+00 : f32
      %1082 = vector.broadcast %cst_215 : f32 to vector<8x64xf32>
      %1083 = arith.maximumf %1081, %1082 : vector<8x64xf32>
      %c0_216 = arith.constant 0 : index
      %c0_217 = arith.constant 0 : index
      %1084 = vector.load %arg11[%c0_216, %c0_217] : memref<64x32xf32, #tpu.memory_space<vmem>>, vector<64x32xf32>
      %cst_218 = arith.constant dense<0.000000e+00> : vector<8x32xf32>
      %1085 = tpu.matmul %1083, %1084, %cst_218 {dimension_numbers = #tpu.dot_dimension_numbers<[1], [0], [0], [1], [0, 0, 1, 1], [], []>} : vector<8x64xf32>, vector<64x32xf32>, vector<8x32xf32> -> vector<8x32xf32>
      %c0_219 = arith.constant 0 : index
      %c0_220 = arith.constant 0 : index
      %1086 = vector.load %arg12[%c0_219, %c0_220] : memref<1x32xf32, #tpu.memory_space<vmem>>, vector<1x32xf32>
      %1087 = vector.broadcast %1086 : vector<1x32xf32> to vector<8x32xf32>
      %1088 = arith.addf %1085, %1087 : vector<8x32xf32>
      %cst_221 = arith.constant 0.000000e+00 : f32
      %1089 = vector.broadcast %cst_221 : f32 to vector<8x32xf32>
      %1090 = arith.maximumf %1088, %1089 : vector<8x32xf32>
      %c0_222 = arith.constant 0 : index
      %c0_223 = arith.constant 0 : index
      %1091 = vector.load %arg13[%c0_222, %c0_223] : memref<32x2xf32, #tpu.memory_space<vmem>>, vector<32x2xf32>
      %cst_224 = arith.constant dense<0.000000e+00> : vector<8x2xf32>
      %1092 = tpu.matmul %1090, %1091, %cst_224 {dimension_numbers = #tpu.dot_dimension_numbers<[1], [0], [0], [1], [0, 0, 1, 1], [], []>} : vector<8x32xf32>, vector<32x2xf32>, vector<8x2xf32> -> vector<8x2xf32>
      %c0_225 = arith.constant 0 : index
      %c0_226 = arith.constant 0 : index
      %1093 = vector.load %arg14[%c0_225, %c0_226] : memref<1x2xf32, #tpu.memory_space<vmem>>, vector<1x2xf32>
      %1094 = vector.broadcast %1093 : vector<1x2xf32> to vector<8x2xf32>
      %1095 = arith.addf %1092, %1094 : vector<8x2xf32>
      %cst_227 = arith.constant dense<0xFF800000> : vector<8xf32>
      %1096 = vector.multi_reduction <maximumf>, %1095, %cst_227 [1] : vector<8x2xf32> to vector<8xf32>
      %1097 = vector.shape_cast %1096 : vector<8xf32> to vector<8x1xf32>
      %1098 = vector.broadcast %1097 : vector<8x1xf32> to vector<8x2xf32>
      %1099 = arith.subf %1095, %1098 : vector<8x2xf32>
      %1100 = math.exp %1099 : vector<8x2xf32>
      %cst_228 = arith.constant dense<0.000000e+00> : vector<8xf32>
      %1101 = vector.multi_reduction <add>, %1100, %cst_228 [1] : vector<8x2xf32> to vector<8xf32>
      %1102 = vector.shape_cast %1101 : vector<8xf32> to vector<8x1xf32>
      %1103 = vector.broadcast %1102 : vector<8x1xf32> to vector<8x2xf32>
      %1104 = arith.divf %1100, %1103 : vector<8x2xf32>
      %c0_229 = arith.constant 0 : index
      %c0_230 = arith.constant 0 : index
      %1105 = vector.load %arg15[%c0_229, %c0_230] : memref<8x2xf32, #tpu.memory_space<vmem>>, vector<8x2xf32>
      tpu.vector_store %arg15[%c0_229, %c0_230], %1104 {strides = array<i32>} : memref<8x2xf32, #tpu.memory_space<vmem>>, vector<8x2xf32>,
    } else {
    }
    return
  }
  func.func @transform_0(%arg0: i32, %arg1: i32) -> (i32, i32, i32, i32) {
    %c0_i32 = arith.constant 0 : i32
    %c0_i32_0 = arith.constant 0 : i32
    %c0_i32_1 = arith.constant 0 : i32
    return %arg1, %c0_i32, %arg0, %c0_i32_0 : i32, i32, i32, i32
  }
  func.func @transform_1(%arg0: i32, %arg1: i32) -> (i32, i32) {
    %c0_i32 = arith.constant 0 : i32
    %c0_i32_0 = arith.constant 0 : i32
    return %arg0, %c0_i32 : i32, i32
  }
  func.func @transform_2(%arg0: i32, %arg1: i32) -> (i32, i32, i32) {
    %c0_i32 = arith.constant 0 : i32
    %c0_i32_0 = arith.constant 0 : i32
    %c0_i32_1 = arith.constant 0 : i32
    %c0_i32_2 = arith.constant 0 : i32
    return %c0_i32, %c0_i32_0, %c0_i32_1 : i32, i32, i32
  }
  func.func @transform_3(%arg0: i32, %arg1: i32) -> (i32, i32, i32) {
    %c0_i32 = arith.constant 0 : i32
    %c0_i32_0 = arith.constant 0 : i32
    %c0_i32_1 = arith.constant 0 : i32
    %c0_i32_2 = arith.constant 0 : i32
    return %c0_i32, %c0_i32_0, %c0_i32_1 : i32, i32, i32
  }
  func.func @transform_4(%arg0: i32, %arg1: i32) -> (i32, i32, i32) {
    %c0_i32 = arith.constant 0 : i32
    %c0_i32_0 = arith.constant 0 : i32
    %c0_i32_1 = arith.constant 0 : i32
    %c0_i32_2 = arith.constant 0 : i32
    return %c0_i32, %c0_i32_0, %c0_i32_1 : i32, i32, i32
  }
  func.func @transform_5(%arg0: i32, %arg1: i32) -> (i32, i32, i32) {
    %c0_i32 = arith.constant 0 : i32
    %c0_i32_0 = arith.constant 0 : i32
    %c0_i32_1 = arith.constant 0 : i32
    %c0_i32_2 = arith.constant 0 : i32
    return %c0_i32, %c0_i32_0, %c0_i32_1 : i32, i32, i32
  }
  func.func @transform_6(%arg0: i32, %arg1: i32) -> (i32, i32, i32) {
    %c0_i32 = arith.constant 0 : i32
    %c0_i32_0 = arith.constant 0 : i32
    %c0_i32_1 = arith.constant 0 : i32
    %c0_i32_2 = arith.constant 0 : i32
    return %c0_i32, %c0_i32_0, %c0_i32_1 : i32, i32, i32
  }
  func.func @transform_7(%arg0: i32, %arg1: i32) -> (i32, i32) {
    %c0_i32 = arith.constant 0 : i32
    %c0_i32_0 = arith.constant 0 : i32
    %c0_i32_1 = arith.constant 0 : i32
    return %c0_i32, %c0_i32_0 : i32, i32
  }
  func.func @transform_8(%arg0: i32, %arg1: i32) -> (i32, i32) {
    %c0_i32 = arith.constant 0 : i32
    %c0_i32_0 = arith.constant 0 : i32
    %c0_i32_1 = arith.constant 0 : i32
    return %c0_i32, %c0_i32_0 : i32, i32
  }
  func.func @transform_9(%arg0: i32, %arg1: i32) -> (i32, i32) {
    %c0_i32 = arith.constant 0 : i32
    %c0_i32_0 = arith.constant 0 : i32
    %c0_i32_1 = arith.constant 0 : i32
    return %c0_i32, %c0_i32_0 : i32, i32
  }
  func.func @transform_10(%arg0: i32, %arg1: i32) -> (i32, i32) {
    %c0_i32 = arith.constant 0 : i32
    %c0_i32_0 = arith.constant 0 : i32
    %c0_i32_1 = arith.constant 0 : i32
    return %c0_i32, %c0_i32_0 : i32, i32
  }
  func.func @transform_11(%arg0: i32, %arg1: i32) -> (i32, i32) {
    %c0_i32 = arith.constant 0 : i32
    %c0_i32_0 = arith.constant 0 : i32
    %c0_i32_1 = arith.constant 0 : i32
    return %c0_i32, %c0_i32_0 : i32, i32
  }
  func.func @transform_12(%arg0: i32, %arg1: i32) -> (i32, i32) {
    %c0_i32 = arith.constant 0 : i32
    %c0_i32_0 = arith.constant 0 : i32
    %c0_i32_1 = arith.constant 0 : i32
    return %c0_i32, %c0_i32_0 : i32, i32
  }
  func.func @transform_13(%arg0: i32, %arg1: i32) -> (i32, i32) {
    %c0_i32 = arith.constant 0 : i32
    %c0_i32_0 = arith.constant 0 : i32
    return %arg0, %c0_i32 : i32, i32
  }
  func.func @transform_14(%arg0: i32, %arg1: i32) -> (i32, i32) {
    %c0_i32 = arith.constant 0 : i32
    %c0_i32_0 = arith.constant 0 : i32
    return %arg0, %c0_i32 : i32, i32
  }
}

</mosaic_0001>

<llo_original>
// kernel: tpu_custom_call.1
$region0: #{tpu_custom_call.1}
  #allocation0 [shape = 'u32[]', space=smem, size = 0x4, offset = 0x4, fixed_abs, tag = 'smem constant byte address 0x4 - core index']
  #allocation1 [shape = 'u32[144,128]{1,0:T(1,128)}', space=vmem, size = 0x12000, scoped, tag = 'internal scratch']
  #allocation2 [shape = 'f32[4,8,32]{2,1,0:T(8,128)}', space=vmem, size = 0x4000, scoped, tag = 'scratch operand']
  %s0 = inlined_call_operand.vmem [shape: f32[1,4,8,8], index: 0, kind: input, shape index: {}]
  %s1 = inlined_call_operand.vmem [shape: f32[8,16], index: 1, kind: input, shape index: {}]
  %s2 = inlined_call_operand.vmem [shape: f32[4,1,96], index: 2, kind: input, shape index: {}]
  %s3 = inlined_call_operand.vmem [shape: f32[4,32,96], index: 3, kind: input, shape index: {}]
  %s4 = inlined_call_operand.vmem [shape: f32[4,1,64], index: 4, kind: input, shape index: {}]
  %s5 = inlined_call_operand.vmem [shape: f32[4,1,32], index: 5, kind: input, shape index: {}]
  %s6 = inlined_call_operand.vmem [shape: f32[4,1,32], index: 6, kind: input, shape index: {}]
  %s7 = inlined_call_operand.vmem [shape: f32[144,64], index: 7, kind: input, shape index: {}]
  %s8 = inlined_call_operand.vmem [shape: f32[1,64], index: 8, kind: input, shape index: {}]
  %s9 = inlined_call_operand.vmem [shape: f32[64,32], index: 9, kind: input, shape index: {}]
  %s10 = inlined_call_operand.vmem [shape: f32[1,32], index: 10, kind: input, shape index: {}]
  %s11 = inlined_call_operand.vmem [shape: f32[32,2], index: 11, kind: input, shape index: {}]
  %s12 = inlined_call_operand.vmem [shape: f32[1,2], index: 12, kind: input, shape index: {}]
  %s13 = inlined_call_operand.vmem [shape: f32[8,2], index: 13, kind: output, shape index: {0}]
  %s14 = inlined_call_operand.hbm [shape: f32[8,144], index: 14, kind: output, shape index: {1}]
  %15 = xla_tuple %s13, %s14
  %s16 = sld [smem:[#allocation0]]
  $region78: #{tpu_custom_call.1} parent=0
    _
  %s18 = ssub.s32 1, %s16
  %s19 = scalar_select 0, %s18, %s16
  $region1: #{tpu_custom_call.1} parent=0
    #allocation3 [shape = 'u8[8192]{0}', space=vmem, size = 0x2000, scoped, tag = 'output window, operand 1, single buffered']
    #allocation4 [shape = 's32[1]{0}', space=sflag, size = 0x4, scoped, tag = 'scoped memory for tpu_custom_call.1']
    %20 = vsyncpa [#allocation4], 0
    // Predicated region
    $region2: #{tpu_custom_call.1} parent=1 // pred_check
      _
    $region3: #{tpu_custom_call.1} parent=1 // pred_check_branch
      %22 = sbr.rel (0) target = $region5
    $region4: #{tpu_custom_call.1} parent=1 // pred_region
      _
    $region5: #{tpu_custom_call.1} parent=1 // pred_fallthru
      _
    // Predicated region
    $region6: #{tpu_custom_call.1} parent=1 // pred_check
      _
    $region7: #{tpu_custom_call.1} parent=1 // pred_check_branch
      %24 = sbr.rel (0) target = $region9
    $region8: #{tpu_custom_call.1} parent=1 // pred_region
      _
    $region9: #{tpu_custom_call.1} parent=1 // pred_fallthru
      _
    // Predicated region
    $region10: #{tpu_custom_call.1} parent=1 // pred_check
      _
    $region11: #{tpu_custom_call.1} parent=1 // pred_check_branch
      %26 = sbr.rel (0) target = $region13
    $region12: #{tpu_custom_call.1} parent=1 // pred_region
      _
    $region13: #{tpu_custom_call.1} parent=1 // pred_fallthru
      _
    // Predicated region
    $region14: #{tpu_custom_call.1} parent=1 // pred_check
      _
    $region15: #{tpu_custom_call.1} parent=1 // pred_check_branch
      %28 = sbr.rel (0) target = $region17
    $region16: #{tpu_custom_call.1} parent=1 // pred_region
      _
    $region17: #{tpu_custom_call.1} parent=1 // pred_fallthru
      _
    // Predicated region
    $region18: #{tpu_custom_call.1} parent=1 // pred_check
      _
    $region19: #{tpu_custom_call.1} parent=1 // pred_check_branch
      %30 = sbr.rel (0) target = $region21
    $region20: #{tpu_custom_call.1} parent=1 // pred_region
      _
    $region21: #{tpu_custom_call.1} parent=1 // pred_fallthru
      _
    // Predicated region
    $region22: #{tpu_custom_call.1} parent=1 // pred_check
      _
    $region23: #{tpu_custom_call.1} parent=1 // pred_check_branch
      %32 = sbr.rel (0) target = $region25
    $region24: #{tpu_custom_call.1} parent=1 // pred_region
      _
    $region25: #{tpu_custom_call.1} parent=1 // pred_fallthru
      _
    // Predicated region
    $region26: #{tpu_custom_call.1} parent=1 // pred_check
      _
    $region27: #{tpu_custom_call.1} parent=1 // pred_check_branch
      %34 = sbr.rel (0) target = $region29
    $region28: #{tpu_custom_call.1} parent=1 // pred_region
      _
    $region29: #{tpu_custom_call.1} parent=1 // pred_fallthru
      _
    // Predicated region
    $region30: #{tpu_custom_call.1} parent=1 // pred_check
      _
    $region31: #{tpu_custom_call.1} parent=1 // pred_check_branch
      %36 = sbr.rel (0) target = $region33
    $region32: #{tpu_custom_call.1} parent=1 // pred_region
      _
    $region33: #{tpu_custom_call.1} parent=1 // pred_fallthru
      _
    // Predicated region
    $region34: #{tpu_custom_call.1} parent=1 // pred_check
      _
    $region35: #{tpu_custom_call.1} parent=1 // pred_check_branch
      %38 = sbr.rel (0) target = $region37
    $region36: #{tpu_custom_call.1} parent=1 // pred_region
      _
    $region37: #{tpu_custom_call.1} parent=1 // pred_fallthru
      _
    // Predicated region
    $region38: #{tpu_custom_call.1} parent=1 // pred_check
      _
    $region39: #{tpu_custom_call.1} parent=1 // pred_check_branch
      %40 = sbr.rel (0) target = $region41
    $region40: #{tpu_custom_call.1} parent=1 // pred_region
      _
    $region41: #{tpu_custom_call.1} parent=1 // pred_fallthru
      _
    // Predicated region
    $region42: #{tpu_custom_call.1} parent=1 // pred_check
      _
    $region43: #{tpu_custom_call.1} parent=1 // pred_check_branch
      %42 = sbr.rel (0) target = $region45
    $region44: #{tpu_custom_call.1} parent=1 // pred_region
      _
    $region45: #{tpu_custom_call.1} parent=1 // pred_fallthru
      _
    // Predicated region
    $region46: #{tpu_custom_call.1} parent=1 // pred_check
      _
    $region47: #{tpu_custom_call.1} parent=1 // pred_check_branch
      %44 = sbr.rel (0) target = $region49
    $region48: #{tpu_custom_call.1} parent=1 // pred_region
      _
    $region49: #{tpu_custom_call.1} parent=1 // pred_fallthru
      _
    // Predicated region
    $region50: #{tpu_custom_call.1} parent=1 // pred_check
      _
    $region51: #{tpu_custom_call.1} parent=1 // pred_check_branch
      %46 = sbr.rel (0) target = $region53
    $region52: #{tpu_custom_call.1} parent=1 // pred_region
      _
    $region53: #{tpu_custom_call.1} parent=1 // pred_fallthru
      _
    %p47 = scmp.eq.s32.totalorder 0, 0
    // Predicated region
    $region54: #{tpu_custom_call.1} parent=1 // pred_check
      %p48 = pneg %p47
    $region55: #{tpu_custom_call.1} parent=1 // pred_check_branch
      %50 = sbr.rel (%p48) target = $region57
    $region56: #{tpu_custom_call.1} parent=1 // pred_region
      %vm51 = vcmask 261120
      %52 = vst.msk [vmem:[#allocation2] sm:$0xff] %vm51, 0.0
      %53 = vst.msk [vmem:[#allocation2 + $0x8] sm:$0xff] %vm51, 0.0
      %54 = vst.msk [vmem:[#allocation2 + $0x10] sm:$0xff] %vm51, 0.0
      %55 = vst.msk [vmem:[#allocation2 + $0x18] sm:$0xff] %vm51, 0.0
    $region57: #{tpu_custom_call.1} parent=1 // pred_fallthru
      _
    %v56 = vld [vmem:[#allocation2] sm:$0xff]
    %v57 = vld [vmem:[%s3] sm:$0xff]
    %v58 = vld [vmem:[%s3 + $0x8] sm:$0xff]
    %v59 = vld [vmem:[%s3 + $0x10] sm:$0xff]
    %v60 = vld [vmem:[%s3 + $0x18] sm:$0xff]
    %v61 = vld [vmem:[%s2] sm:$0x1]
    %v62 = vld [vmem:[%s4] sm:$0x1]
    %v63 = vld [vmem:[%s5] sm:$0x1]
    %v64 = vld [vmem:[%s6] sm:$0x1]
    %v65 = vld [vmem:[%s0] sm:$0xff]
    %vm66 = vcmask 261120
    %v68 = vsel %vm66, %v56, 0
    %70 = vmatprep.subr.mxu0 0.0
    %71 = vmatpush1.msra.mxu0 %v57
    %72 = vmatprep.subr.mxu0 0.0
    %73 = vmatpush1.msra.mxu0 %v58
    %74 = vmatprep.subr.mxu0 0.0
    %75 = vmatpush1.msra.mxu0 %v59
    %76 = vmatprep.subr.mxu0 0.0
    %77 = vmatpush1.msra.mxu0 %v60
    %78 = vmatprep.subr.mxu0 0.0
    %79 = vmatpush1.msra.mxu0 0.0
    %80 = vmatprep.subr.mxu0 0.0
    %81 = vmatpush1.msra.mxu0 0.0
    %82 = vmatprep.subr.mxu0 0.0
    %83 = vmatpush1.msra.mxu0 0.0
    %84 = vmatprep.subr.mxu0 0.0
    %85 = vmatpush1.msra.mxu0 0.0
    %86 = vmatprep.subr.mxu0 0.0
    %87 = vmatpush1.msra.mxu0 0.0
    %88 = vmatprep.subr.mxu0 0.0
    %89 = vmatpush1.msra.mxu0 0.0
    %90 = vmatprep.subr.mxu0 0.0
    %91 = vmatpush1.msra.mxu0 0.0
    %92 = vmatprep.subr.mxu0 0.0
    %93 = vmatpush1.msra.mxu0 0.0
    %94 = vmatprep.subr.mxu0 0.0
    %95 = vmatpush1.msra.mxu0 0.0
    %96 = vmatprep.subr.mxu0 0.0
    %97 = vmatpush1.msra.mxu0 0.0
    %98 = vmatprep.subr.mxu0 0.0
    %99 = vmatpush1.msra.mxu0 0.0
    %100 = vmatprep.subr.mxu0 0.0
    %101 = vmatpush1.msra.mxu0 0.0
    %102 = vmatprep.subr.mxu0 0.0
    %103 = vmatpush1.msra.mxu0 0.0
    %104 = vmatprep.subr.mxu0 0.0
    %105 = vmatpush1.msra.mxu0 0.0
    %106 = vmatprep.subr.mxu0 0.0
    %107 = vmatpush1.msra.mxu0 0.0
    %108 = vmatprep.subr.mxu0 0.0
    %109 = vmatpush1.msra.mxu0 0.0
    %110 = vmatprep.subr.mxu0 0.0
    %111 = vmatpush1.msra.mxu0 0.0
    %112 = vmatprep.subr.mxu0 0.0
    %113 = vmatpush1.msra.mxu0 0.0
    %114 = vmatprep.subr.mxu0 0.0
    %115 = vmatpush1.msra.mxu0 0.0
    %116 = vmatprep.subr.mxu0 0.0
    %117 = vmatpush1.msra.mxu0 0.0
    %118 = vmatprep.subr.mxu0 0.0
    %119 = vmatpush1.msra.mxu0 0.0
    %120 = vmatprep.subr.mxu0 0.0
    %121 = vmatpush1.msra.mxu0 0.0
    %122 = vmatprep.subr.mxu0 0.0
    %123 = vmatpush1.msra.mxu0 0.0
    %124 = vmatprep.subr.mxu0 0.0
    %125 = vmatpush1.msra.mxu0 0.0
    %126 = vmatprep.subr.mxu0 0.0
    %127 = vmatpush1.msra.mxu0 0.0
    %128 = vmatprep.subr.mxu0 0.0
    %129 = vmatpush1.msra.mxu0 0.0
    %130 = vmatprep.subr.mxu0 0.0
    %131 = vmatpush1.msra.mxu0 0.0
    %132 = vmatprep.subr.mxu0 0.0
    %133 = vmatpush1.msra.mxu0 0.0
    %134 = vmatprep.mubr.f32.mxu0 0.0
    %135 = vmatmul.mubr.f32.gmra.mrb[0].mxu0 %v68
    %v136 = vpop.f32.mrb[0].mxu0
    %v137 = vadd.f32 0.0, %v136
    %v138 = vpop.f32.mrb[0].mxu0
    %139 = vdwg.mxu0
    %141 = vset.pattern.permute.xlu0 0
    %142 = vperm.xlu0 %141, %v65
    %v143 = vpop.permute.xlu0 %142
    %v146 = vlaneseq
    %v147 = vshrl.u32 %v146, 7
    %v148 = vsub.s32 0, %v147
    %v149 = vrot.slane %v61, %v148
    %v151 = vmul.f32 %v143, %v149
    %v152 = vadd.f32 %v151, %v137
    %v154 = vlaneseq
    %v155 = vshrl.u32 %v154, 7
    %v156 = vsub.s32 0, %v155
    %v157 = vrot.slane %v62, %v156
    %v159 = vadd.f32 %v152, %v157
    %v160 = vxor.u32 %v159, 2147483648
    %v161 = vmul.f32 %v160, 1.442695
    %v162 = vpow.pop %v161
    %v163 = vadd.f32 %v162, 1.0
    %v164 = vrcp.pop %v163
    %v165 = vmul.f32 1.0, %v164
    %v167 = vlaneseq
    %v168 = vshrl.u32 %v167, 7
    %v169 = vsub.s32 0, %v168
    %v170 = vrot.slane %v63, %v169
    %171 = vrot.lane.b32.xlu0 %v170, 64
    %v172 = vpop.permute.xlu0 %171
    %v174 = vadd.f32 %v151, %v172
    %v176 = vlaneseq
    %v177 = vshrl.u32 %v176, 7
    %v178 = vsub.s32 0, %v177
    %v179 = vrot.slane %v64, %v178
    %180 = vrot.lane.b32.xlu0 %v179, 64
    %v181 = vpop.permute.xlu0 %180
    %v183 = vadd.f32 %v137, %v181
    %185 = vrot.lane.b32.xlu0 %v183, 64
    %v186 = vpop.permute.xlu0 %185
    %v188 = vmul.f32 %v165, %v186
    %190 = vrot.lane.b32.xlu0 %v188, 64
    %v191 = vpop.permute.xlu0 %190
    %v193 = vadd.f32 %v174, %v191
    %v194 = vtanh.pop %v193
    %v195 = vsub.f32 1.0, %v165
    %197 = vrot.lane.b32.xlu0 %v194, 96
    %v198 = vpop.permute.xlu0 %197
    %v200 = vmul.f32 %v195, %v198
    %201 = vrot.lane.b32.xlu0 %v56, 32
    %v202 = vpop.permute.xlu0 %201
    %v204 = vmul.f32 %v165, %v202
    %v205 = vadd.f32 %v200, %v204
    %207 = vrot.lane.b32.xlu0 %v205, 96
    %v208 = vpop.permute.xlu0 %207
    %v209 = vsel %vm66, %v208, 0
    %211 = vmatprep.subr.mxu0 0.0
    %212 = vmatpush1.msra.mxu0 %v57
    %213 = vmatprep.subr.mxu0 0.0
    %214 = vmatpush1.msra.mxu0 %v58
    %215 = vmatprep.subr.mxu0 0.0
    %216 = vmatpush1.msra.mxu0 %v59
    %217 = vmatprep.subr.mxu0 0.0
    %218 = vmatpush1.msra.mxu0 %v60
    %219 = vmatprep.subr.mxu0 0.0
    %220 = vmatpush1.msra.mxu0 0.0
    %221 = vmatprep.subr.mxu0 0.0
    %222 = vmatpush1.msra.mxu0 0.0
    %223 = vmatprep.subr.mxu0 0.0
    %224 = vmatpush1.msra.mxu0 0.0
    %225 = vmatprep.subr.mxu0 0.0
    %226 = vmatpush1.msra.mxu0 0.0
    %227 = vmatprep.subr.mxu0 0.0
    %228 = vmatpush1.msra.mxu0 0.0
    %229 = vmatprep.subr.mxu0 0.0
    %230 = vmatpush1.msra.mxu0 0.0
    %231 = vmatprep.subr.mxu0 0.0
    %232 = vmatpush1.msra.mxu0 0.0
    %233 = vmatprep.subr.mxu0 0.0
    %234 = vmatpush1.msra.mxu0 0.0
    %235 = vmatprep.subr.mxu0 0.0
    %236 = vmatpush1.msra.mxu0 0.0
    %237 = vmatprep.subr.mxu0 0.0
    %238 = vmatpush1.msra.mxu0 0.0
    %239 = vmatprep.subr.mxu0 0.0
    %240 = vmatpush1.msra.mxu0 0.0
    %241 = vmatprep.subr.mxu0 0.0
    %242 = vmatpush1.msra.mxu0 0.0
    %243 = vmatprep.subr.mxu0 0.0
    %244 = vmatpush1.msra.mxu0 0.0
    %245 = vmatprep.subr.mxu0 0.0
    %246 = vmatpush1.msra.mxu0 0.0
    %247 = vmatprep.subr.mxu0 0.0
    %248 = vmatpush1.msra.mxu0 0.0
    %249 = vmatprep.subr.mxu0 0.0
    %250 = vmatpush1.msra.mxu0 0.0
    %251 = vmatprep.subr.mxu0 0.0
    %252 = vmatpush1.msra.mxu0 0.0
    %253 = vmatprep.subr.mxu0 0.0
    %254 = vmatpush1.msra.mxu0 0.0
    %255 = vmatprep.subr.mxu0 0.0
    %256 = vmatpush1.msra.mxu0 0.0
    %257 = vmatprep.subr.mxu0 0.0
    %258 = vmatpush1.msra.mxu0 0.0
    %259 = vmatprep.subr.mxu0 0.0
    %260 = vmatpush1.msra.mxu0 0.0
    %261 = vmatprep.subr.mxu0 0.0
    %262 = vmatpush1.msra.mxu0 0.0
    %263 = vmatprep.subr.mxu0 0.0
    %264 = vmatpush1.msra.mxu0 0.0
    %265 = vmatprep.subr.mxu0 0.0
    %266 = vmatpush1.msra.mxu0 0.0
    %267 = vmatprep.subr.mxu0 0.0
    %268 = vmatpush1.msra.mxu0 0.0
    %269 = vmatprep.subr.mxu0 0.0
    %270 = vmatpush1.msra.mxu0 0.0
    %271 = vmatprep.subr.mxu0 0.0
    %272 = vmatpush1.msra.mxu0 0.0
    %273 = vmatprep.subr.mxu0 0.0
    %274 = vmatpush1.msra.mxu0 0.0
    %275 = vmatprep.mubr.f32.mxu0 0.0
    %276 = vmatmul.mubr.f32.gmra.mrb[0].mxu0 %v209
    %v277 = vpop.f32.mrb[0].mxu0
    %v278 = vadd.f32 0.0, %v277
    %v279 = vpop.f32.mrb[0].mxu0
    %280 = vdwg.mxu0
    %281 = vset.pattern.permute.xlu0 1
    %282 = vperm.xlu0 %281, %v65
    %v283 = vpop.permute.xlu0 %282
    %v285 = vmul.f32 %v283, %v149
    %v286 = vadd.f32 %v285, %v278
    %v287 = vadd.f32 %v286, %v157
    %v288 = vxor.u32 %v287, 2147483648
    %v289 = vmul.f32 %v288, 1.442695
    %v290 = vpow.pop %v289
    %v291 = vadd.f32 %v290, 1.0
    %v292 = vrcp.pop %v291
    %v293 = vmul.f32 1.0, %v292
    %v294 = vadd.f32 %v285, %v172
    %v295 = vadd.f32 %v278, %v181
    %297 = vrot.lane.b32.xlu0 %v295, 64
    %v298 = vpop.permute.xlu0 %297
    %v300 = vmul.f32 %v293, %v298
    %302 = vrot.lane.b32.xlu0 %v300, 64
    %v303 = vpop.permute.xlu0 %302
    %v305 = vadd.f32 %v294, %v303
    %v306 = vtanh.pop %v305
    %v307 = vsub.f32 1.0, %v293
    %309 = vrot.lane.b32.xlu0 %v306, 96
    %v310 = vpop.permute.xlu0 %309
    %v312 = vmul.f32 %v307, %v310
    %v313 = vmul.f32 %v293, %v205
    %v314 = vadd.f32 %v312, %v313
    %316 = vrot.lane.b32.xlu0 %v314, 96
    %v317 = vpop.permute.xlu0 %316
    %v318 = vsel %vm66, %v317, 0
    %320 = vmatprep.subr.mxu0 0.0
    %321 = vmatpush1.msra.mxu0 %v57
    %322 = vmatprep.subr.mxu0 0.0
    %323 = vmatpush1.msra.mxu0 %v58
    %324 = vmatprep.subr.mxu0 0.0
    %325 = vmatpush1.msra.mxu0 %v59
    %326 = vmatprep.subr.mxu0 0.0
    %327 = vmatpush1.msra.mxu0 %v60
    %328 = vmatprep.subr.mxu0 0.0
    %329 = vmatpush1.msra.mxu0 0.0
    %330 = vmatprep.subr.mxu0 0.0
    %331 = vmatpush1.msra.mxu0 0.0
    %332 = vmatprep.subr.mxu0 0.0
    %333 = vmatpush1.msra.mxu0 0.0
    %334 = vmatprep.subr.mxu0 0.0
    %335 = vmatpush1.msra.mxu0 0.0
    %336 = vmatprep.subr.mxu0 0.0
    %337 = vmatpush1.msra.mxu0 0.0
    %338 = vmatprep.subr.mxu0 0.0
    %339 = vmatpush1.msra.mxu0 0.0
    %340 = vmatprep.subr.mxu0 0.0
    %341 = vmatpush1.msra.mxu0 0.0
    %342 = vmatprep.subr.mxu0 0.0
    %343 = vmatpush1.msra.mxu0 0.0
    %344 = vmatprep.subr.mxu0 0.0
    %345 = vmatpush1.msra.mxu0 0.0
    %346 = vmatprep.subr.mxu0 0.0
    %347 = vmatpush1.msra.mxu0 0.0
    %348 = vmatprep.subr.mxu0 0.0
    %349 = vmatpush1.msra.mxu0 0.0
    %350 = vmatprep.subr.mxu0 0.0
    %351 = vmatpush1.msra.mxu0 0.0
    %352 = vmatprep.subr.mxu0 0.0
    %353 = vmatpush1.msra.mxu0 0.0
    %354 = vmatprep.subr.mxu0 0.0
    %355 = vmatpush1.msra.mxu0 0.0
    %356 = vmatprep.subr.mxu0 0.0
    %357 = vmatpush1.msra.mxu0 0.0
    %358 = vmatprep.subr.mxu0 0.0
    %359 = vmatpush1.msra.mxu0 0.0
    %360 = vmatprep.subr.mxu0 0.0
    %361 = vmatpush1.msra.mxu0 0.0
    %362 = vmatprep.subr.mxu0 0.0
    %363 = vmatpush1.msra.mxu0 0.0
    %364 = vmatprep.subr.mxu0 0.0
    %365 = vmatpush1.msra.mxu0 0.0
    %366 = vmatprep.subr.mxu0 0.0
    %367 = vmatpush1.msra.mxu0 0.0
    %368 = vmatprep.subr.mxu0 0.0
    %369 = vmatpush1.msra.mxu0 0.0
    %370 = vmatprep.subr.mxu0 0.0
    %371 = vmatpush1.msra.mxu0 0.0
    %372 = vmatprep.subr.mxu0 0.0
    %373 = vmatpush1.msra.mxu0 0.0
    %374 = vmatprep.subr.mxu0 0.0
    %375 = vmatpush1.msra.mxu0 0.0
    %376 = vmatprep.subr.mxu0 0.0
    %377 = vmatpush1.msra.mxu0 0.0
    %378 = vmatprep.subr.mxu0 0.0
    %379 = vmatpush1.msra.mxu0 0.0
    %380 = vmatprep.subr.mxu0 0.0
    %381 = vmatpush1.msra.mxu0 0.0
    %382 = vmatprep.subr.mxu0 0.0
    %383 = vmatpush1.msra.mxu0 0.0
    %384 = vmatprep.mubr.f32.mxu0 0.0
    %385 = vmatmul.mubr.f32.gmra.mrb[0].mxu0 %v318
    %v386 = vpop.f32.mrb[0].mxu0
    %v387 = vadd.f32 0.0, %v386
    %v388 = vpop.f32.mrb[0].mxu0
    %389 = vdwg.mxu0
    %390 = vset.pattern.permute.xlu0 2
    %391 = vperm.xlu0 %390, %v65
    %v392 = vpop.permute.xlu0 %391
    %v394 = vmul.f32 %v392, %v149
    %v395 = vadd.f32 %v394, %v387
    %v396 = vadd.f32 %v395, %v157
    %v397 = vxor.u32 %v396, 2147483648
    %v398 = vmul.f32 %v397, 1.442695
    %v399 = vpow.pop %v398
    %v400 = vadd.f32 %v399, 1.0
    %v401 = vrcp.pop %v400
    %v402 = vmul.f32 1.0, %v401
    %v403 = vadd.f32 %v394, %v172
    %v404 = vadd.f32 %v387, %v181
    %406 = vrot.lane.b32.xlu0 %v404, 64
    %v407 = vpop.permute.xlu0 %406
    %v409 = vmul.f32 %v402, %v407
    %411 = vrot.lane.b32.xlu0 %v409, 64
    %v412 = vpop.permute.xlu0 %411
    %v414 = vadd.f32 %v403, %v412
    %v415 = vtanh.pop %v414
    %v416 = vsub.f32 1.0, %v402
    %418 = vrot.lane.b32.xlu0 %v415, 96
    %v419 = vpop.permute.xlu0 %418
    %v421 = vmul.f32 %v416, %v419
    %v422 = vmul.f32 %v402, %v314
    %v423 = vadd.f32 %v421, %v422
    %425 = vrot.lane.b32.xlu0 %v423, 96
    %v426 = vpop.permute.xlu0 %425
    %v427 = vsel %vm66, %v426, 0
    %429 = vmatprep.subr.mxu0 0.0
    %430 = vmatpush1.msra.mxu0 %v57
    %431 = vmatprep.subr.mxu0 0.0
    %432 = vmatpush1.msra.mxu0 %v58
    %433 = vmatprep.subr.mxu0 0.0
    %434 = vmatpush1.msra.mxu0 %v59
    %435 = vmatprep.subr.mxu0 0.0
    %436 = vmatpush1.msra.mxu0 %v60
    %437 = vmatprep.subr.mxu0 0.0
    %438 = vmatpush1.msra.mxu0 0.0
    %439 = vmatprep.subr.mxu0 0.0
    %440 = vmatpush1.msra.mxu0 0.0
    %441 = vmatprep.subr.mxu0 0.0
    %442 = vmatpush1.msra.mxu0 0.0
    %443 = vmatprep.subr.mxu0 0.0
    %444 = vmatpush1.msra.mxu0 0.0
    %445 = vmatprep.subr.mxu0 0.0
    %446 = vmatpush1.msra.mxu0 0.0
    %447 = vmatprep.subr.mxu0 0.0
    %448 = vmatpush1.msra.mxu0 0.0
    %449 = vmatprep.subr.mxu0 0.0
    %450 = vmatpush1.msra.mxu0 0.0
    %451 = vmatprep.subr.mxu0 0.0
    %452 = vmatpush1.msra.mxu0 0.0
    %453 = vmatprep.subr.mxu0 0.0
    %454 = vmatpush1.msra.mxu0 0.0
    %455 = vmatprep.subr.mxu0 0.0
    %456 = vmatpush1.msra.mxu0 0.0
    %457 = vmatprep.subr.mxu0 0.0
    %458 = vmatpush1.msra.mxu0 0.0
    %459 = vmatprep.subr.mxu0 0.0
    %460 = vmatpush1.msra.mxu0 0.0
    %461 = vmatprep.subr.mxu0 0.0
    %462 = vmatpush1.msra.mxu0 0.0
    %463 = vmatprep.subr.mxu0 0.0
    %464 = vmatpush1.msra.mxu0 0.0
    %465 = vmatprep.subr.mxu0 0.0
    %466 = vmatpush1.msra.mxu0 0.0
    %467 = vmatprep.subr.mxu0 0.0
    %468 = vmatpush1.msra.mxu0 0.0
    %469 = vmatprep.subr.mxu0 0.0
    %470 = vmatpush1.msra.mxu0 0.0
    %471 = vmatprep.subr.mxu0 0.0
    %472 = vmatpush1.msra.mxu0 0.0
    %473 = vmatprep.subr.mxu0 0.0
    %474 = vmatpush1.msra.mxu0 0.0
    %475 = vmatprep.subr.mxu0 0.0
    %476 = vmatpush1.msra.mxu0 0.0
    %477 = vmatprep.subr.mxu0 0.0
    %478 = vmatpush1.msra.mxu0 0.0
    %479 = vmatprep.subr.mxu0 0.0
    %480 = vmatpush1.msra.mxu0 0.0
    %481 = vmatprep.subr.mxu0 0.0
    %482 = vmatpush1.msra.mxu0 0.0
    %483 = vmatprep.subr.mxu0 0.0
    %484 = vmatpush1.msra.mxu0 0.0
    %485 = vmatprep.subr.mxu0 0.0
    %486 = vmatpush1.msra.mxu0 0.0
    %487 = vmatprep.subr.mxu0 0.0
    %488 = vmatpush1.msra.mxu0 0.0
    %489 = vmatprep.subr.mxu0 0.0
    %490 = vmatpush1.msra.mxu0 0.0
    %491 = vmatprep.subr.mxu0 0.0
    %492 = vmatpush1.msra.mxu0 0.0
    %493 = vmatprep.mubr.f32.mxu0 0.0
    %494 = vmatmul.mubr.f32.gmra.mrb[0].mxu0 %v427
    %v495 = vpop.f32.mrb[0].mxu0
    %v496 = vadd.f32 0.0, %v495
    %v497 = vpop.f32.mrb[0].mxu0
    %498 = vdwg.mxu0
    %499 = vset.pattern.permute.xlu0 3
    %500 = vperm.xlu0 %499, %v65
    %v501 = vpop.permute.xlu0 %500
    %v503 = vmul.f32 %v501, %v149
    %v504 = vadd.f32 %v503, %v496
    %v505 = vadd.f32 %v504, %v157
    %v506 = vxor.u32 %v505, 2147483648
    %v507 = vmul.f32 %v506, 1.442695
    %v508 = vpow.pop %v507
    %v509 = vadd.f32 %v508, 1.0
    %v510 = vrcp.pop %v509
    %v511 = vmul.f32 1.0, %v510
    %v512 = vadd.f32 %v503, %v172
    %v513 = vadd.f32 %v496, %v181
    %515 = vrot.lane.b32.xlu0 %v513, 64
    %v516 = vpop.permute.xlu0 %515
    %v518 = vmul.f32 %v511, %v516
    %520 = vrot.lane.b32.xlu0 %v518, 64
    %v521 = vpop.permute.xlu0 %520
    %v523 = vadd.f32 %v512, %v521
    %v524 = vtanh.pop %v523
    %v525 = vsub.f32 1.0, %v511
    %527 = vrot.lane.b32.xlu0 %v524, 96
    %v528 = vpop.permute.xlu0 %527
    %v530 = vmul.f32 %v525, %v528
    %v531 = vmul.f32 %v511, %v423
    %v532 = vadd.f32 %v530, %v531
    %534 = vrot.lane.b32.xlu0 %v532, 96
    %v535 = vpop.permute.xlu0 %534
    %v536 = vsel %vm66, %v535, 0
    %538 = vmatprep.subr.mxu0 0.0
    %539 = vmatpush1.msra.mxu0 %v57
    %540 = vmatprep.subr.mxu0 0.0
    %541 = vmatpush1.msra.mxu0 %v58
    %542 = vmatprep.subr.mxu0 0.0
    %543 = vmatpush1.msra.mxu0 %v59
    %544 = vmatprep.subr.mxu0 0.0
    %545 = vmatpush1.msra.mxu0 %v60
    %546 = vmatprep.subr.mxu0 0.0
    %547 = vmatpush1.msra.mxu0 0.0
    %548 = vmatprep.subr.mxu0 0.0
    %549 = vmatpush1.msra.mxu0 0.0
    %550 = vmatprep.subr.mxu0 0.0
    %551 = vmatpush1.msra.mxu0 0.0
    %552 = vmatprep.subr.mxu0 0.0
    %553 = vmatpush1.msra.mxu0 0.0
    %554 = vmatprep.subr.mxu0 0.0
    %555 = vmatpush1.msra.mxu0 0.0
    %556 = vmatprep.subr.mxu0 0.0
    %557 = vmatpush1.msra.mxu0 0.0
    %558 = vmatprep.subr.mxu0 0.0
    %559 = vmatpush1.msra.mxu0 0.0
    %560 = vmatprep.subr.mxu0 0.0
    %561 = vmatpush1.msra.mxu0 0.0
    %562 = vmatprep.subr.mxu0 0.0
    %563 = vmatpush1.msra.mxu0 0.0
    %564 = vmatprep.subr.mxu0 0.0
    %565 = vmatpush1.msra.mxu0 0.0
    %566 = vmatprep.subr.mxu0 0.0
    %567 = vmatpush1.msra.mxu0 0.0
    %568 = vmatprep.subr.mxu0 0.0
    %569 = vmatpush1.msra.mxu0 0.0
    %570 = vmatprep.subr.mxu0 0.0
    %571 = vmatpush1.msra.mxu0 0.0
    %572 = vmatprep.subr.mxu0 0.0
    %573 = vmatpush1.msra.mxu0 0.0
    %574 = vmatprep.subr.mxu0 0.0
    %575 = vmatpush1.msra.mxu0 0.0
    %576 = vmatprep.subr.mxu0 0.0
    %577 = vmatpush1.msra.mxu0 0.0
    %578 = vmatprep.subr.mxu0 0.0
    %579 = vmatpush1.msra.mxu0 0.0
    %580 = vmatprep.subr.mxu0 0.0
    %581 = vmatpush1.msra.mxu0 0.0
    %582 = vmatprep.subr.mxu0 0.0
    %583 = vmatpush1.msra.mxu0 0.0
    %584 = vmatprep.subr.mxu0 0.0
    %585 = vmatpush1.msra.mxu0 0.0
    %586 = vmatprep.subr.mxu0 0.0
    %587 = vmatpush1.msra.mxu0 0.0
    %588 = vmatprep.subr.mxu0 0.0
    %589 = vmatpush1.msra.mxu0 0.0
    %590 = vmatprep.subr.mxu0 0.0
    %591 = vmatpush1.msra.mxu0 0.0
    %592 = vmatprep.subr.mxu0 0.0
    %593 = vmatpush1.msra.mxu0 0.0
    %594 = vmatprep.subr.mxu0 0.0
    %595 = vmatpush1.msra.mxu0 0.0
    %596 = vmatprep.subr.mxu0 0.0
    %597 = vmatpush1.msra.mxu0 0.0
    %598 = vmatprep.subr.mxu0 0.0
    %599 = vmatpush1.msra.mxu0 0.0
    %600 = vmatprep.subr.mxu0 0.0
    %601 = vmatpush1.msra.mxu0 0.0
    %602 = vmatprep.mubr.f32.mxu0 0.0
    %603 = vmatmul.mubr.f32.gmra.mrb[0].mxu0 %v536
    %v604 = vpop.f32.mrb[0].mxu0
    %v605 = vadd.f32 0.0, %v604
    %v606 = vpop.f32.mrb[0].mxu0
    %607 = vdwg.mxu0
    %608 = vset.pattern.permute.xlu0 4
    %609 = vperm.xlu0 %608, %v65
    %v610 = vpop.permute.xlu0 %609
    %v612 = vmul.f32 %v610, %v149
    %v613 = vadd.f32 %v612, %v605
    %v614 = vadd.f32 %v613, %v157
    %v615 = vxor.u32 %v614, 2147483648
    %v616 = vmul.f32 %v615, 1.442695
    %v617 = vpow.pop %v616
    %v618 = vadd.f32 %v617, 1.0
    %v619 = vrcp.pop %v618
    %v620 = vmul.f32 1.0, %v619
    %v621 = vadd.f32 %v612, %v172
    %v622 = vadd.f32 %v605, %v181
    %624 = vrot.lane.b32.xlu0 %v622, 64
    %v625 = vpop.permute.xlu0 %624
    %v627 = vmul.f32 %v620, %v625
    %629 = vrot.lane.b32.xlu0 %v627, 64
    %v630 = vpop.permute.xlu0 %629
    %v632 = vadd.f32 %v621, %v630
    %v633 = vtanh.pop %v632
    %v634 = vsub.f32 1.0, %v620
    %636 = vrot.lane.b32.xlu0 %v633, 96
    %v637 = vpop.permute.xlu0 %636
    %v639 = vmul.f32 %v634, %v637
    %v640 = vmul.f32 %v620, %v532
    %v641 = vadd.f32 %v639, %v640
    %643 = vrot.lane.b32.xlu0 %v641, 96
    %v644 = vpop.permute.xlu0 %643
    %v645 = vsel %vm66, %v644, 0
    %647 = vmatprep.subr.mxu0 0.0
    %648 = vmatpush1.msra.mxu0 %v57
    %649 = vmatprep.subr.mxu0 0.0
    %650 = vmatpush1.msra.mxu0 %v58
    %651 = vmatprep.subr.mxu0 0.0
    %652 = vmatpush1.msra.mxu0 %v59
    %653 = vmatprep.subr.mxu0 0.0
    %654 = vmatpush1.msra.mxu0 %v60
    %655 = vmatprep.subr.mxu0 0.0
    %656 = vmatpush1.msra.mxu0 0.0
    %657 = vmatprep.subr.mxu0 0.0
    %658 = vmatpush1.msra.mxu0 0.0
    %659 = vmatprep.subr.mxu0 0.0
    %660 = vmatpush1.msra.mxu0 0.0
    %661 = vmatprep.subr.mxu0 0.0
    %662 = vmatpush1.msra.mxu0 0.0
    %663 = vmatprep.subr.mxu0 0.0
    %664 = vmatpush1.msra.mxu0 0.0
    %665 = vmatprep.subr.mxu0 0.0
    %666 = vmatpush1.msra.mxu0 0.0
    %667 = vmatprep.subr.mxu0 0.0
    %668 = vmatpush1.msra.mxu0 0.0
    %669 = vmatprep.subr.mxu0 0.0
    %670 = vmatpush1.msra.mxu0 0.0
    %671 = vmatprep.subr.mxu0 0.0
    %672 = vmatpush1.msra.mxu0 0.0
    %673 = vmatprep.subr.mxu0 0.0
    %674 = vmatpush1.msra.mxu0 0.0
    %675 = vmatprep.subr.mxu0 0.0
    %676 = vmatpush1.msra.mxu0 0.0
    %677 = vmatprep.subr.mxu0 0.0
    %678 = vmatpush1.msra.mxu0 0.0
    %679 = vmatprep.subr.mxu0 0.0
    %680 = vmatpush1.msra.mxu0 0.0
    %681 = vmatprep.subr.mxu0 0.0
    %682 = vmatpush1.msra.mxu0 0.0
    %683 = vmatprep.subr.mxu0 0.0
    %684 = vmatpush1.msra.mxu0 0.0
    %685 = vmatprep.subr.mxu0 0.0
    %686 = vmatpush1.msra.mxu0 0.0
    %687 = vmatprep.subr.mxu0 0.0
    %688 = vmatpush1.msra.mxu0 0.0
    %689 = vmatprep.subr.mxu0 0.0
    %690 = vmatpush1.msra.mxu0 0.0
    %691 = vmatprep.subr.mxu0 0.0
    %692 = vmatpush1.msra.mxu0 0.0
    %693 = vmatprep.subr.mxu0 0.0
    %694 = vmatpush1.msra.mxu0 0.0
    %695 = vmatprep.subr.mxu0 0.0
    %696 = vmatpush1.msra.mxu0 0.0
    %697 = vmatprep.subr.mxu0 0.0
    %698 = vmatpush1.msra.mxu0 0.0
    %699 = vmatprep.subr.mxu0 0.0
    %700 = vmatpush1.msra.mxu0 0.0
    %701 = vmatprep.subr.mxu0 0.0
    %702 = vmatpush1.msra.mxu0 0.0
    %703 = vmatprep.subr.mxu0 0.0
    %704 = vmatpush1.msra.mxu0 0.0
    %705 = vmatprep.subr.mxu0 0.0
    %706 = vmatpush1.msra.mxu0 0.0
    %707 = vmatprep.subr.mxu0 0.0
    %708 = vmatpush1.msra.mxu0 0.0
    %709 = vmatprep.subr.mxu0 0.0
    %710 = vmatpush1.msra.mxu0 0.0
    %711 = vmatprep.mubr.f32.mxu0 0.0
    %712 = vmatmul.mubr.f32.gmra.mrb[0].mxu0 %v645
    %v713 = vpop.f32.mrb[0].mxu0
    %v714 = vadd.f32 0.0, %v713
    %v715 = vpop.f32.mrb[0].mxu0
    %716 = vdwg.mxu0
    %717 = vset.pattern.permute.xlu0 5
    %718 = vperm.xlu0 %717, %v65
    %v719 = vpop.permute.xlu0 %718
    %v721 = vmul.f32 %v719, %v149
    %v722 = vadd.f32 %v721, %v714
    %v723 = vadd.f32 %v722, %v157
    %v724 = vxor.u32 %v723, 2147483648
    %v725 = vmul.f32 %v724, 1.442695
    %v726 = vpow.pop %v725
    %v727 = vadd.f32 %v726, 1.0
    %v728 = vrcp.pop %v727
    %v729 = vmul.f32 1.0, %v728
    %v730 = vadd.f32 %v721, %v172
    %v731 = vadd.f32 %v714, %v181
    %733 = vrot.lane.b32.xlu0 %v731, 64
    %v734 = vpop.permute.xlu0 %733
    %v736 = vmul.f32 %v729, %v734
    %738 = vrot.lane.b32.xlu0 %v736, 64
    %v739 = vpop.permute.xlu0 %738
    %v741 = vadd.f32 %v730, %v739
    %v742 = vtanh.pop %v741
    %v743 = vsub.f32 1.0, %v729
    %745 = vrot.lane.b32.xlu0 %v742, 96
    %v746 = vpop.permute.xlu0 %745
    %v748 = vmul.f32 %v743, %v746
    %v749 = vmul.f32 %v729, %v641
    %v750 = vadd.f32 %v748, %v749
    %752 = vrot.lane.b32.xlu0 %v750, 96
    %v753 = vpop.permute.xlu0 %752
    %v754 = vsel %vm66, %v753, 0
    %756 = vmatprep.subr.mxu0 0.0
    %757 = vmatpush1.msra.mxu0 %v57
    %758 = vmatprep.subr.mxu0 0.0
    %759 = vmatpush1.msra.mxu0 %v58
    %760 = vmatprep.subr.mxu0 0.0
    %761 = vmatpush1.msra.mxu0 %v59
    %762 = vmatprep.subr.mxu0 0.0
    %763 = vmatpush1.msra.mxu0 %v60
    %764 = vmatprep.subr.mxu0 0.0
    %765 = vmatpush1.msra.mxu0 0.0
    %766 = vmatprep.subr.mxu0 0.0
    %767 = vmatpush1.msra.mxu0 0.0
    %768 = vmatprep.subr.mxu0 0.0
    %769 = vmatpush1.msra.mxu0 0.0
    %770 = vmatprep.subr.mxu0 0.0
    %771 = vmatpush1.msra.mxu0 0.0
    %772 = vmatprep.subr.mxu0 0.0
    %773 = vmatpush1.msra.mxu0 0.0
    %774 = vmatprep.subr.mxu0 0.0
    %775 = vmatpush1.msra.mxu0 0.0
    %776 = vmatprep.subr.mxu0 0.0
    %777 = vmatpush1.msra.mxu0 0.0
    %778 = vmatprep.subr.mxu0 0.0
    %779 = vmatpush1.msra.mxu0 0.0
    %780 = vmatprep.subr.mxu0 0.0
    %781 = vmatpush1.msra.mxu0 0.0
    %782 = vmatprep.subr.mxu0 0.0
    %783 = vmatpush1.msra.mxu0 0.0
    %784 = vmatprep.subr.mxu0 0.0
    %785 = vmatpush1.msra.mxu0 0.0
    %786 = vmatprep.subr.mxu0 0.0
    %787 = vmatpush1.msra.mxu0 0.0
    %788 = vmatprep.subr.mxu0 0.0
    %789 = vmatpush1.msra.mxu0 0.0
    %790 = vmatprep.subr.mxu0 0.0
    %791 = vmatpush1.msra.mxu0 0.0
    %792 = vmatprep.subr.mxu0 0.0
    %793 = vmatpush1.msra.mxu0 0.0
    %794 = vmatprep.subr.mxu0 0.0
    %795 = vmatpush1.msra.mxu0 0.0
    %796 = vmatprep.subr.mxu0 0.0
    %797 = vmatpush1.msra.mxu0 0.0
    %798 = vmatprep.subr.mxu0 0.0
    %799 = vmatpush1.msra.mxu0 0.0
    %800 = vmatprep.subr.mxu0 0.0
    %801 = vmatpush1.msra.mxu0 0.0
    %802 = vmatprep.subr.mxu0 0.0
    %803 = vmatpush1.msra.mxu0 0.0
    %804 = vmatprep.subr.mxu0 0.0
    %805 = vmatpush1.msra.mxu0 0.0
    %806 = vmatprep.subr.mxu0 0.0
    %807 = vmatpush1.msra.mxu0 0.0
    %808 = vmatprep.subr.mxu0 0.0
    %809 = vmatpush1.msra.mxu0 0.0
    %810 = vmatprep.subr.mxu0 0.0
    %811 = vmatpush1.msra.mxu0 0.0
    %812 = vmatprep.subr.mxu0 0.0
    %813 = vmatpush1.msra.mxu0 0.0
    %814 = vmatprep.subr.mxu0 0.0
    %815 = vmatpush1.msra.mxu0 0.0
    %816 = vmatprep.subr.mxu0 0.0
    %817 = vmatpush1.msra.mxu0 0.0
    %818 = vmatprep.subr.mxu0 0.0
    %819 = vmatpush1.msra.mxu0 0.0
    %820 = vmatprep.mubr.f32.mxu0 0.0
    %821 = vmatmul.mubr.f32.gmra.mrb[0].mxu0 %v754
    %v822 = vpop.f32.mrb[0].mxu0
    %v823 = vadd.f32 0.0, %v822
    %v824 = vpop.f32.mrb[0].mxu0
    %825 = vdwg.mxu0
    %826 = vset.pattern.permute.xlu0 6
    %827 = vperm.xlu0 %826, %v65
    %v828 = vpop.permute.xlu0 %827
    %v830 = vmul.f32 %v828, %v149
    %v831 = vadd.f32 %v830, %v823
    %v832 = vadd.f32 %v831, %v157
    %v833 = vxor.u32 %v832, 2147483648
    %v834 = vmul.f32 %v833, 1.442695
    %v835 = vpow.pop %v834
    %v836 = vadd.f32 %v835, 1.0
    %v837 = vrcp.pop %v836
    %v838 = vmul.f32 1.0, %v837
    %v839 = vadd.f32 %v830, %v172
    %v840 = vadd.f32 %v823, %v181
    %842 = vrot.lane.b32.xlu0 %v840, 64
    %v843 = vpop.permute.xlu0 %842
    %v845 = vmul.f32 %v838, %v843
    %847 = vrot.lane.b32.xlu0 %v845, 64
    %v848 = vpop.permute.xlu0 %847
    %v850 = vadd.f32 %v839, %v848
    %v851 = vtanh.pop %v850
    %v852 = vsub.f32 1.0, %v838
    %854 = vrot.lane.b32.xlu0 %v851, 96
    %v855 = vpop.permute.xlu0 %854
    %v857 = vmul.f32 %v852, %v855
    %v858 = vmul.f32 %v838, %v750
    %v859 = vadd.f32 %v857, %v858
    %861 = vrot.lane.b32.xlu0 %v859, 96
    %v862 = vpop.permute.xlu0 %861
    %v863 = vsel %vm66, %v862, 0
    %865 = vmatprep.subr.mxu0 0.0
    %866 = vmatpush1.msra.mxu0 %v57
    %867 = vmatprep.subr.mxu0 0.0
    %868 = vmatpush1.msra.mxu0 %v58
    %869 = vmatprep.subr.mxu0 0.0
    %870 = vmatpush1.msra.mxu0 %v59
    %871 = vmatprep.subr.mxu0 0.0
    %872 = vmatpush1.msra.mxu0 %v60
    %873 = vmatprep.subr.mxu0 0.0
    %874 = vmatpush1.msra.mxu0 0.0
    %875 = vmatprep.subr.mxu0 0.0
    %876 = vmatpush1.msra.mxu0 0.0
    %877 = vmatprep.subr.mxu0 0.0
    %878 = vmatpush1.msra.mxu0 0.0
    %879 = vmatprep.subr.mxu0 0.0
    %880 = vmatpush1.msra.mxu0 0.0
    %881 = vmatprep.subr.mxu0 0.0
    %882 = vmatpush1.msra.mxu0 0.0
    %883 = vmatprep.subr.mxu0 0.0
    %884 = vmatpush1.msra.mxu0 0.0
    %885 = vmatprep.subr.mxu0 0.0
    %886 = vmatpush1.msra.mxu0 0.0
    %887 = vmatprep.subr.mxu0 0.0
    %888 = vmatpush1.msra.mxu0 0.0
    %889 = vmatprep.subr.mxu0 0.0
    %890 = vmatpush1.msra.mxu0 0.0
    %891 = vmatprep.subr.mxu0 0.0
    %892 = vmatpush1.msra.mxu0 0.0
    %893 = vmatprep.subr.mxu0 0.0
    %894 = vmatpush1.msra.mxu0 0.0
    %895 = vmatprep.subr.mxu0 0.0
    %896 = vmatpush1.msra.mxu0 0.0
    %897 = vmatprep.subr.mxu0 0.0
    %898 = vmatpush1.msra.mxu0 0.0
    %899 = vmatprep.subr.mxu0 0.0
    %900 = vmatpush1.msra.mxu0 0.0
    %901 = vmatprep.subr.mxu0 0.0
    %902 = vmatpush1.msra.mxu0 0.0
    %903 = vmatprep.subr.mxu0 0.0
    %904 = vmatpush1.msra.mxu0 0.0
    %905 = vmatprep.subr.mxu0 0.0
    %906 = vmatpush1.msra.mxu0 0.0
    %907 = vmatprep.subr.mxu0 0.0
    %908 = vmatpush1.msra.mxu0 0.0
    %909 = vmatprep.subr.mxu0 0.0
    %910 = vmatpush1.msra.mxu0 0.0
    %911 = vmatprep.subr.mxu0 0.0
    %912 = vmatpush1.msra.mxu0 0.0
    %913 = vmatprep.subr.mxu0 0.0
    %914 = vmatpush1.msra.mxu0 0.0
    %915 = vmatprep.subr.mxu0 0.0
    %916 = vmatpush1.msra.mxu0 0.0
    %917 = vmatprep.subr.mxu0 0.0
    %918 = vmatpush1.msra.mxu0 0.0
    %919 = vmatprep.subr.mxu0 0.0
    %920 = vmatpush1.msra.mxu0 0.0
    %921 = vmatprep.subr.mxu0 0.0
    %922 = vmatpush1.msra.mxu0 0.0
    %923 = vmatprep.subr.mxu0 0.0
    %924 = vmatpush1.msra.mxu0 0.0
    %925 = vmatprep.subr.mxu0 0.0
    %926 = vmatpush1.msra.mxu0 0.0
    %927 = vmatprep.subr.mxu0 0.0
    %928 = vmatpush1.msra.mxu0 0.0
    %929 = vmatprep.mubr.f32.mxu0 0.0
    %930 = vmatmul.mubr.f32.gmra.mrb[0].mxu0 %v863
    %v931 = vpop.f32.mrb[0].mxu0
    %v932 = vadd.f32 0.0, %v931
    %v933 = vpop.f32.mrb[0].mxu0
    %934 = vdwg.mxu0
    %935 = vset.pattern.permute.xlu0 7
    %936 = vperm.xlu0 %935, %v65
    %v937 = vpop.permute.xlu0 %936
    %v939 = vmul.f32 %v937, %v149
    %v940 = vadd.f32 %v939, %v932
    %v941 = vadd.f32 %v940, %v157
    %v942 = vxor.u32 %v941, 2147483648
    %v943 = vmul.f32 %v942, 1.442695
    %v944 = vpow.pop %v943
    %v945 = vadd.f32 %v944, 1.0
    %v946 = vrcp.pop %v945
    %v947 = vmul.f32 1.0, %v946
    %v948 = vadd.f32 %v939, %v172
    %v949 = vadd.f32 %v932, %v181
    %951 = vrot.lane.b32.xlu0 %v949, 64
    %v952 = vpop.permute.xlu0 %951
    %v954 = vmul.f32 %v947, %v952
    %956 = vrot.lane.b32.xlu0 %v954, 64
    %v957 = vpop.permute.xlu0 %956
    %v959 = vadd.f32 %v948, %v957
    %v960 = vtanh.pop %v959
    %v961 = vsub.f32 1.0, %v947
    %963 = vrot.lane.b32.xlu0 %v960, 96
    %v964 = vpop.permute.xlu0 %963
    %v966 = vmul.f32 %v961, %v964
    %v967 = vmul.f32 %v947, %v859
    %v968 = vadd.f32 %v966, %v967
    %970 = vrot.lane.b32.xlu0 %v968, 96
    %v971 = vpop.permute.xlu0 %970
    %973 = vst.msk [vmem:[#allocation2] sm:$0xff] %vm66, %v971
    %s974 = scalar_lea.vmem [#allocation2], 8
    %v975 = vld [vmem:[%s974] sm:$0xff]
    %s976 = scalar_lea.vmem %s3, 32
    %v977 = vld [vmem:[%s976] sm:$0xff]
    %v978 = vld [vmem:[%s976 + $0x8] sm:$0xff]
    %v979 = vld [vmem:[%s976 + $0x10] sm:$0xff]
    %v980 = vld [vmem:[%s976 + $0x18] sm:$0xff]
    %s981 = scalar_lea.vmem %s2, 1
    %v982 = vld [vmem:[%s981] sm:$0x1]
    %s983 = scalar_lea.vmem %s4, 1
    %v984 = vld [vmem:[%s983] sm:$0x1]
    %s985 = scalar_lea.vmem %s5, 1
    %v986 = vld [vmem:[%s985] sm:$0x1]
    %s987 = scalar_lea.vmem %s6, 1
    %v988 = vld [vmem:[%s987] sm:$0x1]
    %s989 = scalar_lea.vmem %s0, 8
    %v990 = vld [vmem:[%s989] sm:$0xff]
    %v992 = vsel %vm66, %v975, 0
    %994 = vmatprep.subr.mxu0 0.0
    %995 = vmatpush1.msra.mxu0 %v977
    %996 = vmatprep.subr.mxu0 0.0
    %997 = vmatpush1.msra.mxu0 %v978
    %998 = vmatprep.subr.mxu0 0.0
    %999 = vmatpush1.msra.mxu0 %v979
    %1000 = vmatprep.subr.mxu0 0.0
    %1001 = vmatpush1.msra.mxu0 %v980
    %1002 = vmatprep.subr.mxu0 0.0
    %1003 = vmatpush1.msra.mxu0 0.0
    %1004 = vmatprep.subr.mxu0 0.0
    %1005 = vmatpush1.msra.mxu0 0.0
    %1006 = vmatprep.subr.mxu0 0.0
    %1007 = vmatpush1.msra.mxu0 0.0
    %1008 = vmatprep.subr.mxu0 0.0
    %1009 = vmatpush1.msra.mxu0 0.0
    %1010 = vmatprep.subr.mxu0 0.0
    %1011 = vmatpush1.msra.mxu0 0.0
    %1012 = vmatprep.subr.mxu0 0.0
    %1013 = vmatpush1.msra.mxu0 0.0
    %1014 = vmatprep.subr.mxu0 0.0
    %1015 = vmatpush1.msra.mxu0 0.0
    %1016 = vmatprep.subr.mxu0 0.0
    %1017 = vmatpush1.msra.mxu0 0.0
    %1018 = vmatprep.subr.mxu0 0.0
    %1019 = vmatpush1.msra.mxu0 0.0
    %1020 = vmatprep.subr.mxu0 0.0
    %1021 = vmatpush1.msra.mxu0 0.0
    %1022 = vmatprep.subr.mxu0 0.0
    %1023 = vmatpush1.msra.mxu0 0.0
    %1024 = vmatprep.subr.mxu0 0.0
    %1025 = vmatpush1.msra.mxu0 0.0
    %1026 = vmatprep.subr.mxu0 0.0
    %1027 = vmatpush1.msra.mxu0 0.0
    %1028 = vmatprep.subr.mxu0 0.0
    %1029 = vmatpush1.msra.mxu0 0.0
    %1030 = vmatprep.subr.mxu0 0.0
    %1031 = vmatpush1.msra.mxu0 0.0
    %1032 = vmatprep.subr.mxu0 0.0
    %1033 = vmatpush1.msra.mxu0 0.0
    %1034 = vmatprep.subr.mxu0 0.0
    %1035 = vmatpush1.msra.mxu0 0.0
    %1036 = vmatprep.subr.mxu0 0.0
    %1037 = vmatpush1.msra.mxu0 0.0
    %1038 = vmatprep.subr.mxu0 0.0
    %1039 = vmatpush1.msra.mxu0 0.0
    %1040 = vmatprep.subr.mxu0 0.0
    %1041 = vmatpush1.msra.mxu0 0.0
    %1042 = vmatprep.subr.mxu0 0.0
    %1043 = vmatpush1.msra.mxu0 0.0
    %1044 = vmatprep.subr.mxu0 0.0
    %1045 = vmatpush1.msra.mxu0 0.0
    %1046 = vmatprep.subr.mxu0 0.0
    %1047 = vmatpush1.msra.mxu0 0.0
    %1048 = vmatprep.subr.mxu0 0.0
    %1049 = vmatpush1.msra.mxu0 0.0
    %1050 = vmatprep.subr.mxu0 0.0
    %1051 = vmatpush1.msra.mxu0 0.0
    %1052 = vmatprep.subr.mxu0 0.0
    %1053 = vmatpush1.msra.mxu0 0.0
    %1054 = vmatprep.subr.mxu0 0.0
    %1055 = vmatpush1.msra.mxu0 0.0
    %1056 = vmatprep.subr.mxu0 0.0
    %1057 = vmatpush1.msra.mxu0 0.0
    %1058 = vmatprep.mubr.f32.mxu0 0.0
    %1059 = vmatmul.mubr.f32.gmra.mrb[0].mxu0 %v992
    %v1060 = vpop.f32.mrb[0].mxu0
    %v1061 = vadd.f32 0.0, %v1060
    %v1062 = vpop.f32.mrb[0].mxu0
    %1063 = vdwg.mxu0
    %1065 = vset.pattern.permute.xlu0 0
    %1066 = vperm.xlu0 %1065, %v990
    %v1067 = vpop.permute.xlu0 %1066
    %v1070 = vlaneseq
    %v1071 = vshrl.u32 %v1070, 7
    %v1072 = vsub.s32 0, %v1071
    %v1073 = vrot.slane %v982, %v1072
    %v1075 = vmul.f32 %v1067, %v1073
    %v1076 = vadd.f32 %v1075, %v1061
    %v1078 = vlaneseq
    %v1079 = vshrl.u32 %v1078, 7
    %v1080 = vsub.s32 0, %v1079
    %v1081 = vrot.slane %v984, %v1080
    %v1083 = vadd.f32 %v1076, %v1081
    %v1084 = vxor.u32 %v1083, 2147483648
    %v1085 = vmul.f32 %v1084, 1.442695
    %v1086 = vpow.pop %v1085
    %v1087 = vadd.f32 %v1086, 1.0
    %v1088 = vrcp.pop %v1087
    %v1089 = vmul.f32 1.0, %v1088
    %v1091 = vlaneseq
    %v1092 = vshrl.u32 %v1091, 7
    %v1093 = vsub.s32 0, %v1092
    %v1094 = vrot.slane %v986, %v1093
    %1095 = vrot.lane.b32.xlu0 %v1094, 64
    %v1096 = vpop.permute.xlu0 %1095
    %v1098 = vadd.f32 %v1075, %v1096
    %v1100 = vlaneseq
    %v1101 = vshrl.u32 %v1100, 7
    %v1102 = vsub.s32 0, %v1101
    %v1103 = vrot.slane %v988, %v1102
    %1104 = vrot.lane.b32.xlu0 %v1103, 64
    %v1105 = vpop.permute.xlu0 %1104
    %v1107 = vadd.f32 %v1061, %v1105
    %1109 = vrot.lane.b32.xlu0 %v1107, 64
    %v1110 = vpop.permute.xlu0 %1109
    %v1112 = vmul.f32 %v1089, %v1110
    %1114 = vrot.lane.b32.xlu0 %v1112, 64
    %v1115 = vpop.permute.xlu0 %1114
    %v1117 = vadd.f32 %v1098, %v1115
    %v1118 = vtanh.pop %v1117
    %v1119 = vsub.f32 1.0, %v1089
    %1121 = vrot.lane.b32.xlu0 %v1118, 96
    %v1122 = vpop.permute.xlu0 %1121
    %v1124 = vmul.f32 %v1119, %v1122
    %1125 = vrot.lane.b32.xlu0 %v975, 32
    %v1126 = vpop.permute.xlu0 %1125
    %v1128 = vmul.f32 %v1089, %v1126
    %v1129 = vadd.f32 %v1124, %v1128
    %1131 = vrot.lane.b32.xlu0 %v1129, 96
    %v1132 = vpop.permute.xlu0 %1131
    %v1133 = vsel %vm66, %v1132, 0
    %1135 = vmatprep.subr.mxu0 0.0
    %1136 = vmatpush1.msra.mxu0 %v977
    %1137 = vmatprep.subr.mxu0 0.0
    %1138 = vmatpush1.msra.mxu0 %v978
    %1139 = vmatprep.subr.mxu0 0.0
    %1140 = vmatpush1.msra.mxu0 %v979
    %1141 = vmatprep.subr.mxu0 0.0
    %1142 = vmatpush1.msra.mxu0 %v980
    %1143 = vmatprep.subr.mxu0 0.0
    %1144 = vmatpush1.msra.mxu0 0.0
    %1145 = vmatprep.subr.mxu0 0.0
    %1146 = vmatpush1.msra.mxu0 0.0
    %1147 = vmatprep.subr.mxu0 0.0
    %1148 = vmatpush1.msra.mxu0 0.0
    %1149 = vmatprep.subr.mxu0 0.0
    %1150 = vmatpush1.msra.mxu0 0.0
    %1151 = vmatprep.subr.mxu0 0.0
    %1152 = vmatpush1.msra.mxu0 0.0
    %1153 = vmatprep.subr.mxu0 0.0
    %1154 = vmatpush1.msra.mxu0 0.0
    %1155 = vmatprep.subr.mxu0 0.0
    %1156 = vmatpush1.msra.mxu0 0.0
    %1157 = vmatprep.subr.mxu0 0.0
    %1158 = vmatpush1.msra.mxu0 0.0
    %1159 = vmatprep.subr.mxu0 0.0
    %1160 = vmatpush1.msra.mxu0 0.0
    %1161 = vmatprep.subr.mxu0 0.0
    %1162 = vmatpush1.msra.mxu0 0.0
    %1163 = vmatprep.subr.mxu0 0.0
    %1164 = vmatpush1.msra.mxu0 0.0
    %1165 = vmatprep.subr.mxu0 0.0
    %1166 = vmatpush1.msra.mxu0 0.0
    %1167 = vmatprep.subr.mxu0 0.0
    %1168 = vmatpush1.msra.mxu0 0.0
    %1169 = vmatprep.subr.mxu0 0.0
    %1170 = vmatpush1.msra.mxu0 0.0
    %1171 = vmatprep.subr.mxu0 0.0
    %1172 = vmatpush1.msra.mxu0 0.0
    %1173 = vmatprep.subr.mxu0 0.0
    %1174 = vmatpush1.msra.mxu0 0.0
    %1175 = vmatprep.subr.mxu0 0.0
    %1176 = vmatpush1.msra.mxu0 0.0
    %1177 = vmatprep.subr.mxu0 0.0
    %1178 = vmatpush1.msra.mxu0 0.0
    %1179 = vmatprep.subr.mxu0 0.0
    %1180 = vmatpush1.msra.mxu0 0.0
    %1181 = vmatprep.subr.mxu0 0.0
    %1182 = vmatpush1.msra.mxu0 0.0
    %1183 = vmatprep.subr.mxu0 0.0
    %1184 = vmatpush1.msra.mxu0 0.0
    %1185 = vmatprep.subr.mxu0 0.0
    %1186 = vmatpush1.msra.mxu0 0.0
    %1187 = vmatprep.subr.mxu0 0.0
    %1188 = vmatpush1.msra.mxu0 0.0
    %1189 = vmatprep.subr.mxu0 0.0
    %1190 = vmatpush1.msra.mxu0 0.0
    %1191 = vmatprep.subr.mxu0 0.0
    %1192 = vmatpush1.msra.mxu0 0.0
    %1193 = vmatprep.subr.mxu0 0.0
    %1194 = vmatpush1.msra.mxu0 0.0
    %1195 = vmatprep.subr.mxu0 0.0
    %1196 = vmatpush1.msra.mxu0 0.0
    %1197 = vmatprep.subr.mxu0 0.0
    %1198 = vmatpush1.msra.mxu0 0.0
    %1199 = vmatprep.mubr.f32.mxu0 0.0
    %1200 = vmatmul.mubr.f32.gmra.mrb[0].mxu0 %v1133
    %v1201 = vpop.f32.mrb[0].mxu0
    %v1202 = vadd.f32 0.0, %v1201
    %v1203 = vpop.f32.mrb[0].mxu0
    %1204 = vdwg.mxu0
    %1205 = vset.pattern.permute.xlu0 1
    %1206 = vperm.xlu0 %1205, %v990
    %v1207 = vpop.permute.xlu0 %1206
    %v1209 = vmul.f32 %v1207, %v1073
    %v1210 = vadd.f32 %v1209, %v1202
    %v1211 = vadd.f32 %v1210, %v1081
    %v1212 = vxor.u32 %v1211, 2147483648
    %v1213 = vmul.f32 %v1212, 1.442695
    %v1214 = vpow.pop %v1213
    %v1215 = vadd.f32 %v1214, 1.0
    %v1216 = vrcp.pop %v1215
    %v1217 = vmul.f32 1.0, %v1216
    %v1218 = vadd.f32 %v1209, %v1096
    %v1219 = vadd.f32 %v1202, %v1105
    %1221 = vrot.lane.b32.xlu0 %v1219, 64
    %v1222 = vpop.permute.xlu0 %1221
    %v1224 = vmul.f32 %v1217, %v1222
    %1226 = vrot.lane.b32.xlu0 %v1224, 64
    %v1227 = vpop.permute.xlu0 %1226
    %v1229 = vadd.f32 %v1218, %v1227
    %v1230 = vtanh.pop %v1229
    %v1231 = vsub.f32 1.0, %v1217
    %1233 = vrot.lane.b32.xlu0 %v1230, 96
    %v1234 = vpop.permute.xlu0 %1233
    %v1236 = vmul.f32 %v1231, %v1234
    %v1237 = vmul.f32 %v1217, %v1129
    %v1238 = vadd.f32 %v1236, %v1237
    %1240 = vrot.lane.b32.xlu0 %v1238, 96
    %v1241 = vpop.permute.xlu0 %1240
    %v1242 = vsel %vm66, %v1241, 0
    %1244 = vmatprep.subr.mxu0 0.0
    %1245 = vmatpush1.msra.mxu0 %v977
    %1246 = vmatprep.subr.mxu0 0.0
    %1247 = vmatpush1.msra.mxu0 %v978
    %1248 = vmatprep.subr.mxu0 0.0
    %1249 = vmatpush1.msra.mxu0 %v979
    %1250 = vmatprep.subr.mxu0 0.0
    %1251 = vmatpush1.msra.mxu0 %v980
    %1252 = vmatprep.subr.mxu0 0.0
    %1253 = vmatpush1.msra.mxu0 0.0
    %1254 = vmatprep.subr.mxu0 0.0
    %1255 = vmatpush1.msra.mxu0 0.0
    %1256 = vmatprep.subr.mxu0 0.0
    %1257 = vmatpush1.msra.mxu0 0.0
    %1258 = vmatprep.subr.mxu0 0.0
    %1259 = vmatpush1.msra.mxu0 0.0
    %1260 = vmatprep.subr.mxu0 0.0
    %1261 = vmatpush1.msra.mxu0 0.0
    %1262 = vmatprep.subr.mxu0 0.0
    %1263 = vmatpush1.msra.mxu0 0.0
    %1264 = vmatprep.subr.mxu0 0.0
    %1265 = vmatpush1.msra.mxu0 0.0
    %1266 = vmatprep.subr.mxu0 0.0
    %1267 = vmatpush1.msra.mxu0 0.0
    %1268 = vmatprep.subr.mxu0 0.0
    %1269 = vmatpush1.msra.mxu0 0.0
    %1270 = vmatprep.subr.mxu0 0.0
    %1271 = vmatpush1.msra.mxu0 0.0
    %1272 = vmatprep.subr.mxu0 0.0
    %1273 = vmatpush1.msra.mxu0 0.0
    %1274 = vmatprep.subr.mxu0 0.0
    %1275 = vmatpush1.msra.mxu0 0.0
    %1276 = vmatprep.subr.mxu0 0.0
    %1277 = vmatpush1.msra.mxu0 0.0
    %1278 = vmatprep.subr.mxu0 0.0
    %1279 = vmatpush1.msra.mxu0 0.0
    %1280 = vmatprep.subr.mxu0 0.0
    %1281 = vmatpush1.msra.mxu0 0.0
    %1282 = vmatprep.subr.mxu0 0.0
    %1283 = vmatpush1.msra.mxu0 0.0
    %1284 = vmatprep.subr.mxu0 0.0
    %1285 = vmatpush1.msra.mxu0 0.0
    %1286 = vmatprep.subr.mxu0 0.0
    %1287 = vmatpush1.msra.mxu0 0.0
    %1288 = vmatprep.subr.mxu0 0.0
    %1289 = vmatpush1.msra.mxu0 0.0
    %1290 = vmatprep.subr.mxu0 0.0
    %1291 = vmatpush1.msra.mxu0 0.0
    %1292 = vmatprep.subr.mxu0 0.0
    %1293 = vmatpush1.msra.mxu0 0.0
    %1294 = vmatprep.subr.mxu0 0.0
    %1295 = vmatpush1.msra.mxu0 0.0
    %1296 = vmatprep.subr.mxu0 0.0
    %1297 = vmatpush1.msra.mxu0 0.0
    %1298 = vmatprep.subr.mxu0 0.0
    %1299 = vmatpush1.msra.mxu0 0.0
    %1300 = vmatprep.subr.mxu0 0.0
    %1301 = vmatpush1.msra.mxu0 0.0
    %1302 = vmatprep.subr.mxu0 0.0
    %1303 = vmatpush1.msra.mxu0 0.0
    %1304 = vmatprep.subr.mxu0 0.0
    %1305 = vmatpush1.msra.mxu0 0.0
    %1306 = vmatprep.subr.mxu0 0.0
    %1307 = vmatpush1.msra.mxu0 0.0
    %1308 = vmatprep.mubr.f32.mxu0 0.0
    %1309 = vmatmul.mubr.f32.gmra.mrb[0].mxu0 %v1242
    %v1310 = vpop.f32.mrb[0].mxu0
    %v1311 = vadd.f32 0.0, %v1310
    %v1312 = vpop.f32.mrb[0].mxu0
    %1313 = vdwg.mxu0
    %1314 = vset.pattern.permute.xlu0 2
    %1315 = vperm.xlu0 %1314, %v990
    %v1316 = vpop.permute.xlu0 %1315
    %v1318 = vmul.f32 %v1316, %v1073
    %v1319 = vadd.f32 %v1318, %v1311
    %v1320 = vadd.f32 %v1319, %v1081
    %v1321 = vxor.u32 %v1320, 2147483648
    %v1322 = vmul.f32 %v1321, 1.442695
    %v1323 = vpow.pop %v1322
    %v1324 = vadd.f32 %v1323, 1.0
    %v1325 = vrcp.pop %v1324
    %v1326 = vmul.f32 1.0, %v1325
    %v1327 = vadd.f32 %v1318, %v1096
    %v1328 = vadd.f32 %v1311, %v1105
    %1330 = vrot.lane.b32.xlu0 %v1328, 64
    %v1331 = vpop.permute.xlu0 %1330
    %v1333 = vmul.f32 %v1326, %v1331
    %1335 = vrot.lane.b32.xlu0 %v1333, 64
    %v1336 = vpop.permute.xlu0 %1335
    %v1338 = vadd.f32 %v1327, %v1336
    %v1339 = vtanh.pop %v1338
    %v1340 = vsub.f32 1.0, %v1326
    %1342 = vrot.lane.b32.xlu0 %v1339, 96
    %v1343 = vpop.permute.xlu0 %1342
    %v1345 = vmul.f32 %v1340, %v1343
    %v1346 = vmul.f32 %v1326, %v1238
    %v1347 = vadd.f32 %v1345, %v1346
    %1349 = vrot.lane.b32.xlu0 %v1347, 96
    %v1350 = vpop.permute.xlu0 %1349
    %v1351 = vsel %vm66, %v1350, 0
    %1353 = vmatprep.subr.mxu0 0.0
    %1354 = vmatpush1.msra.mxu0 %v977
    %1355 = vmatprep.subr.mxu0 0.0
    %1356 = vmatpush1.msra.mxu0 %v978
    %1357 = vmatprep.subr.mxu0 0.0
    %1358 = vmatpush1.msra.mxu0 %v979
    %1359 = vmatprep.subr.mxu0 0.0
    %1360 = vmatpush1.msra.mxu0 %v980
    %1361 = vmatprep.subr.mxu0 0.0
    %1362 = vmatpush1.msra.mxu0 0.0
    %1363 = vmatprep.subr.mxu0 0.0
    %1364 = vmatpush1.msra.mxu0 0.0
    %1365 = vmatprep.subr.mxu0 0.0
    %1366 = vmatpush1.msra.mxu0 0.0
    %1367 = vmatprep.subr.mxu0 0.0
    %1368 = vmatpush1.msra.mxu0 0.0
    %1369 = vmatprep.subr.mxu0 0.0
    %1370 = vmatpush1.msra.mxu0 0.0
    %1371 = vmatprep.subr.mxu0 0.0
    %1372 = vmatpush1.msra.mxu0 0.0
    %1373 = vmatprep.subr.mxu0 0.0
    %1374 = vmatpush1.msra.mxu0 0.0
    %1375 = vmatprep.subr.mxu0 0.0
    %1376 = vmatpush1.msra.mxu0 0.0
    %1377 = vmatprep.subr.mxu0 0.0
    %1378 = vmatpush1.msra.mxu0 0.0
    %1379 = vmatprep.subr.mxu0 0.0
    %1380 = vmatpush1.msra.mxu0 0.0
    %1381 = vmatprep.subr.mxu0 0.0
    %1382 = vmatpush1.msra.mxu0 0.0
    %1383 = vmatprep.subr.mxu0 0.0
    %1384 = vmatpush1.msra.mxu0 0.0
    %1385 = vmatprep.subr.mxu0 0.0
    %1386 = vmatpush1.msra.mxu0 0.0
    %1387 = vmatprep.subr.mxu0 0.0
    %1388 = vmatpush1.msra.mxu0 0.0
    %1389 = vmatprep.subr.mxu0 0.0
    %1390 = vmatpush1.msra.mxu0 0.0
    %1391 = vmatprep.subr.mxu0 0.0
    %1392 = vmatpush1.msra.mxu0 0.0
    %1393 = vmatprep.subr.mxu0 0.0
    %1394 = vmatpush1.msra.mxu0 0.0
    %1395 = vmatprep.subr.mxu0 0.0
    %1396 = vmatpush1.msra.mxu0 0.0
    %1397 = vmatprep.subr.mxu0 0.0
    %1398 = vmatpush1.msra.mxu0 0.0
    %1399 = vmatprep.subr.mxu0 0.0
    %1400 = vmatpush1.msra.mxu0 0.0
    %1401 = vmatprep.subr.mxu0 0.0
    %1402 = vmatpush1.msra.mxu0 0.0
    %1403 = vmatprep.subr.mxu0 0.0
    %1404 = vmatpush1.msra.mxu0 0.0
    %1405 = vmatprep.subr.mxu0 0.0
    %1406 = vmatpush1.msra.mxu0 0.0
    %1407 = vmatprep.subr.mxu0 0.0
    %1408 = vmatpush1.msra.mxu0 0.0
    %1409 = vmatprep.subr.mxu0 0.0
    %1410 = vmatpush1.msra.mxu0 0.0
    %1411 = vmatprep.subr.mxu0 0.0
    %1412 = vmatpush1.msra.mxu0 0.0
    %1413 = vmatprep.subr.mxu0 0.0
    %1414 = vmatpush1.msra.mxu0 0.0
    %1415 = vmatprep.subr.mxu0 0.0
    %1416 = vmatpush1.msra.mxu0 0.0
    %1417 = vmatprep.mubr.f32.mxu0 0.0
    %1418 = vmatmul.mubr.f32.gmra.mrb[0].mxu0 %v1351
    %v1419 = vpop.f32.mrb[0].mxu0
    %v1420 = vadd.f32 0.0, %v1419
    %v1421 = vpop.f32.mrb[0].mxu0
    %1422 = vdwg.mxu0
    %1423 = vset.pattern.permute.xlu0 3
    %1424 = vperm.xlu0 %1423, %v990
    %v1425 = vpop.permute.xlu0 %1424
    %v1427 = vmul.f32 %v1425, %v1073
    %v1428 = vadd.f32 %v1427, %v1420
    %v1429 = vadd.f32 %v1428, %v1081
    %v1430 = vxor.u32 %v1429, 2147483648
    %v1431 = vmul.f32 %v1430, 1.442695
    %v1432 = vpow.pop %v1431
    %v1433 = vadd.f32 %v1432, 1.0
    %v1434 = vrcp.pop %v1433
    %v1435 = vmul.f32 1.0, %v1434
    %v1436 = vadd.f32 %v1427, %v1096
    %v1437 = vadd.f32 %v1420, %v1105
    %1439 = vrot.lane.b32.xlu0 %v1437, 64
    %v1440 = vpop.permute.xlu0 %1439
    %v1442 = vmul.f32 %v1435, %v1440
    %1444 = vrot.lane.b32.xlu0 %v1442, 64
    %v1445 = vpop.permute.xlu0 %1444
    %v1447 = vadd.f32 %v1436, %v1445
    %v1448 = vtanh.pop %v1447
    %v1449 = vsub.f32 1.0, %v1435
    %1451 = vrot.lane.b32.xlu0 %v1448, 96
    %v1452 = vpop.permute.xlu0 %1451
    %v1454 = vmul.f32 %v1449, %v1452
    %v1455 = vmul.f32 %v1435, %v1347
    %v1456 = vadd.f32 %v1454, %v1455
    %1458 = vrot.lane.b32.xlu0 %v1456, 96
    %v1459 = vpop.permute.xlu0 %1458
    %v1460 = vsel %vm66, %v1459, 0
    %1462 = vmatprep.subr.mxu0 0.0
    %1463 = vmatpush1.msra.mxu0 %v977
    %1464 = vmatprep.subr.mxu0 0.0
    %1465 = vmatpush1.msra.mxu0 %v978
    %1466 = vmatprep.subr.mxu0 0.0
    %1467 = vmatpush1.msra.mxu0 %v979
    %1468 = vmatprep.subr.mxu0 0.0
    %1469 = vmatpush1.msra.mxu0 %v980
    %1470 = vmatprep.subr.mxu0 0.0
    %1471 = vmatpush1.msra.mxu0 0.0
    %1472 = vmatprep.subr.mxu0 0.0
    %1473 = vmatpush1.msra.mxu0 0.0
    %1474 = vmatprep.subr.mxu0 0.0
    %1475 = vmatpush1.msra.mxu0 0.0
    %1476 = vmatprep.subr.mxu0 0.0
    %1477 = vmatpush1.msra.mxu0 0.0
    %1478 = vmatprep.subr.mxu0 0.0
    %1479 = vmatpush1.msra.mxu0 0.0
    %1480 = vmatprep.subr.mxu0 0.0
    %1481 = vmatpush1.msra.mxu0 0.0
    %1482 = vmatprep.subr.mxu0 0.0
    %1483 = vmatpush1.msra.mxu0 0.0
    %1484 = vmatprep.subr.mxu0 0.0
    %1485 = vmatpush1.msra.mxu0 0.0
    %1486 = vmatprep.subr.mxu0 0.0
    %1487 = vmatpush1.msra.mxu0 0.0
    %1488 = vmatprep.subr.mxu0 0.0
    %1489 = vmatpush1.msra.mxu0 0.0
    %1490 = vmatprep.subr.mxu0 0.0
    %1491 = vmatpush1.msra.mxu0 0.0
    %1492 = vmatprep.subr.mxu0 0.0
    %1493 = vmatpush1.msra.mxu0 0.0
    %1494 = vmatprep.subr.mxu0 0.0
    %1495 = vmatpush1.msra.mxu0 0.0
    %1496 = vmatprep.subr.mxu0 0.0
    %1497 = vmatpush1.msra.mxu0 0.0
    %1498 = vmatprep.subr.mxu0 0.0
    %1499 = vmatpush1.msra.mxu0 0.0
    %1500 = vmatprep.subr.mxu0 0.0
    %1501 = vmatpush1.msra.mxu0 0.0
    %1502 = vmatprep.subr.mxu0 0.0
    %1503 = vmatpush1.msra.mxu0 0.0
    %1504 = vmatprep.subr.mxu0 0.0
    %1505 = vmatpush1.msra.mxu0 0.0
    %1506 = vmatprep.subr.mxu0 0.0
    %1507 = vmatpush1.msra.mxu0 0.0
    %1508 = vmatprep.subr.mxu0 0.0
    %1509 = vmatpush1.msra.mxu0 0.0
    %1510 = vmatprep.subr.mxu0 0.0
    %1511 = vmatpush1.msra.mxu0 0.0
    %1512 = vmatprep.subr.mxu0 0.0
    %1513 = vmatpush1.msra.mxu0 0.0
    %1514 = vmatprep.subr.mxu0 0.0
    %1515 = vmatpush1.msra.mxu0 0.0
    %1516 = vmatprep.subr.mxu0 0.0
    %1517 = vmatpush1.msra.mxu0 0.0
    %1518 = vmatprep.subr.mxu0 0.0
    %1519 = vmatpush1.msra.mxu0 0.0
    %1520 = vmatprep.subr.mxu0 0.0
    %1521 = vmatpush1.msra.mxu0 0.0
    %1522 = vmatprep.subr.mxu0 0.0
    %1523 = vmatpush1.msra.mxu0 0.0
    %1524 = vmatprep.subr.mxu0 0.0
    %1525 = vmatpush1.msra.mxu0 0.0
    %1526 = vmatprep.mubr.f32.mxu0 0.0
    %1527 = vmatmul.mubr.f32.gmra.mrb[0].mxu0 %v1460
    %v1528 = vpop.f32.mrb[0].mxu0
    %v1529 = vadd.f32 0.0, %v1528
    %v1530 = vpop.f32.mrb[0].mxu0
    %1531 = vdwg.mxu0
    %1532 = vset.pattern.permute.xlu0 4
    %1533 = vperm.xlu0 %1532, %v990
    %v1534 = vpop.permute.xlu0 %1533
    %v1536 = vmul.f32 %v1534, %v1073
    %v1537 = vadd.f32 %v1536, %v1529
    %v1538 = vadd.f32 %v1537, %v1081
    %v1539 = vxor.u32 %v1538, 2147483648
    %v1540 = vmul.f32 %v1539, 1.442695
    %v1541 = vpow.pop %v1540
    %v1542 = vadd.f32 %v1541, 1.0
    %v1543 = vrcp.pop %v1542
    %v1544 = vmul.f32 1.0, %v1543
    %v1545 = vadd.f32 %v1536, %v1096
    %v1546 = vadd.f32 %v1529, %v1105
    %1548 = vrot.lane.b32.xlu0 %v1546, 64
    %v1549 = vpop.permute.xlu0 %1548
    %v1551 = vmul.f32 %v1544, %v1549
    %1553 = vrot.lane.b32.xlu0 %v1551, 64
    %v1554 = vpop.permute.xlu0 %1553
    %v1556 = vadd.f32 %v1545, %v1554
    %v1557 = vtanh.pop %v1556
    %v1558 = vsub.f32 1.0, %v1544
    %1560 = vrot.lane.b32.xlu0 %v1557, 96
    %v1561 = vpop.permute.xlu0 %1560
    %v1563 = vmul.f32 %v1558, %v1561
    %v1564 = vmul.f32 %v1544, %v1456
    %v1565 = vadd.f32 %v1563, %v1564
    %1567 = vrot.lane.b32.xlu0 %v1565, 96
    %v1568 = vpop.permute.xlu0 %1567
    %v1569 = vsel %vm66, %v1568, 0
    %1571 = vmatprep.subr.mxu0 0.0
    %1572 = vmatpush1.msra.mxu0 %v977
    %1573 = vmatprep.subr.mxu0 0.0
    %1574 = vmatpush1.msra.mxu0 %v978
    %1575 = vmatprep.subr.mxu0 0.0
    %1576 = vmatpush1.msra.mxu0 %v979
    %1577 = vmatprep.subr.mxu0 0.0
    %1578 = vmatpush1.msra.mxu0 %v980
    %1579 = vmatprep.subr.mxu0 0.0
    %1580 = vmatpush1.msra.mxu0 0.0
    %1581 = vmatprep.subr.mxu0 0.0
    %1582 = vmatpush1.msra.mxu0 0.0
    %1583 = vmatprep.subr.mxu0 0.0
    %1584 = vmatpush1.msra.mxu0 0.0
    %1585 = vmatprep.subr.mxu0 0.0
    %1586 = vmatpush1.msra.mxu0 0.0
    %1587 = vmatprep.subr.mxu0 0.0
    %1588 = vmatpush1.msra.mxu0 0.0
    %1589 = vmatprep.subr.mxu0 0.0
    %1590 = vmatpush1.msra.mxu0 0.0
    %1591 = vmatprep.subr.mxu0 0.0
    %1592 = vmatpush1.msra.mxu0 0.0
    %1593 = vmatprep.subr.mxu0 0.0
    %1594 = vmatpush1.msra.mxu0 0.0
    %1595 = vmatprep.subr.mxu0 0.0
    %1596 = vmatpush1.msra.mxu0 0.0
    %1597 = vmatprep.subr.mxu0 0.0
    %1598 = vmatpush1.msra.mxu0 0.0
    %1599 = vmatprep.subr.mxu0 0.0
    %1600 = vmatpush1.msra.mxu0 0.0
    %1601 = vmatprep.subr.mxu0 0.0
    %1602 = vmatpush1.msra.mxu0 0.0
    %1603 = vmatprep.subr.mxu0 0.0
    %1604 = vmatpush1.msra.mxu0 0.0
    %1605 = vmatprep.subr.mxu0 0.0
    %1606 = vmatpush1.msra.mxu0 0.0
    %1607 = vmatprep.subr.mxu0 0.0
    %1608 = vmatpush1.msra.mxu0 0.0
    %1609 = vmatprep.subr.mxu0 0.0
    %1610 = vmatpush1.msra.mxu0 0.0
    %1611 = vmatprep.subr.mxu0 0.0
    %1612 = vmatpush1.msra.mxu0 0.0
    %1613 = vmatprep.subr.mxu0 0.0
    %1614 = vmatpush1.msra.mxu0 0.0
    %1615 = vmatprep.subr.mxu0 0.0
    %1616 = vmatpush1.msra.mxu0 0.0
    %1617 = vmatprep.subr.mxu0 0.0
    %1618 = vmatpush1.msra.mxu0 0.0
    %1619 = vmatprep.subr.mxu0 0.0
    %1620 = vmatpush1.msra.mxu0 0.0
    %1621 = vmatprep.subr.mxu0 0.0
    %1622 = vmatpush1.msra.mxu0 0.0
    %1623 = vmatprep.subr.mxu0 0.0
    %1624 = vmatpush1.msra.mxu0 0.0
    %1625 = vmatprep.subr.mxu0 0.0
    %1626 = vmatpush1.msra.mxu0 0.0
    %1627 = vmatprep.subr.mxu0 0.0
    %1628 = vmatpush1.msra.mxu0 0.0
    %1629 = vmatprep.subr.mxu0 0.0
    %1630 = vmatpush1.msra.mxu0 0.0
    %1631 = vmatprep.subr.mxu0 0.0
    %1632 = vmatpush1.msra.mxu0 0.0
    %1633 = vmatprep.subr.mxu0 0.0
    %1634 = vmatpush1.msra.mxu0 0.0
    %1635 = vmatprep.mubr.f32.mxu0 0.0
    %1636 = vmatmul.mubr.f32.gmra.mrb[0].mxu0 %v1569
    %v1637 = vpop.f32.mrb[0].mxu0
    %v1638 = vadd.f32 0.0, %v1637
    %v1639 = vpop.f32.mrb[0].mxu0
    %1640 = vdwg.mxu0
    %1641 = vset.pattern.permute.xlu0 5
    %1642 = vperm.xlu0 %1641, %v990
    %v1643 = vpop.permute.xlu0 %1642
    %v1645 = vmul.f32 %v1643, %v1073
    %v1646 = vadd.f32 %v1645, %v1638
    %v1647 = vadd.f32 %v1646, %v1081
    %v1648 = vxor.u32 %v1647, 2147483648
    %v1649 = vmul.f32 %v1648, 1.442695
    %v1650 = vpow.pop %v1649
    %v1651 = vadd.f32 %v1650, 1.0
    %v1652 = vrcp.pop %v1651
    %v1653 = vmul.f32 1.0, %v1652
    %v1654 = vadd.f32 %v1645, %v1096
    %v1655 = vadd.f32 %v1638, %v1105
    %1657 = vrot.lane.b32.xlu0 %v1655, 64
    %v1658 = vpop.permute.xlu0 %1657
    %v1660 = vmul.f32 %v1653, %v1658
    %1662 = vrot.lane.b32.xlu0 %v1660, 64
    %v1663 = vpop.permute.xlu0 %1662
    %v1665 = vadd.f32 %v1654, %v1663
    %v1666 = vtanh.pop %v1665
    %v1667 = vsub.f32 1.0, %v1653
    %1669 = vrot.lane.b32.xlu0 %v1666, 96
    %v1670 = vpop.permute.xlu0 %1669
    %v1672 = vmul.f32 %v1667, %v1670
    %v1673 = vmul.f32 %v1653, %v1565
    %v1674 = vadd.f32 %v1672, %v1673
    %1676 = vrot.lane.b32.xlu0 %v1674, 96
    %v1677 = vpop.permute.xlu0 %1676
    %v1678 = vsel %vm66, %v1677, 0
    %1680 = vmatprep.subr.mxu0 0.0
    %1681 = vmatpush1.msra.mxu0 %v977
    %1682 = vmatprep.subr.mxu0 0.0
    %1683 = vmatpush1.msra.mxu0 %v978
    %1684 = vmatprep.subr.mxu0 0.0
    %1685 = vmatpush1.msra.mxu0 %v979
    %1686 = vmatprep.subr.mxu0 0.0
    %1687 = vmatpush1.msra.mxu0 %v980
    %1688 = vmatprep.subr.mxu0 0.0
    %1689 = vmatpush1.msra.mxu0 0.0
    %1690 = vmatprep.subr.mxu0 0.0
    %1691 = vmatpush1.msra.mxu0 0.0
    %1692 = vmatprep.subr.mxu0 0.0
    %1693 = vmatpush1.msra.mxu0 0.0
    %1694 = vmatprep.subr.mxu0 0.0
    %1695 = vmatpush1.msra.mxu0 0.0
    %1696 = vmatprep.subr.mxu0 0.0
    %1697 = vmatpush1.msra.mxu0 0.0
    %1698 = vmatprep.subr.mxu0 0.0
    %1699 = vmatpush1.msra.mxu0 0.0
    %1700 = vmatprep.subr.mxu0 0.0
    %1701 = vmatpush1.msra.mxu0 0.0
    %1702 = vmatprep.subr.mxu0 0.0
    %1703 = vmatpush1.msra.mxu0 0.0
    %1704 = vmatprep.subr.mxu0 0.0
    %1705 = vmatpush1.msra.mxu0 0.0
    %1706 = vmatprep.subr.mxu0 0.0
    %1707 = vmatpush1.msra.mxu0 0.0
    %1708 = vmatprep.subr.mxu0 0.0
    %1709 = vmatpush1.msra.mxu0 0.0
    %1710 = vmatprep.subr.mxu0 0.0
    %1711 = vmatpush1.msra.mxu0 0.0
    %1712 = vmatprep.subr.mxu0 0.0
    %1713 = vmatpush1.msra.mxu0 0.0
    %1714 = vmatprep.subr.mxu0 0.0
    %1715 = vmatpush1.msra.mxu0 0.0
    %1716 = vmatprep.subr.mxu0 0.0
    %1717 = vmatpush1.msra.mxu0 0.0
    %1718 = vmatprep.subr.mxu0 0.0
    %1719 = vmatpush1.msra.mxu0 0.0
    %1720 = vmatprep.subr.mxu0 0.0
    %1721 = vmatpush1.msra.mxu0 0.0
    %1722 = vmatprep.subr.mxu0 0.0
    %1723 = vmatpush1.msra.mxu0 0.0
    %1724 = vmatprep.subr.mxu0 0.0
    %1725 = vmatpush1.msra.mxu0 0.0
    %1726 = vmatprep.subr.mxu0 0.0
    %1727 = vmatpush1.msra.mxu0 0.0
    %1728 = vmatprep.subr.mxu0 0.0
    %1729 = vmatpush1.msra.mxu0 0.0
    %1730 = vmatprep.subr.mxu0 0.0
    %1731 = vmatpush1.msra.mxu0 0.0
    %1732 = vmatprep.subr.mxu0 0.0
    %1733 = vmatpush1.msra.mxu0 0.0
    %1734 = vmatprep.subr.mxu0 0.0
    %1735 = vmatpush1.msra.mxu0 0.0
    %1736 = vmatprep.subr.mxu0 0.0
    %1737 = vmatpush1.msra.mxu0 0.0
    %1738 = vmatprep.subr.mxu0 0.0
    %1739 = vmatpush1.msra.mxu0 0.0
    %1740 = vmatprep.subr.mxu0 0.0
    %1741 = vmatpush1.msra.mxu0 0.0
    %1742 = vmatprep.subr.mxu0 0.0
    %1743 = vmatpush1.msra.mxu0 0.0
    %1744 = vmatprep.mubr.f32.mxu0 0.0
    %1745 = vmatmul.mubr.f32.gmra.mrb[0].mxu0 %v1678
    %v1746 = vpop.f32.mrb[0].mxu0
    %v1747 = vadd.f32 0.0, %v1746
    %v1748 = vpop.f32.mrb[0].mxu0
    %1749 = vdwg.mxu0
    %1750 = vset.pattern.permute.xlu0 6
    %1751 = vperm.xlu0 %1750, %v990
    %v1752 = vpop.permute.xlu0 %1751
    %v1754 = vmul.f32 %v1752, %v1073
    %v1755 = vadd.f32 %v1754, %v1747
    %v1756 = vadd.f32 %v1755, %v1081
    %v1757 = vxor.u32 %v1756, 2147483648
    %v1758 = vmul.f32 %v1757, 1.442695
    %v1759 = vpow.pop %v1758
    %v1760 = vadd.f32 %v1759, 1.0
    %v1761 = vrcp.pop %v1760
    %v1762 = vmul.f32 1.0, %v1761
    %v1763 = vadd.f32 %v1754, %v1096
    %v1764 = vadd.f32 %v1747, %v1105
    %1766 = vrot.lane.b32.xlu0 %v1764, 64
    %v1767 = vpop.permute.xlu0 %1766
    %v1769 = vmul.f32 %v1762, %v1767
    %1771 = vrot.lane.b32.xlu0 %v1769, 64
    %v1772 = vpop.permute.xlu0 %1771
    %v1774 = vadd.f32 %v1763, %v1772
    %v1775 = vtanh.pop %v1774
    %v1776 = vsub.f32 1.0, %v1762
    %1778 = vrot.lane.b32.xlu0 %v1775, 96
    %v1779 = vpop.permute.xlu0 %1778
    %v1781 = vmul.f32 %v1776, %v1779
    %v1782 = vmul.f32 %v1762, %v1674
    %v1783 = vadd.f32 %v1781, %v1782
    %1785 = vrot.lane.b32.xlu0 %v1783, 96
    %v1786 = vpop.permute.xlu0 %1785
    %v1787 = vsel %vm66, %v1786, 0
    %1789 = vmatprep.subr.mxu0 0.0
    %1790 = vmatpush1.msra.mxu0 %v977
    %1791 = vmatprep.subr.mxu0 0.0
    %1792 = vmatpush1.msra.mxu0 %v978
    %1793 = vmatprep.subr.mxu0 0.0
    %1794 = vmatpush1.msra.mxu0 %v979
    %1795 = vmatprep.subr.mxu0 0.0
    %1796 = vmatpush1.msra.mxu0 %v980
    %1797 = vmatprep.subr.mxu0 0.0
    %1798 = vmatpush1.msra.mxu0 0.0
    %1799 = vmatprep.subr.mxu0 0.0
    %1800 = vmatpush1.msra.mxu0 0.0
    %1801 = vmatprep.subr.mxu0 0.0
    %1802 = vmatpush1.msra.mxu0 0.0
    %1803 = vmatprep.subr.mxu0 0.0
    %1804 = vmatpush1.msra.mxu0 0.0
    %1805 = vmatprep.subr.mxu0 0.0
    %1806 = vmatpush1.msra.mxu0 0.0
    %1807 = vmatprep.subr.mxu0 0.0
    %1808 = vmatpush1.msra.mxu0 0.0
    %1809 = vmatprep.subr.mxu0 0.0
    %1810 = vmatpush1.msra.mxu0 0.0
    %1811 = vmatprep.subr.mxu0 0.0
    %1812 = vmatpush1.msra.mxu0 0.0
    %1813 = vmatprep.subr.mxu0 0.0
    %1814 = vmatpush1.msra.mxu0 0.0
    %1815 = vmatprep.subr.mxu0 0.0
    %1816 = vmatpush1.msra.mxu0 0.0
    %1817 = vmatprep.subr.mxu0 0.0
    %1818 = vmatpush1.msra.mxu0 0.0
    %1819 = vmatprep.subr.mxu0 0.0
    %1820 = vmatpush1.msra.mxu0 0.0
    %1821 = vmatprep.subr.mxu0 0.0
    %1822 = vmatpush1.msra.mxu0 0.0
    %1823 = vmatprep.subr.mxu0 0.0
    %1824 = vmatpush1.msra.mxu0 0.0
    %1825 = vmatprep.subr.mxu0 0.0
    %1826 = vmatpush1.msra.mxu0 0.0
    %1827 = vmatprep.subr.mxu0 0.0
    %1828 = vmatpush1.msra.mxu0 0.0
    %1829 = vmatprep.subr.mxu0 0.0
    %1830 = vmatpush1.msra.mxu0 0.0
    %1831 = vmatprep.subr.mxu0 0.0
    %1832 = vmatpush1.msra.mxu0 0.0
    %1833 = vmatprep.subr.mxu0 0.0
    %1834 = vmatpush1.msra.mxu0 0.0
    %1835 = vmatprep.subr.mxu0 0.0
    %1836 = vmatpush1.msra.mxu0 0.0
    %1837 = vmatprep.subr.mxu0 0.0
    %1838 = vmatpush1.msra.mxu0 0.0
    %1839 = vmatprep.subr.mxu0 0.0
    %1840 = vmatpush1.msra.mxu0 0.0
    %1841 = vmatprep.subr.mxu0 0.0
    %1842 = vmatpush1.msra.mxu0 0.0
    %1843 = vmatprep.subr.mxu0 0.0
    %1844 = vmatpush1.msra.mxu0 0.0
    %1845 = vmatprep.subr.mxu0 0.0
    %1846 = vmatpush1.msra.mxu0 0.0
    %1847 = vmatprep.subr.mxu0 0.0
    %1848 = vmatpush1.msra.mxu0 0.0
    %1849 = vmatprep.subr.mxu0 0.0
    %1850 = vmatpush1.msra.mxu0 0.0
    %1851 = vmatprep.subr.mxu0 0.0
    %1852 = vmatpush1.msra.mxu0 0.0
    %1853 = vmatprep.mubr.f32.mxu0 0.0
    %1854 = vmatmul.mubr.f32.gmra.mrb[0].mxu0 %v1787
    %v1855 = vpop.f32.mrb[0].mxu0
    %v1856 = vadd.f32 0.0, %v1855
    %v1857 = vpop.f32.mrb[0].mxu0
    %1858 = vdwg.mxu0
    %1859 = vset.pattern.permute.xlu0 7
    %1860 = vperm.xlu0 %1859, %v990
    %v1861 = vpop.permute.xlu0 %1860
    %v1863 = vmul.f32 %v1861, %v1073
    %v1864 = vadd.f32 %v1863, %v1856
    %v1865 = vadd.f32 %v1864, %v1081
    %v1866 = vxor.u32 %v1865, 2147483648
    %v1867 = vmul.f32 %v1866, 1.442695
    %v1868 = vpow.pop %v1867
    %v1869 = vadd.f32 %v1868, 1.0
    %v1870 = vrcp.pop %v1869
    %v1871 = vmul.f32 1.0, %v1870
    %v1872 = vadd.f32 %v1863, %v1096
    %v1873 = vadd.f32 %v1856, %v1105
    %1875 = vrot.lane.b32.xlu0 %v1873, 64
    %v1876 = vpop.permute.xlu0 %1875
    %v1878 = vmul.f32 %v1871, %v1876
    %1880 = vrot.lane.b32.xlu0 %v1878, 64
    %v1881 = vpop.permute.xlu0 %1880
    %v1883 = vadd.f32 %v1872, %v1881
    %v1884 = vtanh.pop %v1883
    %v1885 = vsub.f32 1.0, %v1871
    %1887 = vrot.lane.b32.xlu0 %v1884, 96
    %v1888 = vpop.permute.xlu0 %1887
    %v1890 = vmul.f32 %v1885, %v1888
    %v1891 = vmul.f32 %v1871, %v1783
    %v1892 = vadd.f32 %v1890, %v1891
    %1894 = vrot.lane.b32.xlu0 %v1892, 96
    %v1895 = vpop.permute.xlu0 %1894
    %1897 = vst.msk [vmem:[%s974] sm:$0xff] %vm66, %v1895
    %s1898 = scalar_lea.vmem [#allocation2], 16
    %v1899 = vld [vmem:[%s1898] sm:$0xff]
    %s1900 = scalar_lea.vmem %s3, 64
    %v1901 = vld [vmem:[%s1900] sm:$0xff]
    %v1902 = vld [vmem:[%s1900 + $0x8] sm:$0xff]
    %v1903 = vld [vmem:[%s1900 + $0x10] sm:$0xff]
    %v1904 = vld [vmem:[%s1900 + $0x18] sm:$0xff]
    %s1905 = scalar_lea.vmem %s2, 2
    %v1906 = vld [vmem:[%s1905] sm:$0x1]
    %s1907 = scalar_lea.vmem %s4, 2
    %v1908 = vld [vmem:[%s1907] sm:$0x1]
    %s1909 = scalar_lea.vmem %s5, 2
    %v1910 = vld [vmem:[%s1909] sm:$0x1]
    %s1911 = scalar_lea.vmem %s6, 2
    %v1912 = vld [vmem:[%s1911] sm:$0x1]
    %s1913 = scalar_lea.vmem %s0, 16
    %v1914 = vld [vmem:[%s1913] sm:$0xff]
    %v1916 = vsel %vm66, %v1899, 0
    %1918 = vmatprep.subr.mxu0 0.0
    %1919 = vmatpush1.msra.mxu0 %v1901
    %1920 = vmatprep.subr.mxu0 0.0
    %1921 = vmatpush1.msra.mxu0 %v1902
    %1922 = vmatprep.subr.mxu0 0.0
    %1923 = vmatpush1.msra.mxu0 %v1903
    %1924 = vmatprep.subr.mxu0 0.0
    %1925 = vmatpush1.msra.mxu0 %v1904
    %1926 = vmatprep.subr.mxu0 0.0
    %1927 = vmatpush1.msra.mxu0 0.0
    %1928 = vmatprep.subr.mxu0 0.0
    %1929 = vmatpush1.msra.mxu0 0.0
    %1930 = vmatprep.subr.mxu0 0.0
    %1931 = vmatpush1.msra.mxu0 0.0
    %1932 = vmatprep.subr.mxu0 0.0
    %1933 = vmatpush1.msra.mxu0 0.0
    %1934 = vmatprep.subr.mxu0 0.0
    %1935 = vmatpush1.msra.mxu0 0.0
    %1936 = vmatprep.subr.mxu0 0.0
    %1937 = vmatpush1.msra.mxu0 0.0
    %1938 = vmatprep.subr.mxu0 0.0
    %1939 = vmatpush1.msra.mxu0 0.0
    %1940 = vmatprep.subr.mxu0 0.0
    %1941 = vmatpush1.msra.mxu0 0.0
    %1942 = vmatprep.subr.mxu0 0.0
    %1943 = vmatpush1.msra.mxu0 0.0
    %1944 = vmatprep.subr.mxu0 0.0
    %1945 = vmatpush1.msra.mxu0 0.0
    %1946 = vmatprep.subr.mxu0 0.0
    %1947 = vmatpush1.msra.mxu0 0.0
    %1948 = vmatprep.subr.mxu0 0.0
    %1949 = vmatpush1.msra.mxu0 0.0
    %1950 = vmatprep.subr.mxu0 0.0
    %1951 = vmatpush1.msra.mxu0 0.0
    %1952 = vmatprep.subr.mxu0 0.0
    %1953 = vmatpush1.msra.mxu0 0.0
    %1954 = vmatprep.subr.mxu0 0.0
    %1955 = vmatpush1.msra.mxu0 0.0
    %1956 = vmatprep.subr.mxu0 0.0
    %1957 = vmatpush1.msra.mxu0 0.0
    %1958 = vmatprep.subr.mxu0 0.0
    %1959 = vmatpush1.msra.mxu0 0.0
    %1960 = vmatprep.subr.mxu0 0.0
    %1961 = vmatpush1.msra.mxu0 0.0
    %1962 = vmatprep.subr.mxu0 0.0
    %1963 = vmatpush1.msra.mxu0 0.0
    %1964 = vmatprep.subr.mxu0 0.0
    %1965 = vmatpush1.msra.mxu0 0.0
    %1966 = vmatprep.subr.mxu0 0.0
    %1967 = vmatpush1.msra.mxu0 0.0
    %1968 = vmatprep.subr.mxu0 0.0
    %1969 = vmatpush1.msra.mxu0 0.0
    %1970 = vmatprep.subr.mxu0 0.0
    %1971 = vmatpush1.msra.mxu0 0.0
    %1972 = vmatprep.subr.mxu0 0.0
    %1973 = vmatpush1.msra.mxu0 0.0
    %1974 = vmatprep.subr.mxu0 0.0
    %1975 = vmatpush1.msra.mxu0 0.0
    %1976 = vmatprep.subr.mxu0 0.0
    %1977 = vmatpush1.msra.mxu0 0.0
    %1978 = vmatprep.subr.mxu0 0.0
    %1979 = vmatpush1.msra.mxu0 0.0
    %1980 = vmatprep.subr.mxu0 0.0
    %1981 = vmatpush1.msra.mxu0 0.0
    %1982 = vmatprep.mubr.f32.mxu0 0.0
    %1983 = vmatmul.mubr.f32.gmra.mrb[0].mxu0 %v1916
    %v1984 = vpop.f32.mrb[0].mxu0
    %v1985 = vadd.f32 0.0, %v1984
    %v1986 = vpop.f32.mrb[0].mxu0
    %1987 = vdwg.mxu0
    %1989 = vset.pattern.permute.xlu0 0
    %1990 = vperm.xlu0 %1989, %v1914
    %v1991 = vpop.permute.xlu0 %1990
    %v1994 = vlaneseq
    %v1995 = vshrl.u32 %v1994, 7
    %v1996 = vsub.s32 0, %v1995
    %v1997 = vrot.slane %v1906, %v1996
    %v1999 = vmul.f32 %v1991, %v1997
    %v2000 = vadd.f32 %v1999, %v1985
    %v2002 = vlaneseq
    %v2003 = vshrl.u32 %v2002, 7
    %v2004 = vsub.s32 0, %v2003
    %v2005 = vrot.slane %v1908, %v2004
    %v2007 = vadd.f32 %v2000, %v2005
    %v2008 = vxor.u32 %v2007, 2147483648
    %v2009 = vmul.f32 %v2008, 1.442695
    %v2010 = vpow.pop %v2009
    %v2011 = vadd.f32 %v2010, 1.0
    %v2012 = vrcp.pop %v2011
    %v2013 = vmul.f32 1.0, %v2012
    %v2015 = vlaneseq
    %v2016 = vshrl.u32 %v2015, 7
    %v2017 = vsub.s32 0, %v2016
    %v2018 = vrot.slane %v1910, %v2017
    %2019 = vrot.lane.b32.xlu0 %v2018, 64
    %v2020 = vpop.permute.xlu0 %2019
    %v2022 = vadd.f32 %v1999, %v2020
    %v2024 = vlaneseq
    %v2025 = vshrl.u32 %v2024, 7
    %v2026 = vsub.s32 0, %v2025
    %v2027 = vrot.slane %v1912, %v2026
    %2028 = vrot.lane.b32.xlu0 %v2027, 64
    %v2029 = vpop.permute.xlu0 %2028
    %v2031 = vadd.f32 %v1985, %v2029
    %2033 = vrot.lane.b32.xlu0 %v2031, 64
    %v2034 = vpop.permute.xlu0 %2033
    %v2036 = vmul.f32 %v2013, %v2034
    %2038 = vrot.lane.b32.xlu0 %v2036, 64
    %v2039 = vpop.permute.xlu0 %2038
    %v2041 = vadd.f32 %v2022, %v2039
    %v2042 = vtanh.pop %v2041
    %v2043 = vsub.f32 1.0, %v2013
    %2045 = vrot.lane.b32.xlu0 %v2042, 96
    %v2046 = vpop.permute.xlu0 %2045
    %v2048 = vmul.f32 %v2043, %v2046
    %2049 = vrot.lane.b32.xlu0 %v1899, 32
    %v2050 = vpop.permute.xlu0 %2049
    %v2052 = vmul.f32 %v2013, %v2050
    %v2053 = vadd.f32 %v2048, %v2052
    %2055 = vrot.lane.b32.xlu0 %v2053, 96
    %v2056 = vpop.permute.xlu0 %2055
    %v2057 = vsel %vm66, %v2056, 0
    %2059 = vmatprep.subr.mxu0 0.0
    %2060 = vmatpush1.msra.mxu0 %v1901
    %2061 = vmatprep.subr.mxu0 0.0
    %2062 = vmatpush1.msra.mxu0 %v1902
    %2063 = vmatprep.subr.mxu0 0.0
    %2064 = vmatpush1.msra.mxu0 %v1903
    %2065 = vmatprep.subr.mxu0 0.0
    %2066 = vmatpush1.msra.mxu0 %v1904
    %2067 = vmatprep.subr.mxu0 0.0
    %2068 = vmatpush1.msra.mxu0 0.0
    %2069 = vmatprep.subr.mxu0 0.0
    %2070 = vmatpush1.msra.mxu0 0.0
    %2071 = vmatprep.subr.mxu0 0.0
    %2072 = vmatpush1.msra.mxu0 0.0
    %2073 = vmatprep.subr.mxu0 0.0
    %2074 = vmatpush1.msra.mxu0 0.0
    %2075 = vmatprep.subr.mxu0 0.0
    %2076 = vmatpush1.msra.mxu0 0.0
    %2077 = vmatprep.subr.mxu0 0.0
    %2078 = vmatpush1.msra.mxu0 0.0
    %2079 = vmatprep.subr.mxu0 0.0
    %2080 = vmatpush1.msra.mxu0 0.0
    %2081 = vmatprep.subr.mxu0 0.0
    %2082 = vmatpush1.msra.mxu0 0.0
    %2083 = vmatprep.subr.mxu0 0.0
    %2084 = vmatpush1.msra.mxu0 0.0
    %2085 = vmatprep.subr.mxu0 0.0
    %2086 = vmatpush1.msra.mxu0 0.0
    %2087 = vmatprep.subr.mxu0 0.0
    %2088 = vmatpush1.msra.mxu0 0.0
    %2089 = vmatprep.subr.mxu0 0.0
    %2090 = vmatpush1.msra.mxu0 0.0
    %2091 = vmatprep.subr.mxu0 0.0
    %2092 = vmatpush1.msra.mxu0 0.0
    %2093 = vmatprep.subr.mxu0 0.0
    %2094 = vmatpush1.msra.mxu0 0.0
    %2095 = vmatprep.subr.mxu0 0.0
    %2096 = vmatpush1.msra.mxu0 0.0
    %2097 = vmatprep.subr.mxu0 0.0
    %2098 = vmatpush1.msra.mxu0 0.0
    %2099 = vmatprep.subr.mxu0 0.0
    %2100 = vmatpush1.msra.mxu0 0.0
    %2101 = vmatprep.subr.mxu0 0.0
    %2102 = vmatpush1.msra.mxu0 0.0
    %2103 = vmatprep.subr.mxu0 0.0
    %2104 = vmatpush1.msra.mxu0 0.0
    %2105 = vmatprep.subr.mxu0 0.0
    %2106 = vmatpush1.msra.mxu0 0.0
    %2107 = vmatprep.subr.mxu0 0.0
    %2108 = vmatpush1.msra.mxu0 0.0
    %2109 = vmatprep.subr.mxu0 0.0
    %2110 = vmatpush1.msra.mxu0 0.0
    %2111 = vmatprep.subr.mxu0 0.0
    %2112 = vmatpush1.msra.mxu0 0.0
    %2113 = vmatprep.subr.mxu0 0.0
    %2114 = vmatpush1.msra.mxu0 0.0
    %2115 = vmatprep.subr.mxu0 0.0
    %2116 = vmatpush1.msra.mxu0 0.0
    %2117 = vmatprep.subr.mxu0 0.0
    %2118 = vmatpush1.msra.mxu0 0.0
    %2119 = vmatprep.subr.mxu0 0.0
    %2120 = vmatpush1.msra.mxu0 0.0
    %2121 = vmatprep.subr.mxu0 0.0
    %2122 = vmatpush1.msra.mxu0 0.0
    %2123 = vmatprep.mubr.f32.mxu0 0.0
    %2124 = vmatmul.mubr.f32.gmra.mrb[0].mxu0 %v2057
    %v2125 = vpop.f32.mrb[0].mxu0
    %v2126 = vadd.f32 0.0, %v2125
    %v2127 = vpop.f32.mrb[0].mxu0
    %2128 = vdwg.mxu0
    %2129 = vset.pattern.permute.xlu0 1
    %2130 = vperm.xlu0 %2129, %v1914
    %v2131 = vpop.permute.xlu0 %2130
    %v2133 = vmul.f32 %v2131, %v1997
    %v2134 = vadd.f32 %v2133, %v2126
    %v2135 = vadd.f32 %v2134, %v2005
    %v2136 = vxor.u32 %v2135, 2147483648
    %v2137 = vmul.f32 %v2136, 1.442695
    %v2138 = vpow.pop %v2137
    %v2139 = vadd.f32 %v2138, 1.0
    %v2140 = vrcp.pop %v2139
    %v2141 = vmul.f32 1.0, %v2140
    %v2142 = vadd.f32 %v2133, %v2020
    %v2143 = vadd.f32 %v2126, %v2029
    %2145 = vrot.lane.b32.xlu0 %v2143, 64
    %v2146 = vpop.permute.xlu0 %2145
    %v2148 = vmul.f32 %v2141, %v2146
    %2150 = vrot.lane.b32.xlu0 %v2148, 64
    %v2151 = vpop.permute.xlu0 %2150
    %v2153 = vadd.f32 %v2142, %v2151
    %v2154 = vtanh.pop %v2153
    %v2155 = vsub.f32 1.0, %v2141
    %2157 = vrot.lane.b32.xlu0 %v2154, 96
    %v2158 = vpop.permute.xlu0 %2157
    %v2160 = vmul.f32 %v2155, %v2158
    %v2161 = vmul.f32 %v2141, %v2053
    %v2162 = vadd.f32 %v2160, %v2161
    %2164 = vrot.lane.b32.xlu0 %v2162, 96
    %v2165 = vpop.permute.xlu0 %2164
    %v2166 = vsel %vm66, %v2165, 0
    %2168 = vmatprep.subr.mxu0 0.0
    %2169 = vmatpush1.msra.mxu0 %v1901
    %2170 = vmatprep.subr.mxu0 0.0
    %2171 = vmatpush1.msra.mxu0 %v1902
    %2172 = vmatprep.subr.mxu0 0.0
    %2173 = vmatpush1.msra.mxu0 %v1903
    %2174 = vmatprep.subr.mxu0 0.0
    %2175 = vmatpush1.msra.mxu0 %v1904
    %2176 = vmatprep.subr.mxu0 0.0
    %2177 = vmatpush1.msra.mxu0 0.0
    %2178 = vmatprep.subr.mxu0 0.0
    %2179 = vmatpush1.msra.mxu0 0.0
    %2180 = vmatprep.subr.mxu0 0.0
    %2181 = vmatpush1.msra.mxu0 0.0
    %2182 = vmatprep.subr.mxu0 0.0
    %2183 = vmatpush1.msra.mxu0 0.0
    %2184 = vmatprep.subr.mxu0 0.0
    %2185 = vmatpush1.msra.mxu0 0.0
    %2186 = vmatprep.subr.mxu0 0.0
    %2187 = vmatpush1.msra.mxu0 0.0
    %2188 = vmatprep.subr.mxu0 0.0
    %2189 = vmatpush1.msra.mxu0 0.0
    %2190 = vmatprep.subr.mxu0 0.0
    %2191 = vmatpush1.msra.mxu0 0.0
    %2192 = vmatprep.subr.mxu0 0.0
    %2193 = vmatpush1.msra.mxu0 0.0
    %2194 = vmatprep.subr.mxu0 0.0
    %2195 = vmatpush1.msra.mxu0 0.0
    %2196 = vmatprep.subr.mxu0 0.0
    %2197 = vmatpush1.msra.mxu0 0.0
    %2198 = vmatprep.subr.mxu0 0.0
    %2199 = vmatpush1.msra.mxu0 0.0
    %2200 = vmatprep.subr.mxu0 0.0
    %2201 = vmatpush1.msra.mxu0 0.0
    %2202 = vmatprep.subr.mxu0 0.0
    %2203 = vmatpush1.msra.mxu0 0.0
    %2204 = vmatprep.subr.mxu0 0.0
    %2205 = vmatpush1.msra.mxu0 0.0
    %2206 = vmatprep.subr.mxu0 0.0
    %2207 = vmatpush1.msra.mxu0 0.0
    %2208 = vmatprep.subr.mxu0 0.0
    %2209 = vmatpush1.msra.mxu0 0.0
    %2210 = vmatprep.subr.mxu0 0.0
    %2211 = vmatpush1.msra.mxu0 0.0
    %2212 = vmatprep.subr.mxu0 0.0
    %2213 = vmatpush1.msra.mxu0 0.0
    %2214 = vmatprep.subr.mxu0 0.0
    %2215 = vmatpush1.msra.mxu0 0.0
    %2216 = vmatprep.subr.mxu0 0.0
    %2217 = vmatpush1.msra.mxu0 0.0
    %2218 = vmatprep.subr.mxu0 0.0
    %2219 = vmatpush1.msra.mxu0 0.0
    %2220 = vmatprep.subr.mxu0 0.0
    %2221 = vmatpush1.msra.mxu0 0.0
    %2222 = vmatprep.subr.mxu0 0.0
    %2223 = vmatpush1.msra.mxu0 0.0
    %2224 = vmatprep.subr.mxu0 0.0
    %2225 = vmatpush1.msra.mxu0 0.0
    %2226 = vmatprep.subr.mxu0 0.0
    %2227 = vmatpush1.msra.mxu0 0.0
    %2228 = vmatprep.subr.mxu0 0.0
    %2229 = vmatpush1.msra.mxu0 0.0
    %2230 = vmatprep.subr.mxu0 0.0
    %2231 = vmatpush1.msra.mxu0 0.0
    %2232 = vmatprep.mubr.f32.mxu0 0.0
    %2233 = vmatmul.mubr.f32.gmra.mrb[0].mxu0 %v2166
    %v2234 = vpop.f32.mrb[0].mxu0
    %v2235 = vadd.f32 0.0, %v2234
    %v2236 = vpop.f32.mrb[0].mxu0
    %2237 = vdwg.mxu0
    %2238 = vset.pattern.permute.xlu0 2
    %2239 = vperm.xlu0 %2238, %v1914
    %v2240 = vpop.permute.xlu0 %2239
    %v2242 = vmul.f32 %v2240, %v1997
    %v2243 = vadd.f32 %v2242, %v2235
    %v2244 = vadd.f32 %v2243, %v2005
    %v2245 = vxor.u32 %v2244, 2147483648
    %v2246 = vmul.f32 %v2245, 1.442695
    %v2247 = vpow.pop %v2246
    %v2248 = vadd.f32 %v2247, 1.0
    %v2249 = vrcp.pop %v2248
    %v2250 = vmul.f32 1.0, %v2249
    %v2251 = vadd.f32 %v2242, %v2020
    %v2252 = vadd.f32 %v2235, %v2029
    %2254 = vrot.lane.b32.xlu0 %v2252, 64
    %v2255 = vpop.permute.xlu0 %2254
    %v2257 = vmul.f32 %v2250, %v2255
    %2259 = vrot.lane.b32.xlu0 %v2257, 64
    %v2260 = vpop.permute.xlu0 %2259
    %v2262 = vadd.f32 %v2251, %v2260
    %v2263 = vtanh.pop %v2262
    %v2264 = vsub.f32 1.0, %v2250
    %2266 = vrot.lane.b32.xlu0 %v2263, 96
    %v2267 = vpop.permute.xlu0 %2266
    %v2269 = vmul.f32 %v2264, %v2267
    %v2270 = vmul.f32 %v2250, %v2162
    %v2271 = vadd.f32 %v2269, %v2270
    %2273 = vrot.lane.b32.xlu0 %v2271, 96
    %v2274 = vpop.permute.xlu0 %2273
    %v2275 = vsel %vm66, %v2274, 0
    %2277 = vmatprep.subr.mxu0 0.0
    %2278 = vmatpush1.msra.mxu0 %v1901
    %2279 = vmatprep.subr.mxu0 0.0
    %2280 = vmatpush1.msra.mxu0 %v1902
    %2281 = vmatprep.subr.mxu0 0.0
    %2282 = vmatpush1.msra.mxu0 %v1903
    %2283 = vmatprep.subr.mxu0 0.0
    %2284 = vmatpush1.msra.mxu0 %v1904
    %2285 = vmatprep.subr.mxu0 0.0
    %2286 = vmatpush1.msra.mxu0 0.0
    %2287 = vmatprep.subr.mxu0 0.0
    %2288 = vmatpush1.msra.mxu0 0.0
    %2289 = vmatprep.subr.mxu0 0.0
    %2290 = vmatpush1.msra.mxu0 0.0
    %2291 = vmatprep.subr.mxu0 0.0
    %2292 = vmatpush1.msra.mxu0 0.0
    %2293 = vmatprep.subr.mxu0 0.0
    %2294 = vmatpush1.msra.mxu0 0.0
    %2295 = vmatprep.subr.mxu0 0.0
    %2296 = vmatpush1.msra.mxu0 0.0
    %2297 = vmatprep.subr.mxu0 0.0
    %2298 = vmatpush1.msra.mxu0 0.0
    %2299 = vmatprep.subr.mxu0 0.0
    %2300 = vmatpush1.msra.mxu0 0.0
    %2301 = vmatprep.subr.mxu0 0.0
    %2302 = vmatpush1.msra.mxu0 0.0
    %2303 = vmatprep.subr.mxu0 0.0
    %2304 = vmatpush1.msra.mxu0 0.0
    %2305 = vmatprep.subr.mxu0 0.0
    %2306 = vmatpush1.msra.mxu0 0.0
    %2307 = vmatprep.subr.mxu0 0.0
    %2308 = vmatpush1.msra.mxu0 0.0
    %2309 = vmatprep.subr.mxu0 0.0
    %2310 = vmatpush1.msra.mxu0 0.0
    %2311 = vmatprep.subr.mxu0 0.0
    %2312 = vmatpush1.msra.mxu0 0.0
    %2313 = vmatprep.subr.mxu0 0.0
    %2314 = vmatpush1.msra.mxu0 0.0
    %2315 = vmatprep.subr.mxu0 0.0
    %2316 = vmatpush1.msra.mxu0 0.0
    %2317 = vmatprep.subr.mxu0 0.0
    %2318 = vmatpush1.msra.mxu0 0.0
    %2319 = vmatprep.subr.mxu0 0.0
    %2320 = vmatpush1.msra.mxu0 0.0
    %2321 = vmatprep.subr.mxu0 0.0
    %2322 = vmatpush1.msra.mxu0 0.0
    %2323 = vmatprep.subr.mxu0 0.0
    %2324 = vmatpush1.msra.mxu0 0.0
    %2325 = vmatprep.subr.mxu0 0.0
    %2326 = vmatpush1.msra.mxu0 0.0
    %2327 = vmatprep.subr.mxu0 0.0
    %2328 = vmatpush1.msra.mxu0 0.0
    %2329 = vmatprep.subr.mxu0 0.0
    %2330 = vmatpush1.msra.mxu0 0.0
    %2331 = vmatprep.subr.mxu0 0.0
    %2332 = vmatpush1.msra.mxu0 0.0
    %2333 = vmatprep.subr.mxu0 0.0
    %2334 = vmatpush1.msra.mxu0 0.0
    %2335 = vmatprep.subr.mxu0 0.0
    %2336 = vmatpush1.msra.mxu0 0.0
    %2337 = vmatprep.subr.mxu0 0.0
    %2338 = vmatpush1.msra.mxu0 0.0
    %2339 = vmatprep.subr.mxu0 0.0
    %2340 = vmatpush1.msra.mxu0 0.0
    %2341 = vmatprep.mubr.f32.mxu0 0.0
    %2342 = vmatmul.mubr.f32.gmra.mrb[0].mxu0 %v2275
    %v2343 = vpop.f32.mrb[0].mxu0
    %v2344 = vadd.f32 0.0, %v2343
    %v2345 = vpop.f32.mrb[0].mxu0
    %2346 = vdwg.mxu0
    %2347 = vset.pattern.permute.xlu0 3
    %2348 = vperm.xlu0 %2347, %v1914
    %v2349 = vpop.permute.xlu0 %2348
    %v2351 = vmul.f32 %v2349, %v1997
    %v2352 = vadd.f32 %v2351, %v2344
    %v2353 = vadd.f32 %v2352, %v2005
    %v2354 = vxor.u32 %v2353, 2147483648
    %v2355 = vmul.f32 %v2354, 1.442695
    %v2356 = vpow.pop %v2355
    %v2357 = vadd.f32 %v2356, 1.0
    %v2358 = vrcp.pop %v2357
    %v2359 = vmul.f32 1.0, %v2358
    %v2360 = vadd.f32 %v2351, %v2020
    %v2361 = vadd.f32 %v2344, %v2029
    %2363 = vrot.lane.b32.xlu0 %v2361, 64
    %v2364 = vpop.permute.xlu0 %2363
    %v2366 = vmul.f32 %v2359, %v2364
    %2368 = vrot.lane.b32.xlu0 %v2366, 64
    %v2369 = vpop.permute.xlu0 %2368
    %v2371 = vadd.f32 %v2360, %v2369
    %v2372 = vtanh.pop %v2371
    %v2373 = vsub.f32 1.0, %v2359
    %2375 = vrot.lane.b32.xlu0 %v2372, 96
    %v2376 = vpop.permute.xlu0 %2375
    %v2378 = vmul.f32 %v2373, %v2376
    %v2379 = vmul.f32 %v2359, %v2271
    %v2380 = vadd.f32 %v2378, %v2379
    %2382 = vrot.lane.b32.xlu0 %v2380, 96
    %v2383 = vpop.permute.xlu0 %2382
    %v2384 = vsel %vm66, %v2383, 0
    %2386 = vmatprep.subr.mxu0 0.0
    %2387 = vmatpush1.msra.mxu0 %v1901
    %2388 = vmatprep.subr.mxu0 0.0
    %2389 = vmatpush1.msra.mxu0 %v1902
    %2390 = vmatprep.subr.mxu0 0.0
    %2391 = vmatpush1.msra.mxu0 %v1903
    %2392 = vmatprep.subr.mxu0 0.0
    %2393 = vmatpush1.msra.mxu0 %v1904
    %2394 = vmatprep.subr.mxu0 0.0
    %2395 = vmatpush1.msra.mxu0 0.0
    %2396 = vmatprep.subr.mxu0 0.0
    %2397 = vmatpush1.msra.mxu0 0.0
    %2398 = vmatprep.subr.mxu0 0.0
    %2399 = vmatpush1.msra.mxu0 0.0
    %2400 = vmatprep.subr.mxu0 0.0
    %2401 = vmatpush1.msra.mxu0 0.0
    %2402 = vmatprep.subr.mxu0 0.0
    %2403 = vmatpush1.msra.mxu0 0.0
    %2404 = vmatprep.subr.mxu0 0.0
    %2405 = vmatpush1.msra.mxu0 0.0
    %2406 = vmatprep.subr.mxu0 0.0
    %2407 = vmatpush1.msra.mxu0 0.0
    %2408 = vmatprep.subr.mxu0 0.0
    %2409 = vmatpush1.msra.mxu0 0.0
    %2410 = vmatprep.subr.mxu0 0.0
    %2411 = vmatpush1.msra.mxu0 0.0
    %2412 = vmatprep.subr.mxu0 0.0
    %2413 = vmatpush1.msra.mxu0 0.0
    %2414 = vmatprep.subr.mxu0 0.0
    %2415 = vmatpush1.msra.mxu0 0.0
    %2416 = vmatprep.subr.mxu0 0.0
    %2417 = vmatpush1.msra.mxu0 0.0
    %2418 = vmatprep.subr.mxu0 0.0
    %2419 = vmatpush1.msra.mxu0 0.0
    %2420 = vmatprep.subr.mxu0 0.0
    %2421 = vmatpush1.msra.mxu0 0.0
    %2422 = vmatprep.subr.mxu0 0.0
    %2423 = vmatpush1.msra.mxu0 0.0
    %2424 = vmatprep.subr.mxu0 0.0
    %2425 = vmatpush1.msra.mxu0 0.0
    %2426 = vmatprep.subr.mxu0 0.0
    %2427 = vmatpush1.msra.mxu0 0.0
    %2428 = vmatprep.subr.mxu0 0.0
    %2429 = vmatpush1.msra.mxu0 0.0
    %2430 = vmatprep.subr.mxu0 0.0
    %2431 = vmatpush1.msra.mxu0 0.0
    %2432 = vmatprep.subr.mxu0 0.0
    %2433 = vmatpush1.msra.mxu0 0.0
    %2434 = vmatprep.subr.mxu0 0.0
    %2435 = vmatpush1.msra.mxu0 0.0
    %2436 = vmatprep.subr.mxu0 0.0
    %2437 = vmatpush1.msra.mxu0 0.0
    %2438 = vmatprep.subr.mxu0 0.0
    %2439 = vmatpush1.msra.mxu0 0.0
    %2440 = vmatprep.subr.mxu0 0.0
    %2441 = vmatpush1.msra.mxu0 0.0
    %2442 = vmatprep.subr.mxu0 0.0
    %2443 = vmatpush1.msra.mxu0 0.0
    %2444 = vmatprep.subr.mxu0 0.0
    %2445 = vmatpush1.msra.mxu0 0.0
    %2446 = vmatprep.subr.mxu0 0.0
    %2447 = vmatpush1.msra.mxu0 0.0
    %2448 = vmatprep.subr.mxu0 0.0
    %2449 = vmatpush1.msra.mxu0 0.0
    %2450 = vmatprep.mubr.f32.mxu0 0.0
    %2451 = vmatmul.mubr.f32.gmra.mrb[0].mxu0 %v2384
    %v2452 = vpop.f32.mrb[0].mxu0
    %v2453 = vadd.f32 0.0, %v2452
    %v2454 = vpop.f32.mrb[0].mxu0
    %2455 = vdwg.mxu0
    %2456 = vset.pattern.permute.xlu0 4
    %2457 = vperm.xlu0 %2456, %v1914
    %v2458 = vpop.permute.xlu0 %2457
    %v2460 = vmul.f32 %v2458, %v1997
    %v2461 = vadd.f32 %v2460, %v2453
    %v2462 = vadd.f32 %v2461, %v2005
    %v2463 = vxor.u32 %v2462, 2147483648
    %v2464 = vmul.f32 %v2463, 1.442695
    %v2465 = vpow.pop %v2464
    %v2466 = vadd.f32 %v2465, 1.0
    %v2467 = vrcp.pop %v2466
    %v2468 = vmul.f32 1.0, %v2467
    %v2469 = vadd.f32 %v2460, %v2020
    %v2470 = vadd.f32 %v2453, %v2029
    %2472 = vrot.lane.b32.xlu0 %v2470, 64
    %v2473 = vpop.permute.xlu0 %2472
    %v2475 = vmul.f32 %v2468, %v2473
    %2477 = vrot.lane.b32.xlu0 %v2475, 64
    %v2478 = vpop.permute.xlu0 %2477
    %v2480 = vadd.f32 %v2469, %v2478
    %v2481 = vtanh.pop %v2480
    %v2482 = vsub.f32 1.0, %v2468
    %2484 = vrot.lane.b32.xlu0 %v2481, 96
    %v2485 = vpop.permute.xlu0 %2484
    %v2487 = vmul.f32 %v2482, %v2485
    %v2488 = vmul.f32 %v2468, %v2380
    %v2489 = vadd.f32 %v2487, %v2488
    %2491 = vrot.lane.b32.xlu0 %v2489, 96
    %v2492 = vpop.permute.xlu0 %2491
    %v2493 = vsel %vm66, %v2492, 0
    %2495 = vmatprep.subr.mxu0 0.0
    %2496 = vmatpush1.msra.mxu0 %v1901
    %2497 = vmatprep.subr.mxu0 0.0
    %2498 = vmatpush1.msra.mxu0 %v1902
    %2499 = vmatprep.subr.mxu0 0.0
    %2500 = vmatpush1.msra.mxu0 %v1903
    %2501 = vmatprep.subr.mxu0 0.0
    %2502 = vmatpush1.msra.mxu0 %v1904
    %2503 = vmatprep.subr.mxu0 0.0
    %2504 = vmatpush1.msra.mxu0 0.0
    %2505 = vmatprep.subr.mxu0 0.0
    %2506 = vmatpush1.msra.mxu0 0.0
    %2507 = vmatprep.subr.mxu0 0.0
    %2508 = vmatpush1.msra.mxu0 0.0
    %2509 = vmatprep.subr.mxu0 0.0
    %2510 = vmatpush1.msra.mxu0 0.0
    %2511 = vmatprep.subr.mxu0 0.0
    %2512 = vmatpush1.msra.mxu0 0.0
    %2513 = vmatprep.subr.mxu0 0.0
    %2514 = vmatpush1.msra.mxu0 0.0
    %2515 = vmatprep.subr.mxu0 0.0
    %2516 = vmatpush1.msra.mxu0 0.0
    %2517 = vmatprep.subr.mxu0 0.0
    %2518 = vmatpush1.msra.mxu0 0.0
    %2519 = vmatprep.subr.mxu0 0.0
    %2520 = vmatpush1.msra.mxu0 0.0
    %2521 = vmatprep.subr.mxu0 0.0
    %2522 = vmatpush1.msra.mxu0 0.0
    %2523 = vmatprep.subr.mxu0 0.0
    %2524 = vmatpush1.msra.mxu0 0.0
    %2525 = vmatprep.subr.mxu0 0.0
    %2526 = vmatpush1.msra.mxu0 0.0
    %2527 = vmatprep.subr.mxu0 0.0
    %2528 = vmatpush1.msra.mxu0 0.0
    %2529 = vmatprep.subr.mxu0 0.0
    %2530 = vmatpush1.msra.mxu0 0.0
    %2531 = vmatprep.subr.mxu0 0.0
    %2532 = vmatpush1.msra.mxu0 0.0
    %2533 = vmatprep.subr.mxu0 0.0
    %2534 = vmatpush1.msra.mxu0 0.0
    %2535 = vmatprep.subr.mxu0 0.0
    %2536 = vmatpush1.msra.mxu0 0.0
    %2537 = vmatprep.subr.mxu0 0.0
    %2538 = vmatpush1.msra.mxu0 0.0
    %2539 = vmatprep.subr.mxu0 0.0
    %2540 = vmatpush1.msra.mxu0 0.0
    %2541 = vmatprep.subr.mxu0 0.0
    %2542 = vmatpush1.msra.mxu0 0.0
    %2543 = vmatprep.subr.mxu0 0.0
    %2544 = vmatpush1.msra.mxu0 0.0
    %2545 = vmatprep.subr.mxu0 0.0
    %2546 = vmatpush1.msra.mxu0 0.0
    %2547 = vmatprep.subr.mxu0 0.0
    %2548 = vmatpush1.msra.mxu0 0.0
    %2549 = vmatprep.subr.mxu0 0.0
    %2550 = vmatpush1.msra.mxu0 0.0
    %2551 = vmatprep.subr.mxu0 0.0
    %2552 = vmatpush1.msra.mxu0 0.0
    %2553 = vmatprep.subr.mxu0 0.0
    %2554 = vmatpush1.msra.mxu0 0.0
    %2555 = vmatprep.subr.mxu0 0.0
    %2556 = vmatpush1.msra.mxu0 0.0
    %2557 = vmatprep.subr.mxu0 0.0
    %2558 = vmatpush1.msra.mxu0 0.0
    %2559 = vmatprep.mubr.f32.mxu0 0.0
    %2560 = vmatmul.mubr.f32.gmra.mrb[0].mxu0 %v2493
    %v2561 = vpop.f32.mrb[0].mxu0
    %v2562 = vadd.f32 0.0, %v2561
    %v2563 = vpop.f32.mrb[0].mxu0
    %2564 = vdwg.mxu0
    %2565 = vset.pattern.permute.xlu0 5
    %2566 = vperm.xlu0 %2565, %v1914
    %v2567 = vpop.permute.xlu0 %2566
    %v2569 = vmul.f32 %v2567, %v1997
    %v2570 = vadd.f32 %v2569, %v2562
    %v2571 = vadd.f32 %v2570, %v2005
    %v2572 = vxor.u32 %v2571, 2147483648
    %v2573 = vmul.f32 %v2572, 1.442695
    %v2574 = vpow.pop %v2573
    %v2575 = vadd.f32 %v2574, 1.0
    %v2576 = vrcp.pop %v2575
    %v2577 = vmul.f32 1.0, %v2576
    %v2578 = vadd.f32 %v2569, %v2020
    %v2579 = vadd.f32 %v2562, %v2029
    %2581 = vrot.lane.b32.xlu0 %v2579, 64
    %v2582 = vpop.permute.xlu0 %2581
    %v2584 = vmul.f32 %v2577, %v2582
    %2586 = vrot.lane.b32.xlu0 %v2584, 64
    %v2587 = vpop.permute.xlu0 %2586
    %v2589 = vadd.f32 %v2578, %v2587
    %v2590 = vtanh.pop %v2589
    %v2591 = vsub.f32 1.0, %v2577
    %2593 = vrot.lane.b32.xlu0 %v2590, 96
    %v2594 = vpop.permute.xlu0 %2593
    %v2596 = vmul.f32 %v2591, %v2594
    %v2597 = vmul.f32 %v2577, %v2489
    %v2598 = vadd.f32 %v2596, %v2597
    %2600 = vrot.lane.b32.xlu0 %v2598, 96
    %v2601 = vpop.permute.xlu0 %2600
    %v2602 = vsel %vm66, %v2601, 0
    %2604 = vmatprep.subr.mxu0 0.0
    %2605 = vmatpush1.msra.mxu0 %v1901
    %2606 = vmatprep.subr.mxu0 0.0
    %2607 = vmatpush1.msra.mxu0 %v1902
    %2608 = vmatprep.subr.mxu0 0.0
    %2609 = vmatpush1.msra.mxu0 %v1903
    %2610 = vmatprep.subr.mxu0 0.0
    %2611 = vmatpush1.msra.mxu0 %v1904
    %2612 = vmatprep.subr.mxu0 0.0
    %2613 = vmatpush1.msra.mxu0 0.0
    %2614 = vmatprep.subr.mxu0 0.0
    %2615 = vmatpush1.msra.mxu0 0.0
    %2616 = vmatprep.subr.mxu0 0.0
    %2617 = vmatpush1.msra.mxu0 0.0
    %2618 = vmatprep.subr.mxu0 0.0
    %2619 = vmatpush1.msra.mxu0 0.0
    %2620 = vmatprep.subr.mxu0 0.0
    %2621 = vmatpush1.msra.mxu0 0.0
    %2622 = vmatprep.subr.mxu0 0.0
    %2623 = vmatpush1.msra.mxu0 0.0
    %2624 = vmatprep.subr.mxu0 0.0
    %2625 = vmatpush1.msra.mxu0 0.0
    %2626 = vmatprep.subr.mxu0 0.0
    %2627 = vmatpush1.msra.mxu0 0.0
    %2628 = vmatprep.subr.mxu0 0.0
    %2629 = vmatpush1.msra.mxu0 0.0
    %2630 = vmatprep.subr.mxu0 0.0
    %2631 = vmatpush1.msra.mxu0 0.0
    %2632 = vmatprep.subr.mxu0 0.0
    %2633 = vmatpush1.msra.mxu0 0.0
    %2634 = vmatprep.subr.mxu0 0.0
    %2635 = vmatpush1.msra.mxu0 0.0
    %2636 = vmatprep.subr.mxu0 0.0
    %2637 = vmatpush1.msra.mxu0 0.0
    %2638 = vmatprep.subr.mxu0 0.0
    %2639 = vmatpush1.msra.mxu0 0.0
    %2640 = vmatprep.subr.mxu0 0.0
    %2641 = vmatpush1.msra.mxu0 0.0
    %2642 = vmatprep.subr.mxu0 0.0
    %2643 = vmatpush1.msra.mxu0 0.0
    %2644 = vmatprep.subr.mxu0 0.0
    %2645 = vmatpush1.msra.mxu0 0.0
    %2646 = vmatprep.subr.mxu0 0.0
    %2647 = vmatpush1.msra.mxu0 0.0
    %2648 = vmatprep.subr.mxu0 0.0
    %2649 = vmatpush1.msra.mxu0 0.0
    %2650 = vmatprep.subr.mxu0 0.0
    %2651 = vmatpush1.msra.mxu0 0.0
    %2652 = vmatprep.subr.mxu0 0.0
    %2653 = vmatpush1.msra.mxu0 0.0
    %2654 = vmatprep.subr.mxu0 0.0
    %2655 = vmatpush1.msra.mxu0 0.0
    %2656 = vmatprep.subr.mxu0 0.0
    %2657 = vmatpush1.msra.mxu0 0.0
    %2658 = vmatprep.subr.mxu0 0.0
    %2659 = vmatpush1.msra.mxu0 0.0
    %2660 = vmatprep.subr.mxu0 0.0
    %2661 = vmatpush1.msra.mxu0 0.0
    %2662 = vmatprep.subr.mxu0 0.0
    %2663 = vmatpush1.msra.mxu0 0.0
    %2664 = vmatprep.subr.mxu0 0.0
    %2665 = vmatpush1.msra.mxu0 0.0
    %2666 = vmatprep.subr.mxu0 0.0
    %2667 = vmatpush1.msra.mxu0 0.0
    %2668 = vmatprep.mubr.f32.mxu0 0.0
    %2669 = vmatmul.mubr.f32.gmra.mrb[0].mxu0 %v2602
    %v2670 = vpop.f32.mrb[0].mxu0
    %v2671 = vadd.f32 0.0, %v2670
    %v2672 = vpop.f32.mrb[0].mxu0
    %2673 = vdwg.mxu0
    %2674 = vset.pattern.permute.xlu0 6
    %2675 = vperm.xlu0 %2674, %v1914
    %v2676 = vpop.permute.xlu0 %2675
    %v2678 = vmul.f32 %v2676, %v1997
    %v2679 = vadd.f32 %v2678, %v2671
    %v2680 = vadd.f32 %v2679, %v2005
    %v2681 = vxor.u32 %v2680, 2147483648
    %v2682 = vmul.f32 %v2681, 1.442695
    %v2683 = vpow.pop %v2682
    %v2684 = vadd.f32 %v2683, 1.0
    %v2685 = vrcp.pop %v2684
    %v2686 = vmul.f32 1.0, %v2685
    %v2687 = vadd.f32 %v2678, %v2020
    %v2688 = vadd.f32 %v2671, %v2029
    %2690 = vrot.lane.b32.xlu0 %v2688, 64
    %v2691 = vpop.permute.xlu0 %2690
    %v2693 = vmul.f32 %v2686, %v2691
    %2695 = vrot.lane.b32.xlu0 %v2693, 64
    %v2696 = vpop.permute.xlu0 %2695
    %v2698 = vadd.f32 %v2687, %v2696
    %v2699 = vtanh.pop %v2698
    %v2700 = vsub.f32 1.0, %v2686
    %2702 = vrot.lane.b32.xlu0 %v2699, 96
    %v2703 = vpop.permute.xlu0 %2702
    %v2705 = vmul.f32 %v2700, %v2703
    %v2706 = vmul.f32 %v2686, %v2598
    %v2707 = vadd.f32 %v2705, %v2706
    %2709 = vrot.lane.b32.xlu0 %v2707, 96
    %v2710 = vpop.permute.xlu0 %2709
    %v2711 = vsel %vm66, %v2710, 0
    %2713 = vmatprep.subr.mxu0 0.0
    %2714 = vmatpush1.msra.mxu0 %v1901
    %2715 = vmatprep.subr.mxu0 0.0
    %2716 = vmatpush1.msra.mxu0 %v1902
    %2717 = vmatprep.subr.mxu0 0.0
    %2718 = vmatpush1.msra.mxu0 %v1903
    %2719 = vmatprep.subr.mxu0 0.0
    %2720 = vmatpush1.msra.mxu0 %v1904
    %2721 = vmatprep.subr.mxu0 0.0
    %2722 = vmatpush1.msra.mxu0 0.0
    %2723 = vmatprep.subr.mxu0 0.0
    %2724 = vmatpush1.msra.mxu0 0.0
    %2725 = vmatprep.subr.mxu0 0.0
    %2726 = vmatpush1.msra.mxu0 0.0
    %2727 = vmatprep.subr.mxu0 0.0
    %2728 = vmatpush1.msra.mxu0 0.0
    %2729 = vmatprep.subr.mxu0 0.0
    %2730 = vmatpush1.msra.mxu0 0.0
    %2731 = vmatprep.subr.mxu0 0.0
    %2732 = vmatpush1.msra.mxu0 0.0
    %2733 = vmatprep.subr.mxu0 0.0
    %2734 = vmatpush1.msra.mxu0 0.0
    %2735 = vmatprep.subr.mxu0 0.0
    %2736 = vmatpush1.msra.mxu0 0.0
    %2737 = vmatprep.subr.mxu0 0.0
    %2738 = vmatpush1.msra.mxu0 0.0
    %2739 = vmatprep.subr.mxu0 0.0
    %2740 = vmatpush1.msra.mxu0 0.0
    %2741 = vmatprep.subr.mxu0 0.0
    %2742 = vmatpush1.msra.mxu0 0.0
    %2743 = vmatprep.subr.mxu0 0.0
    %2744 = vmatpush1.msra.mxu0 0.0
    %2745 = vmatprep.subr.mxu0 0.0
    %2746 = vmatpush1.msra.mxu0 0.0
    %2747 = vmatprep.subr.mxu0 0.0
    %2748 = vmatpush1.msra.mxu0 0.0
    %2749 = vmatprep.subr.mxu0 0.0
    %2750 = vmatpush1.msra.mxu0 0.0
    %2751 = vmatprep.subr.mxu0 0.0
    %2752 = vmatpush1.msra.mxu0 0.0
    %2753 = vmatprep.subr.mxu0 0.0
    %2754 = vmatpush1.msra.mxu0 0.0
    %2755 = vmatprep.subr.mxu0 0.0
    %2756 = vmatpush1.msra.mxu0 0.0
    %2757 = vmatprep.subr.mxu0 0.0
    %2758 = vmatpush1.msra.mxu0 0.0
    %2759 = vmatprep.subr.mxu0 0.0
    %2760 = vmatpush1.msra.mxu0 0.0
    %2761 = vmatprep.subr.mxu0 0.0
    %2762 = vmatpush1.msra.mxu0 0.0
    %2763 = vmatprep.subr.mxu0 0.0
    %2764 = vmatpush1.msra.mxu0 0.0
    %2765 = vmatprep.subr.mxu0 0.0
    %2766 = vmatpush1.msra.mxu0 0.0
    %2767 = vmatprep.subr.mxu0 0.0
    %2768 = vmatpush1.msra.mxu0 0.0
    %2769 = vmatprep.subr.mxu0 0.0
    %2770 = vmatpush1.msra.mxu0 0.0
    %2771 = vmatprep.subr.mxu0 0.0
    %2772 = vmatpush1.msra.mxu0 0.0
    %2773 = vmatprep.subr.mxu0 0.0
    %2774 = vmatpush1.msra.mxu0 0.0
    %2775 = vmatprep.subr.mxu0 0.0
    %2776 = vmatpush1.msra.mxu0 0.0
    %2777 = vmatprep.mubr.f32.mxu0 0.0
    %2778 = vmatmul.mubr.f32.gmra.mrb[0].mxu0 %v2711
    %v2779 = vpop.f32.mrb[0].mxu0
    %v2780 = vadd.f32 0.0, %v2779
    %v2781 = vpop.f32.mrb[0].mxu0
    %2782 = vdwg.mxu0
    %2783 = vset.pattern.permute.xlu0 7
    %2784 = vperm.xlu0 %2783, %v1914
    %v2785 = vpop.permute.xlu0 %2784
    %v2787 = vmul.f32 %v2785, %v1997
    %v2788 = vadd.f32 %v2787, %v2780
    %v2789 = vadd.f32 %v2788, %v2005
    %v2790 = vxor.u32 %v2789, 2147483648
    %v2791 = vmul.f32 %v2790, 1.442695
    %v2792 = vpow.pop %v2791
    %v2793 = vadd.f32 %v2792, 1.0
    %v2794 = vrcp.pop %v2793
    %v2795 = vmul.f32 1.0, %v2794
    %v2796 = vadd.f32 %v2787, %v2020
    %v2797 = vadd.f32 %v2780, %v2029
    %2799 = vrot.lane.b32.xlu0 %v2797, 64
    %v2800 = vpop.permute.xlu0 %2799
    %v2802 = vmul.f32 %v2795, %v2800
    %2804 = vrot.lane.b32.xlu0 %v2802, 64
    %v2805 = vpop.permute.xlu0 %2804
    %v2807 = vadd.f32 %v2796, %v2805
    %v2808 = vtanh.pop %v2807
    %v2809 = vsub.f32 1.0, %v2795
    %2811 = vrot.lane.b32.xlu0 %v2808, 96
    %v2812 = vpop.permute.xlu0 %2811
    %v2814 = vmul.f32 %v2809, %v2812
    %v2815 = vmul.f32 %v2795, %v2707
    %v2816 = vadd.f32 %v2814, %v2815
    %2818 = vrot.lane.b32.xlu0 %v2816, 96
    %v2819 = vpop.permute.xlu0 %2818
    %2821 = vst.msk [vmem:[%s1898] sm:$0xff] %vm66, %v2819
    %s2822 = scalar_lea.vmem [#allocation2], 24
    %v2823 = vld [vmem:[%s2822] sm:$0xff]
    %s2824 = scalar_lea.vmem %s3, 96
    %v2825 = vld [vmem:[%s2824] sm:$0xff]
    %v2826 = vld [vmem:[%s2824 + $0x8] sm:$0xff]
    %v2827 = vld [vmem:[%s2824 + $0x10] sm:$0xff]
    %v2828 = vld [vmem:[%s2824 + $0x18] sm:$0xff]
    %s2829 = scalar_lea.vmem %s2, 3
    %v2830 = vld [vmem:[%s2829] sm:$0x1]
    %s2831 = scalar_lea.vmem %s4, 3
    %v2832 = vld [vmem:[%s2831] sm:$0x1]
    %s2833 = scalar_lea.vmem %s5, 3
    %v2834 = vld [vmem:[%s2833] sm:$0x1]
    %s2835 = scalar_lea.vmem %s6, 3
    %v2836 = vld [vmem:[%s2835] sm:$0x1]
    %s2837 = scalar_lea.vmem %s0, 24
    %v2838 = vld [vmem:[%s2837] sm:$0xff]
    %v2840 = vsel %vm66, %v2823, 0
    %2842 = vmatprep.subr.mxu0 0.0
    %2843 = vmatpush1.msra.mxu0 %v2825
    %2844 = vmatprep.subr.mxu0 0.0
    %2845 = vmatpush1.msra.mxu0 %v2826
    %2846 = vmatprep.subr.mxu0 0.0
    %2847 = vmatpush1.msra.mxu0 %v2827
    %2848 = vmatprep.subr.mxu0 0.0
    %2849 = vmatpush1.msra.mxu0 %v2828
    %2850 = vmatprep.subr.mxu0 0.0
    %2851 = vmatpush1.msra.mxu0 0.0
    %2852 = vmatprep.subr.mxu0 0.0
    %2853 = vmatpush1.msra.mxu0 0.0
    %2854 = vmatprep.subr.mxu0 0.0
    %2855 = vmatpush1.msra.mxu0 0.0
    %2856 = vmatprep.subr.mxu0 0.0
    %2857 = vmatpush1.msra.mxu0 0.0
    %2858 = vmatprep.subr.mxu0 0.0
    %2859 = vmatpush1.msra.mxu0 0.0
    %2860 = vmatprep.subr.mxu0 0.0
    %2861 = vmatpush1.msra.mxu0 0.0
    %2862 = vmatprep.subr.mxu0 0.0
    %2863 = vmatpush1.msra.mxu0 0.0
    %2864 = vmatprep.subr.mxu0 0.0
    %2865 = vmatpush1.msra.mxu0 0.0
    %2866 = vmatprep.subr.mxu0 0.0
    %2867 = vmatpush1.msra.mxu0 0.0
    %2868 = vmatprep.subr.mxu0 0.0
    %2869 = vmatpush1.msra.mxu0 0.0
    %2870 = vmatprep.subr.mxu0 0.0
    %2871 = vmatpush1.msra.mxu0 0.0
    %2872 = vmatprep.subr.mxu0 0.0
    %2873 = vmatpush1.msra.mxu0 0.0
    %2874 = vmatprep.subr.mxu0 0.0
    %2875 = vmatpush1.msra.mxu0 0.0
    %2876 = vmatprep.subr.mxu0 0.0
    %2877 = vmatpush1.msra.mxu0 0.0
    %2878 = vmatprep.subr.mxu0 0.0
    %2879 = vmatpush1.msra.mxu0 0.0
    %2880 = vmatprep.subr.mxu0 0.0
    %2881 = vmatpush1.msra.mxu0 0.0
    %2882 = vmatprep.subr.mxu0 0.0
    %2883 = vmatpush1.msra.mxu0 0.0
    %2884 = vmatprep.subr.mxu0 0.0
    %2885 = vmatpush1.msra.mxu0 0.0
    %2886 = vmatprep.subr.mxu0 0.0
    %2887 = vmatpush1.msra.mxu0 0.0
    %2888 = vmatprep.subr.mxu0 0.0
    %2889 = vmatpush1.msra.mxu0 0.0
    %2890 = vmatprep.subr.mxu0 0.0
    %2891 = vmatpush1.msra.mxu0 0.0
    %2892 = vmatprep.subr.mxu0 0.0
    %2893 = vmatpush1.msra.mxu0 0.0
    %2894 = vmatprep.subr.mxu0 0.0
    %2895 = vmatpush1.msra.mxu0 0.0
    %2896 = vmatprep.subr.mxu0 0.0
    %2897 = vmatpush1.msra.mxu0 0.0
    %2898 = vmatprep.subr.mxu0 0.0
    %2899 = vmatpush1.msra.mxu0 0.0
    %2900 = vmatprep.subr.mxu0 0.0
    %2901 = vmatpush1.msra.mxu0 0.0
    %2902 = vmatprep.subr.mxu0 0.0
    %2903 = vmatpush1.msra.mxu0 0.0
    %2904 = vmatprep.subr.mxu0 0.0
    %2905 = vmatpush1.msra.mxu0 0.0
    %2906 = vmatprep.mubr.f32.mxu0 0.0
    %2907 = vmatmul.mubr.f32.gmra.mrb[0].mxu0 %v2840
    %v2908 = vpop.f32.mrb[0].mxu0
    %v2909 = vadd.f32 0.0, %v2908
    %v2910 = vpop.f32.mrb[0].mxu0
    %2911 = vdwg.mxu0
    %2913 = vset.pattern.permute.xlu0 0
    %2914 = vperm.xlu0 %2913, %v2838
    %v2915 = vpop.permute.xlu0 %2914
    %v2918 = vlaneseq
    %v2919 = vshrl.u32 %v2918, 7
    %v2920 = vsub.s32 0, %v2919
    %v2921 = vrot.slane %v2830, %v2920
    %v2923 = vmul.f32 %v2915, %v2921
    %v2924 = vadd.f32 %v2923, %v2909
    %v2926 = vlaneseq
    %v2927 = vshrl.u32 %v2926, 7
    %v2928 = vsub.s32 0, %v2927
    %v2929 = vrot.slane %v2832, %v2928
    %v2931 = vadd.f32 %v2924, %v2929
    %v2932 = vxor.u32 %v2931, 2147483648
    %v2933 = vmul.f32 %v2932, 1.442695
    %v2934 = vpow.pop %v2933
    %v2935 = vadd.f32 %v2934, 1.0
    %v2936 = vrcp.pop %v2935
    %v2937 = vmul.f32 1.0, %v2936
    %v2939 = vlaneseq
    %v2940 = vshrl.u32 %v2939, 7
    %v2941 = vsub.s32 0, %v2940
    %v2942 = vrot.slane %v2834, %v2941
    %2943 = vrot.lane.b32.xlu0 %v2942, 64
    %v2944 = vpop.permute.xlu0 %2943
    %v2946 = vadd.f32 %v2923, %v2944
    %v2948 = vlaneseq
    %v2949 = vshrl.u32 %v2948, 7
    %v2950 = vsub.s32 0, %v2949
    %v2951 = vrot.slane %v2836, %v2950
    %2952 = vrot.lane.b32.xlu0 %v2951, 64
    %v2953 = vpop.permute.xlu0 %2952
    %v2955 = vadd.f32 %v2909, %v2953
    %2957 = vrot.lane.b32.xlu0 %v2955, 64
    %v2958 = vpop.permute.xlu0 %2957
    %v2960 = vmul.f32 %v2937, %v2958
    %2962 = vrot.lane.b32.xlu0 %v2960, 64
    %v2963 = vpop.permute.xlu0 %2962
    %v2965 = vadd.f32 %v2946, %v2963
    %v2966 = vtanh.pop %v2965
    %v2967 = vsub.f32 1.0, %v2937
    %2969 = vrot.lane.b32.xlu0 %v2966, 96
    %v2970 = vpop.permute.xlu0 %2969
    %v2972 = vmul.f32 %v2967, %v2970
    %2973 = vrot.lane.b32.xlu0 %v2823, 32
    %v2974 = vpop.permute.xlu0 %2973
    %v2976 = vmul.f32 %v2937, %v2974
    %v2977 = vadd.f32 %v2972, %v2976
    %2979 = vrot.lane.b32.xlu0 %v2977, 96
    %v2980 = vpop.permute.xlu0 %2979
    %v2981 = vsel %vm66, %v2980, 0
    %2983 = vmatprep.subr.mxu0 0.0
    %2984 = vmatpush1.msra.mxu0 %v2825
    %2985 = vmatprep.subr.mxu0 0.0
    %2986 = vmatpush1.msra.mxu0 %v2826
    %2987 = vmatprep.subr.mxu0 0.0
    %2988 = vmatpush1.msra.mxu0 %v2827
    %2989 = vmatprep.subr.mxu0 0.0
    %2990 = vmatpush1.msra.mxu0 %v2828
    %2991 = vmatprep.subr.mxu0 0.0
    %2992 = vmatpush1.msra.mxu0 0.0
    %2993 = vmatprep.subr.mxu0 0.0
    %2994 = vmatpush1.msra.mxu0 0.0
    %2995 = vmatprep.subr.mxu0 0.0
    %2996 = vmatpush1.msra.mxu0 0.0
    %2997 = vmatprep.subr.mxu0 0.0
    %2998 = vmatpush1.msra.mxu0 0.0
    %2999 = vmatprep.subr.mxu0 0.0
    %3000 = vmatpush1.msra.mxu0 0.0
    %3001 = vmatprep.subr.mxu0 0.0
    %3002 = vmatpush1.msra.mxu0 0.0
    %3003 = vmatprep.subr.mxu0 0.0
    %3004 = vmatpush1.msra.mxu0 0.0
    %3005 = vmatprep.subr.mxu0 0.0
    %3006 = vmatpush1.msra.mxu0 0.0
    %3007 = vmatprep.subr.mxu0 0.0
    %3008 = vmatpush1.msra.mxu0 0.0
    %3009 = vmatprep.subr.mxu0 0.0
    %3010 = vmatpush1.msra.mxu0 0.0
    %3011 = vmatprep.subr.mxu0 0.0
    %3012 = vmatpush1.msra.mxu0 0.0
    %3013 = vmatprep.subr.mxu0 0.0
    %3014 = vmatpush1.msra.mxu0 0.0
    %3015 = vmatprep.subr.mxu0 0.0
    %3016 = vmatpush1.msra.mxu0 0.0
    %3017 = vmatprep.subr.mxu0 0.0
    %3018 = vmatpush1.msra.mxu0 0.0
    %3019 = vmatprep.subr.mxu0 0.0
    %3020 = vmatpush1.msra.mxu0 0.0
    %3021 = vmatprep.subr.mxu0 0.0
    %3022 = vmatpush1.msra.mxu0 0.0
    %3023 = vmatprep.subr.mxu0 0.0
    %3024 = vmatpush1.msra.mxu0 0.0
    %3025 = vmatprep.subr.mxu0 0.0
    %3026 = vmatpush1.msra.mxu0 0.0
    %3027 = vmatprep.subr.mxu0 0.0
    %3028 = vmatpush1.msra.mxu0 0.0
    %3029 = vmatprep.subr.mxu0 0.0
    %3030 = vmatpush1.msra.mxu0 0.0
    %3031 = vmatprep.subr.mxu0 0.0
    %3032 = vmatpush1.msra.mxu0 0.0
    %3033 = vmatprep.subr.mxu0 0.0
    %3034 = vmatpush1.msra.mxu0 0.0
    %3035 = vmatprep.subr.mxu0 0.0
    %3036 = vmatpush1.msra.mxu0 0.0
    %3037 = vmatprep.subr.mxu0 0.0
    %3038 = vmatpush1.msra.mxu0 0.0
    %3039 = vmatprep.subr.mxu0 0.0
    %3040 = vmatpush1.msra.mxu0 0.0
    %3041 = vmatprep.subr.mxu0 0.0
    %3042 = vmatpush1.msra.mxu0 0.0
    %3043 = vmatprep.subr.mxu0 0.0
    %3044 = vmatpush1.msra.mxu0 0.0
    %3045 = vmatprep.subr.mxu0 0.0
    %3046 = vmatpush1.msra.mxu0 0.0
    %3047 = vmatprep.mubr.f32.mxu0 0.0
    %3048 = vmatmul.mubr.f32.gmra.mrb[0].mxu0 %v2981
    %v3049 = vpop.f32.mrb[0].mxu0
    %v3050 = vadd.f32 0.0, %v3049
    %v3051 = vpop.f32.mrb[0].mxu0
    %3052 = vdwg.mxu0
    %3053 = vset.pattern.permute.xlu0 1
    %3054 = vperm.xlu0 %3053, %v2838
    %v3055 = vpop.permute.xlu0 %3054
    %v3057 = vmul.f32 %v3055, %v2921
    %v3058 = vadd.f32 %v3057, %v3050
    %v3059 = vadd.f32 %v3058, %v2929
    %v3060 = vxor.u32 %v3059, 2147483648
    %v3061 = vmul.f32 %v3060, 1.442695
    %v3062 = vpow.pop %v3061
    %v3063 = vadd.f32 %v3062, 1.0
    %v3064 = vrcp.pop %v3063
    %v3065 = vmul.f32 1.0, %v3064
    %v3066 = vadd.f32 %v3057, %v2944
    %v3067 = vadd.f32 %v3050, %v2953
    %3069 = vrot.lane.b32.xlu0 %v3067, 64
    %v3070 = vpop.permute.xlu0 %3069
    %v3072 = vmul.f32 %v3065, %v3070
    %3074 = vrot.lane.b32.xlu0 %v3072, 64
    %v3075 = vpop.permute.xlu0 %3074
    %v3077 = vadd.f32 %v3066, %v3075
    %v3078 = vtanh.pop %v3077
    %v3079 = vsub.f32 1.0, %v3065
    %3081 = vrot.lane.b32.xlu0 %v3078, 96
    %v3082 = vpop.permute.xlu0 %3081
    %v3084 = vmul.f32 %v3079, %v3082
    %v3085 = vmul.f32 %v3065, %v2977
    %v3086 = vadd.f32 %v3084, %v3085
    %3088 = vrot.lane.b32.xlu0 %v3086, 96
    %v3089 = vpop.permute.xlu0 %3088
    %v3090 = vsel %vm66, %v3089, 0
    %3092 = vmatprep.subr.mxu0 0.0
    %3093 = vmatpush1.msra.mxu0 %v2825
    %3094 = vmatprep.subr.mxu0 0.0
    %3095 = vmatpush1.msra.mxu0 %v2826
    %3096 = vmatprep.subr.mxu0 0.0
    %3097 = vmatpush1.msra.mxu0 %v2827
    %3098 = vmatprep.subr.mxu0 0.0
    %3099 = vmatpush1.msra.mxu0 %v2828
    %3100 = vmatprep.subr.mxu0 0.0
    %3101 = vmatpush1.msra.mxu0 0.0
    %3102 = vmatprep.subr.mxu0 0.0
    %3103 = vmatpush1.msra.mxu0 0.0
    %3104 = vmatprep.subr.mxu0 0.0
    %3105 = vmatpush1.msra.mxu0 0.0
    %3106 = vmatprep.subr.mxu0 0.0
    %3107 = vmatpush1.msra.mxu0 0.0
    %3108 = vmatprep.subr.mxu0 0.0
    %3109 = vmatpush1.msra.mxu0 0.0
    %3110 = vmatprep.subr.mxu0 0.0
    %3111 = vmatpush1.msra.mxu0 0.0
    %3112 = vmatprep.subr.mxu0 0.0
    %3113 = vmatpush1.msra.mxu0 0.0
    %3114 = vmatprep.subr.mxu0 0.0
    %3115 = vmatpush1.msra.mxu0 0.0
    %3116 = vmatprep.subr.mxu0 0.0
    %3117 = vmatpush1.msra.mxu0 0.0
    %3118 = vmatprep.subr.mxu0 0.0
    %3119 = vmatpush1.msra.mxu0 0.0
    %3120 = vmatprep.subr.mxu0 0.0
    %3121 = vmatpush1.msra.mxu0 0.0
    %3122 = vmatprep.subr.mxu0 0.0
    %3123 = vmatpush1.msra.mxu0 0.0
    %3124 = vmatprep.subr.mxu0 0.0
    %3125 = vmatpush1.msra.mxu0 0.0
    %3126 = vmatprep.subr.mxu0 0.0
    %3127 = vmatpush1.msra.mxu0 0.0
    %3128 = vmatprep.subr.mxu0 0.0
    %3129 = vmatpush1.msra.mxu0 0.0
    %3130 = vmatprep.subr.mxu0 0.0
    %3131 = vmatpush1.msra.mxu0 0.0
    %3132 = vmatprep.subr.mxu0 0.0
    %3133 = vmatpush1.msra.mxu0 0.0
    %3134 = vmatprep.subr.mxu0 0.0
    %3135 = vmatpush1.msra.mxu0 0.0
    %3136 = vmatprep.subr.mxu0 0.0
    %3137 = vmatpush1.msra.mxu0 0.0
    %3138 = vmatprep.subr.mxu0 0.0
    %3139 = vmatpush1.msra.mxu0 0.0
    %3140 = vmatprep.subr.mxu0 0.0
    %3141 = vmatpush1.msra.mxu0 0.0
    %3142 = vmatprep.subr.mxu0 0.0
    %3143 = vmatpush1.msra.mxu0 0.0
    %3144 = vmatprep.subr.mxu0 0.0
    %3145 = vmatpush1.msra.mxu0 0.0
    %3146 = vmatprep.subr.mxu0 0.0
    %3147 = vmatpush1.msra.mxu0 0.0
    %3148 = vmatprep.subr.mxu0 0.0
    %3149 = vmatpush1.msra.mxu0 0.0
    %3150 = vmatprep.subr.mxu0 0.0
    %3151 = vmatpush1.msra.mxu0 0.0
    %3152 = vmatprep.subr.mxu0 0.0
    %3153 = vmatpush1.msra.mxu0 0.0
    %3154 = vmatprep.subr.mxu0 0.0
    %3155 = vmatpush1.msra.mxu0 0.0
    %3156 = vmatprep.mubr.f32.mxu0 0.0
    %3157 = vmatmul.mubr.f32.gmra.mrb[0].mxu0 %v3090
    %v3158 = vpop.f32.mrb[0].mxu0
    %v3159 = vadd.f32 0.0, %v3158
    %v3160 = vpop.f32.mrb[0].mxu0
    %3161 = vdwg.mxu0
    %3162 = vset.pattern.permute.xlu0 2
    %3163 = vperm.xlu0 %3162, %v2838
    %v3164 = vpop.permute.xlu0 %3163
    %v3166 = vmul.f32 %v3164, %v2921
    %v3167 = vadd.f32 %v3166, %v3159
    %v3168 = vadd.f32 %v3167, %v2929
    %v3169 = vxor.u32 %v3168, 2147483648
    %v3170 = vmul.f32 %v3169, 1.442695
    %v3171 = vpow.pop %v3170
    %v3172 = vadd.f32 %v3171, 1.0
    %v3173 = vrcp.pop %v3172
    %v3174 = vmul.f32 1.0, %v3173
    %v3175 = vadd.f32 %v3166, %v2944
    %v3176 = vadd.f32 %v3159, %v2953
    %3178 = vrot.lane.b32.xlu0 %v3176, 64
    %v3179 = vpop.permute.xlu0 %3178
    %v3181 = vmul.f32 %v3174, %v3179
    %3183 = vrot.lane.b32.xlu0 %v3181, 64
    %v3184 = vpop.permute.xlu0 %3183
    %v3186 = vadd.f32 %v3175, %v3184
    %v3187 = vtanh.pop %v3186
    %v3188 = vsub.f32 1.0, %v3174
    %3190 = vrot.lane.b32.xlu0 %v3187, 96
    %v3191 = vpop.permute.xlu0 %3190
    %v3193 = vmul.f32 %v3188, %v3191
    %v3194 = vmul.f32 %v3174, %v3086
    %v3195 = vadd.f32 %v3193, %v3194
    %3197 = vrot.lane.b32.xlu0 %v3195, 96
    %v3198 = vpop.permute.xlu0 %3197
    %v3199 = vsel %vm66, %v3198, 0
    %3201 = vmatprep.subr.mxu0 0.0
    %3202 = vmatpush1.msra.mxu0 %v2825
    %3203 = vmatprep.subr.mxu0 0.0
    %3204 = vmatpush1.msra.mxu0 %v2826
    %3205 = vmatprep.subr.mxu0 0.0
    %3206 = vmatpush1.msra.mxu0 %v2827
    %3207 = vmatprep.subr.mxu0 0.0
    %3208 = vmatpush1.msra.mxu0 %v2828
    %3209 = vmatprep.subr.mxu0 0.0
    %3210 = vmatpush1.msra.mxu0 0.0
    %3211 = vmatprep.subr.mxu0 0.0
    %3212 = vmatpush1.msra.mxu0 0.0
    %3213 = vmatprep.subr.mxu0 0.0
    %3214 = vmatpush1.msra.mxu0 0.0
    %3215 = vmatprep.subr.mxu0 0.0
    %3216 = vmatpush1.msra.mxu0 0.0
    %3217 = vmatprep.subr.mxu0 0.0
    %3218 = vmatpush1.msra.mxu0 0.0
    %3219 = vmatprep.subr.mxu0 0.0
    %3220 = vmatpush1.msra.mxu0 0.0
    %3221 = vmatprep.subr.mxu0 0.0
    %3222 = vmatpush1.msra.mxu0 0.0
    %3223 = vmatprep.subr.mxu0 0.0
    %3224 = vmatpush1.msra.mxu0 0.0
    %3225 = vmatprep.subr.mxu0 0.0
    %3226 = vmatpush1.msra.mxu0 0.0
    %3227 = vmatprep.subr.mxu0 0.0
    %3228 = vmatpush1.msra.mxu0 0.0
    %3229 = vmatprep.subr.mxu0 0.0
    %3230 = vmatpush1.msra.mxu0 0.0
    %3231 = vmatprep.subr.mxu0 0.0
    %3232 = vmatpush1.msra.mxu0 0.0
    %3233 = vmatprep.subr.mxu0 0.0
    %3234 = vmatpush1.msra.mxu0 0.0
    %3235 = vmatprep.subr.mxu0 0.0
    %3236 = vmatpush1.msra.mxu0 0.0
    %3237 = vmatprep.subr.mxu0 0.0
    %3238 = vmatpush1.msra.mxu0 0.0
    %3239 = vmatprep.subr.mxu0 0.0
    %3240 = vmatpush1.msra.mxu0 0.0
    %3241 = vmatprep.subr.mxu0 0.0
    %3242 = vmatpush1.msra.mxu0 0.0
    %3243 = vmatprep.subr.mxu0 0.0
    %3244 = vmatpush1.msra.mxu0 0.0
    %3245 = vmatprep.subr.mxu0 0.0
    %3246 = vmatpush1.msra.mxu0 0.0
    %3247 = vmatprep.subr.mxu0 0.0
    %3248 = vmatpush1.msra.mxu0 0.0
    %3249 = vmatprep.subr.mxu0 0.0
    %3250 = vmatpush1.msra.mxu0 0.0
    %3251 = vmatprep.subr.mxu0 0.0
    %3252 = vmatpush1.msra.mxu0 0.0
    %3253 = vmatprep.subr.mxu0 0.0
    %3254 = vmatpush1.msra.mxu0 0.0
    %3255 = vmatprep.subr.mxu0 0.0
    %3256 = vmatpush1.msra.mxu0 0.0
    %3257 = vmatprep.subr.mxu0 0.0
    %3258 = vmatpush1.msra.mxu0 0.0
    %3259 = vmatprep.subr.mxu0 0.0
    %3260 = vmatpush1.msra.mxu0 0.0
    %3261 = vmatprep.subr.mxu0 0.0
    %3262 = vmatpush1.msra.mxu0 0.0
    %3263 = vmatprep.subr.mxu0 0.0
    %3264 = vmatpush1.msra.mxu0 0.0
    %3265 = vmatprep.mubr.f32.mxu0 0.0
    %3266 = vmatmul.mubr.f32.gmra.mrb[0].mxu0 %v3199
    %v3267 = vpop.f32.mrb[0].mxu0
    %v3268 = vadd.f32 0.0, %v3267
    %v3269 = vpop.f32.mrb[0].mxu0
    %3270 = vdwg.mxu0
    %3271 = vset.pattern.permute.xlu0 3
    %3272 = vperm.xlu0 %3271, %v2838
    %v3273 = vpop.permute.xlu0 %3272
    %v3275 = vmul.f32 %v3273, %v2921
    %v3276 = vadd.f32 %v3275, %v3268
    %v3277 = vadd.f32 %v3276, %v2929
    %v3278 = vxor.u32 %v3277, 2147483648
    %v3279 = vmul.f32 %v3278, 1.442695
    %v3280 = vpow.pop %v3279
    %v3281 = vadd.f32 %v3280, 1.0
    %v3282 = vrcp.pop %v3281
    %v3283 = vmul.f32 1.0, %v3282
    %v3284 = vadd.f32 %v3275, %v2944
    %v3285 = vadd.f32 %v3268, %v2953
    %3287 = vrot.lane.b32.xlu0 %v3285, 64
    %v3288 = vpop.permute.xlu0 %3287
    %v3290 = vmul.f32 %v3283, %v3288
    %3292 = vrot.lane.b32.xlu0 %v3290, 64
    %v3293 = vpop.permute.xlu0 %3292
    %v3295 = vadd.f32 %v3284, %v3293
    %v3296 = vtanh.pop %v3295
    %v3297 = vsub.f32 1.0, %v3283
    %3299 = vrot.lane.b32.xlu0 %v3296, 96
    %v3300 = vpop.permute.xlu0 %3299
    %v3302 = vmul.f32 %v3297, %v3300
    %v3303 = vmul.f32 %v3283, %v3195
    %v3304 = vadd.f32 %v3302, %v3303
    %3306 = vrot.lane.b32.xlu0 %v3304, 96
    %v3307 = vpop.permute.xlu0 %3306
    %v3308 = vsel %vm66, %v3307, 0
    %3310 = vmatprep.subr.mxu0 0.0
    %3311 = vmatpush1.msra.mxu0 %v2825
    %3312 = vmatprep.subr.mxu0 0.0
    %3313 = vmatpush1.msra.mxu0 %v2826
    %3314 = vmatprep.subr.mxu0 0.0
    %3315 = vmatpush1.msra.mxu0 %v2827
    %3316 = vmatprep.subr.mxu0 0.0
    %3317 = vmatpush1.msra.mxu0 %v2828
    %3318 = vmatprep.subr.mxu0 0.0
    %3319 = vmatpush1.msra.mxu0 0.0
    %3320 = vmatprep.subr.mxu0 0.0
    %3321 = vmatpush1.msra.mxu0 0.0
    %3322 = vmatprep.subr.mxu0 0.0
    %3323 = vmatpush1.msra.mxu0 0.0
    %3324 = vmatprep.subr.mxu0 0.0
    %3325 = vmatpush1.msra.mxu0 0.0
    %3326 = vmatprep.subr.mxu0 0.0
    %3327 = vmatpush1.msra.mxu0 0.0
    %3328 = vmatprep.subr.mxu0 0.0
    %3329 = vmatpush1.msra.mxu0 0.0
    %3330 = vmatprep.subr.mxu0 0.0
    %3331 = vmatpush1.msra.mxu0 0.0
    %3332 = vmatprep.subr.mxu0 0.0
    %3333 = vmatpush1.msra.mxu0 0.0
    %3334 = vmatprep.subr.mxu0 0.0
    %3335 = vmatpush1.msra.mxu0 0.0
    %3336 = vmatprep.subr.mxu0 0.0
    %3337 = vmatpush1.msra.mxu0 0.0
    %3338 = vmatprep.subr.mxu0 0.0
    %3339 = vmatpush1.msra.mxu0 0.0
    %3340 = vmatprep.subr.mxu0 0.0
    %3341 = vmatpush1.msra.mxu0 0.0
    %3342 = vmatprep.subr.mxu0 0.0
    %3343 = vmatpush1.msra.mxu0 0.0
    %3344 = vmatprep.subr.mxu0 0.0
    %3345 = vmatpush1.msra.mxu0 0.0
    %3346 = vmatprep.subr.mxu0 0.0
    %3347 = vmatpush1.msra.mxu0 0.0
    %3348 = vmatprep.subr.mxu0 0.0
    %3349 = vmatpush1.msra.mxu0 0.0
    %3350 = vmatprep.subr.mxu0 0.0
    %3351 = vmatpush1.msra.mxu0 0.0
    %3352 = vmatprep.subr.mxu0 0.0
    %3353 = vmatpush1.msra.mxu0 0.0
    %3354 = vmatprep.subr.mxu0 0.0
    %3355 = vmatpush1.msra.mxu0 0.0
    %3356 = vmatprep.subr.mxu0 0.0
    %3357 = vmatpush1.msra.mxu0 0.0
    %3358 = vmatprep.subr.mxu0 0.0
    %3359 = vmatpush1.msra.mxu0 0.0
    %3360 = vmatprep.subr.mxu0 0.0
    %3361 = vmatpush1.msra.mxu0 0.0
    %3362 = vmatprep.subr.mxu0 0.0
    %3363 = vmatpush1.msra.mxu0 0.0
    %3364 = vmatprep.subr.mxu0 0.0
    %3365 = vmatpush1.msra.mxu0 0.0
    %3366 = vmatprep.subr.mxu0 0.0
    %3367 = vmatpush1.msra.mxu0 0.0
    %3368 = vmatprep.subr.mxu0 0.0
    %3369 = vmatpush1.msra.mxu0 0.0
    %3370 = vmatprep.subr.mxu0 0.0
    %3371 = vmatpush1.msra.mxu0 0.0
    %3372 = vmatprep.subr.mxu0 0.0
    %3373 = vmatpush1.msra.mxu0 0.0
    %3374 = vmatprep.mubr.f32.mxu0 0.0
    %3375 = vmatmul.mubr.f32.gmra.mrb[0].mxu0 %v3308
    %v3376 = vpop.f32.mrb[0].mxu0
    %v3377 = vadd.f32 0.0, %v3376
    %v3378 = vpop.f32.mrb[0].mxu0
    %3379 = vdwg.mxu0
    %3380 = vset.pattern.permute.xlu0 4
    %3381 = vperm.xlu0 %3380, %v2838
    %v3382 = vpop.permute.xlu0 %3381
    %v3384 = vmul.f32 %v3382, %v2921
    %v3385 = vadd.f32 %v3384, %v3377
    %v3386 = vadd.f32 %v3385, %v2929
    %v3387 = vxor.u32 %v3386, 2147483648
    %v3388 = vmul.f32 %v3387, 1.442695
    %v3389 = vpow.pop %v3388
    %v3390 = vadd.f32 %v3389, 1.0
    %v3391 = vrcp.pop %v3390
    %v3392 = vmul.f32 1.0, %v3391
    %v3393 = vadd.f32 %v3384, %v2944
    %v3394 = vadd.f32 %v3377, %v2953
    %3396 = vrot.lane.b32.xlu0 %v3394, 64
    %v3397 = vpop.permute.xlu0 %3396
    %v3399 = vmul.f32 %v3392, %v3397
    %3401 = vrot.lane.b32.xlu0 %v3399, 64
    %v3402 = vpop.permute.xlu0 %3401
    %v3404 = vadd.f32 %v3393, %v3402
    %v3405 = vtanh.pop %v3404
    %v3406 = vsub.f32 1.0, %v3392
    %3408 = vrot.lane.b32.xlu0 %v3405, 96
    %v3409 = vpop.permute.xlu0 %3408
    %v3411 = vmul.f32 %v3406, %v3409
    %v3412 = vmul.f32 %v3392, %v3304
    %v3413 = vadd.f32 %v3411, %v3412
    %3415 = vrot.lane.b32.xlu0 %v3413, 96
    %v3416 = vpop.permute.xlu0 %3415
    %v3417 = vsel %vm66, %v3416, 0
    %3419 = vmatprep.subr.mxu0 0.0
    %3420 = vmatpush1.msra.mxu0 %v2825
    %3421 = vmatprep.subr.mxu0 0.0
    %3422 = vmatpush1.msra.mxu0 %v2826
    %3423 = vmatprep.subr.mxu0 0.0
    %3424 = vmatpush1.msra.mxu0 %v2827
    %3425 = vmatprep.subr.mxu0 0.0
    %3426 = vmatpush1.msra.mxu0 %v2828
    %3427 = vmatprep.subr.mxu0 0.0
    %3428 = vmatpush1.msra.mxu0 0.0
    %3429 = vmatprep.subr.mxu0 0.0
    %3430 = vmatpush1.msra.mxu0 0.0
    %3431 = vmatprep.subr.mxu0 0.0
    %3432 = vmatpush1.msra.mxu0 0.0
    %3433 = vmatprep.subr.mxu0 0.0
    %3434 = vmatpush1.msra.mxu0 0.0
    %3435 = vmatprep.subr.mxu0 0.0
    %3436 = vmatpush1.msra.mxu0 0.0
    %3437 = vmatprep.subr.mxu0 0.0
    %3438 = vmatpush1.msra.mxu0 0.0
    %3439 = vmatprep.subr.mxu0 0.0
    %3440 = vmatpush1.msra.mxu0 0.0
    %3441 = vmatprep.subr.mxu0 0.0
    %3442 = vmatpush1.msra.mxu0 0.0
    %3443 = vmatprep.subr.mxu0 0.0
    %3444 = vmatpush1.msra.mxu0 0.0
    %3445 = vmatprep.subr.mxu0 0.0
    %3446 = vmatpush1.msra.mxu0 0.0
    %3447 = vmatprep.subr.mxu0 0.0
    %3448 = vmatpush1.msra.mxu0 0.0
    %3449 = vmatprep.subr.mxu0 0.0
    %3450 = vmatpush1.msra.mxu0 0.0
    %3451 = vmatprep.subr.mxu0 0.0
    %3452 = vmatpush1.msra.mxu0 0.0
    %3453 = vmatprep.subr.mxu0 0.0
    %3454 = vmatpush1.msra.mxu0 0.0
    %3455 = vmatprep.subr.mxu0 0.0
    %3456 = vmatpush1.msra.mxu0 0.0
    %3457 = vmatprep.subr.mxu0 0.0
    %3458 = vmatpush1.msra.mxu0 0.0
    %3459 = vmatprep.subr.mxu0 0.0
    %3460 = vmatpush1.msra.mxu0 0.0
    %3461 = vmatprep.subr.mxu0 0.0
    %3462 = vmatpush1.msra.mxu0 0.0
    %3463 = vmatprep.subr.mxu0 0.0
    %3464 = vmatpush1.msra.mxu0 0.0
    %3465 = vmatprep.subr.mxu0 0.0
    %3466 = vmatpush1.msra.mxu0 0.0
    %3467 = vmatprep.subr.mxu0 0.0
    %3468 = vmatpush1.msra.mxu0 0.0
    %3469 = vmatprep.subr.mxu0 0.0
    %3470 = vmatpush1.msra.mxu0 0.0
    %3471 = vmatprep.subr.mxu0 0.0
    %3472 = vmatpush1.msra.mxu0 0.0
    %3473 = vmatprep.subr.mxu0 0.0
    %3474 = vmatpush1.msra.mxu0 0.0
    %3475 = vmatprep.subr.mxu0 0.0
    %3476 = vmatpush1.msra.mxu0 0.0
    %3477 = vmatprep.subr.mxu0 0.0
    %3478 = vmatpush1.msra.mxu0 0.0
    %3479 = vmatprep.subr.mxu0 0.0
    %3480 = vmatpush1.msra.mxu0 0.0
    %3481 = vmatprep.subr.mxu0 0.0
    %3482 = vmatpush1.msra.mxu0 0.0
    %3483 = vmatprep.mubr.f32.mxu0 0.0
    %3484 = vmatmul.mubr.f32.gmra.mrb[0].mxu0 %v3417
    %v3485 = vpop.f32.mrb[0].mxu0
    %v3486 = vadd.f32 0.0, %v3485
    %v3487 = vpop.f32.mrb[0].mxu0
    %3488 = vdwg.mxu0
    %3489 = vset.pattern.permute.xlu0 5
    %3490 = vperm.xlu0 %3489, %v2838
    %v3491 = vpop.permute.xlu0 %3490
    %v3493 = vmul.f32 %v3491, %v2921
    %v3494 = vadd.f32 %v3493, %v3486
    %v3495 = vadd.f32 %v3494, %v2929
    %v3496 = vxor.u32 %v3495, 2147483648
    %v3497 = vmul.f32 %v3496, 1.442695
    %v3498 = vpow.pop %v3497
    %v3499 = vadd.f32 %v3498, 1.0
    %v3500 = vrcp.pop %v3499
    %v3501 = vmul.f32 1.0, %v3500
    %v3502 = vadd.f32 %v3493, %v2944
    %v3503 = vadd.f32 %v3486, %v2953
    %3505 = vrot.lane.b32.xlu0 %v3503, 64
    %v3506 = vpop.permute.xlu0 %3505
    %v3508 = vmul.f32 %v3501, %v3506
    %3510 = vrot.lane.b32.xlu0 %v3508, 64
    %v3511 = vpop.permute.xlu0 %3510
    %v3513 = vadd.f32 %v3502, %v3511
    %v3514 = vtanh.pop %v3513
    %v3515 = vsub.f32 1.0, %v3501
    %3517 = vrot.lane.b32.xlu0 %v3514, 96
    %v3518 = vpop.permute.xlu0 %3517
    %v3520 = vmul.f32 %v3515, %v3518
    %v3521 = vmul.f32 %v3501, %v3413
    %v3522 = vadd.f32 %v3520, %v3521
    %3524 = vrot.lane.b32.xlu0 %v3522, 96
    %v3525 = vpop.permute.xlu0 %3524
    %v3526 = vsel %vm66, %v3525, 0
    %3528 = vmatprep.subr.mxu0 0.0
    %3529 = vmatpush1.msra.mxu0 %v2825
    %3530 = vmatprep.subr.mxu0 0.0
    %3531 = vmatpush1.msra.mxu0 %v2826
    %3532 = vmatprep.subr.mxu0 0.0
    %3533 = vmatpush1.msra.mxu0 %v2827
    %3534 = vmatprep.subr.mxu0 0.0
    %3535 = vmatpush1.msra.mxu0 %v2828
    %3536 = vmatprep.subr.mxu0 0.0
    %3537 = vmatpush1.msra.mxu0 0.0
    %3538 = vmatprep.subr.mxu0 0.0
    %3539 = vmatpush1.msra.mxu0 0.0
    %3540 = vmatprep.subr.mxu0 0.0
    %3541 = vmatpush1.msra.mxu0 0.0
    %3542 = vmatprep.subr.mxu0 0.0
    %3543 = vmatpush1.msra.mxu0 0.0
    %3544 = vmatprep.subr.mxu0 0.0
    %3545 = vmatpush1.msra.mxu0 0.0
    %3546 = vmatprep.subr.mxu0 0.0
    %3547 = vmatpush1.msra.mxu0 0.0
    %3548 = vmatprep.subr.mxu0 0.0
    %3549 = vmatpush1.msra.mxu0 0.0
    %3550 = vmatprep.subr.mxu0 0.0
    %3551 = vmatpush1.msra.mxu0 0.0
    %3552 = vmatprep.subr.mxu0 0.0
    %3553 = vmatpush1.msra.mxu0 0.0
    %3554 = vmatprep.subr.mxu0 0.0
    %3555 = vmatpush1.msra.mxu0 0.0
    %3556 = vmatprep.subr.mxu0 0.0
    %3557 = vmatpush1.msra.mxu0 0.0
    %3558 = vmatprep.subr.mxu0 0.0
    %3559 = vmatpush1.msra.mxu0 0.0
    %3560 = vmatprep.subr.mxu0 0.0
    %3561 = vmatpush1.msra.mxu0 0.0
    %3562 = vmatprep.subr.mxu0 0.0
    %3563 = vmatpush1.msra.mxu0 0.0
    %3564 = vmatprep.subr.mxu0 0.0
    %3565 = vmatpush1.msra.mxu0 0.0
    %3566 = vmatprep.subr.mxu0 0.0
    %3567 = vmatpush1.msra.mxu0 0.0
    %3568 = vmatprep.subr.mxu0 0.0
    %3569 = vmatpush1.msra.mxu0 0.0
    %3570 = vmatprep.subr.mxu0 0.0
    %3571 = vmatpush1.msra.mxu0 0.0
    %3572 = vmatprep.subr.mxu0 0.0
    %3573 = vmatpush1.msra.mxu0 0.0
    %3574 = vmatprep.subr.mxu0 0.0
    %3575 = vmatpush1.msra.mxu0 0.0
    %3576 = vmatprep.subr.mxu0 0.0
    %3577 = vmatpush1.msra.mxu0 0.0
    %3578 = vmatprep.subr.mxu0 0.0
    %3579 = vmatpush1.msra.mxu0 0.0
    %3580 = vmatprep.subr.mxu0 0.0
    %3581 = vmatpush1.msra.mxu0 0.0
    %3582 = vmatprep.subr.mxu0 0.0
    %3583 = vmatpush1.msra.mxu0 0.0
    %3584 = vmatprep.subr.mxu0 0.0
    %3585 = vmatpush1.msra.mxu0 0.0
    %3586 = vmatprep.subr.mxu0 0.0
    %3587 = vmatpush1.msra.mxu0 0.0
    %3588 = vmatprep.subr.mxu0 0.0
    %3589 = vmatpush1.msra.mxu0 0.0
    %3590 = vmatprep.subr.mxu0 0.0
    %3591 = vmatpush1.msra.mxu0 0.0
    %3592 = vmatprep.mubr.f32.mxu0 0.0
    %3593 = vmatmul.mubr.f32.gmra.mrb[0].mxu0 %v3526
    %v3594 = vpop.f32.mrb[0].mxu0
    %v3595 = vadd.f32 0.0, %v3594
    %v3596 = vpop.f32.mrb[0].mxu0
    %3597 = vdwg.mxu0
    %3598 = vset.pattern.permute.xlu0 6
    %3599 = vperm.xlu0 %3598, %v2838
    %v3600 = vpop.permute.xlu0 %3599
    %v3602 = vmul.f32 %v3600, %v2921
    %v3603 = vadd.f32 %v3602, %v3595
    %v3604 = vadd.f32 %v3603, %v2929
    %v3605 = vxor.u32 %v3604, 2147483648
    %v3606 = vmul.f32 %v3605, 1.442695
    %v3607 = vpow.pop %v3606
    %v3608 = vadd.f32 %v3607, 1.0
    %v3609 = vrcp.pop %v3608
    %v3610 = vmul.f32 1.0, %v3609
    %v3611 = vadd.f32 %v3602, %v2944
    %v3612 = vadd.f32 %v3595, %v2953
    %3614 = vrot.lane.b32.xlu0 %v3612, 64
    %v3615 = vpop.permute.xlu0 %3614
    %v3617 = vmul.f32 %v3610, %v3615
    %3619 = vrot.lane.b32.xlu0 %v3617, 64
    %v3620 = vpop.permute.xlu0 %3619
    %v3622 = vadd.f32 %v3611, %v3620
    %v3623 = vtanh.pop %v3622
    %v3624 = vsub.f32 1.0, %v3610
    %3626 = vrot.lane.b32.xlu0 %v3623, 96
    %v3627 = vpop.permute.xlu0 %3626
    %v3629 = vmul.f32 %v3624, %v3627
    %v3630 = vmul.f32 %v3610, %v3522
    %v3631 = vadd.f32 %v3629, %v3630
    %3633 = vrot.lane.b32.xlu0 %v3631, 96
    %v3634 = vpop.permute.xlu0 %3633
    %v3635 = vsel %vm66, %v3634, 0
    %3637 = vmatprep.subr.mxu0 0.0
    %3638 = vmatpush1.msra.mxu0 %v2825
    %3639 = vmatprep.subr.mxu0 0.0
    %3640 = vmatpush1.msra.mxu0 %v2826
    %3641 = vmatprep.subr.mxu0 0.0
    %3642 = vmatpush1.msra.mxu0 %v2827
    %3643 = vmatprep.subr.mxu0 0.0
    %3644 = vmatpush1.msra.mxu0 %v2828
    %3645 = vmatprep.subr.mxu0 0.0
    %3646 = vmatpush1.msra.mxu0 0.0
    %3647 = vmatprep.subr.mxu0 0.0
    %3648 = vmatpush1.msra.mxu0 0.0
    %3649 = vmatprep.subr.mxu0 0.0
    %3650 = vmatpush1.msra.mxu0 0.0
    %3651 = vmatprep.subr.mxu0 0.0
    %3652 = vmatpush1.msra.mxu0 0.0
    %3653 = vmatprep.subr.mxu0 0.0
    %3654 = vmatpush1.msra.mxu0 0.0
    %3655 = vmatprep.subr.mxu0 0.0
    %3656 = vmatpush1.msra.mxu0 0.0
    %3657 = vmatprep.subr.mxu0 0.0
    %3658 = vmatpush1.msra.mxu0 0.0
    %3659 = vmatprep.subr.mxu0 0.0
    %3660 = vmatpush1.msra.mxu0 0.0
    %3661 = vmatprep.subr.mxu0 0.0
    %3662 = vmatpush1.msra.mxu0 0.0
    %3663 = vmatprep.subr.mxu0 0.0
    %3664 = vmatpush1.msra.mxu0 0.0
    %3665 = vmatprep.subr.mxu0 0.0
    %3666 = vmatpush1.msra.mxu0 0.0
    %3667 = vmatprep.subr.mxu0 0.0
    %3668 = vmatpush1.msra.mxu0 0.0
    %3669 = vmatprep.subr.mxu0 0.0
    %3670 = vmatpush1.msra.mxu0 0.0
    %3671 = vmatprep.subr.mxu0 0.0
    %3672 = vmatpush1.msra.mxu0 0.0
    %3673 = vmatprep.subr.mxu0 0.0
    %3674 = vmatpush1.msra.mxu0 0.0
    %3675 = vmatprep.subr.mxu0 0.0
    %3676 = vmatpush1.msra.mxu0 0.0
    %3677 = vmatprep.subr.mxu0 0.0
    %3678 = vmatpush1.msra.mxu0 0.0
    %3679 = vmatprep.subr.mxu0 0.0
    %3680 = vmatpush1.msra.mxu0 0.0
    %3681 = vmatprep.subr.mxu0 0.0
    %3682 = vmatpush1.msra.mxu0 0.0
    %3683 = vmatprep.subr.mxu0 0.0
    %3684 = vmatpush1.msra.mxu0 0.0
    %3685 = vmatprep.subr.mxu0 0.0
    %3686 = vmatpush1.msra.mxu0 0.0
    %3687 = vmatprep.subr.mxu0 0.0
    %3688 = vmatpush1.msra.mxu0 0.0
    %3689 = vmatprep.subr.mxu0 0.0
    %3690 = vmatpush1.msra.mxu0 0.0
    %3691 = vmatprep.subr.mxu0 0.0
    %3692 = vmatpush1.msra.mxu0 0.0
    %3693 = vmatprep.subr.mxu0 0.0
    %3694 = vmatpush1.msra.mxu0 0.0
    %3695 = vmatprep.subr.mxu0 0.0
    %3696 = vmatpush1.msra.mxu0 0.0
    %3697 = vmatprep.subr.mxu0 0.0
    %3698 = vmatpush1.msra.mxu0 0.0
    %3699 = vmatprep.subr.mxu0 0.0
    %3700 = vmatpush1.msra.mxu0 0.0
    %3701 = vmatprep.mubr.f32.mxu0 0.0
    %3702 = vmatmul.mubr.f32.gmra.mrb[0].mxu0 %v3635
    %v3703 = vpop.f32.mrb[0].mxu0
    %v3704 = vadd.f32 0.0, %v3703
    %v3705 = vpop.f32.mrb[0].mxu0
    %3706 = vdwg.mxu0
    %3707 = vset.pattern.permute.xlu0 7
    %3708 = vperm.xlu0 %3707, %v2838
    %v3709 = vpop.permute.xlu0 %3708
    %v3711 = vmul.f32 %v3709, %v2921
    %v3712 = vadd.f32 %v3711, %v3704
    %v3713 = vadd.f32 %v3712, %v2929
    %v3714 = vxor.u32 %v3713, 2147483648
    %v3715 = vmul.f32 %v3714, 1.442695
    %v3716 = vpow.pop %v3715
    %v3717 = vadd.f32 %v3716, 1.0
    %v3718 = vrcp.pop %v3717
    %v3719 = vmul.f32 1.0, %v3718
    %v3720 = vadd.f32 %v3711, %v2944
    %v3721 = vadd.f32 %v3704, %v2953
    %3723 = vrot.lane.b32.xlu0 %v3721, 64
    %v3724 = vpop.permute.xlu0 %3723
    %v3726 = vmul.f32 %v3719, %v3724
    %3728 = vrot.lane.b32.xlu0 %v3726, 64
    %v3729 = vpop.permute.xlu0 %3728
    %v3731 = vadd.f32 %v3720, %v3729
    %v3732 = vtanh.pop %v3731
    %v3733 = vsub.f32 1.0, %v3719
    %3735 = vrot.lane.b32.xlu0 %v3732, 96
    %v3736 = vpop.permute.xlu0 %3735
    %v3738 = vmul.f32 %v3733, %v3736
    %v3739 = vmul.f32 %v3719, %v3631
    %v3740 = vadd.f32 %v3738, %v3739
    %3742 = vrot.lane.b32.xlu0 %v3740, 96
    %v3743 = vpop.permute.xlu0 %3742
    %3745 = vst.msk [vmem:[%s2822] sm:$0xff] %vm66, %v3743
    // Predicated region
    $region58: #{tpu_custom_call.1} parent=1 // pred_check
      %p3746 = pneg %p47
    $region59: #{tpu_custom_call.1} parent=1 // pred_check_branch
      %3748 = sbr.rel (%p3746) target = $region61
    $region60: #{tpu_custom_call.1} parent=1 // pred_region
      %v3749 = vld [vmem:[%s1] sm:$0xff]
      %v3750 = vld [vmem:[#allocation2] sm:$0xff]
      %v3751 = vld [vmem:[%s974] sm:$0xff]
      %v3752 = vld [vmem:[%s1898] sm:$0xff]
      %v3753 = vld [vmem:[%s2822] sm:$0xff]
      %3755 = vrot.lane.b32.xlu0 %v3751, 32
      %v3756 = vpop.permute.xlu0 %3755
      %3759 = vrot.lane.b32.xlu0 %v3752, 64
      %v3760 = vpop.permute.xlu0 %3759
      %3763 = vrot.lane.b32.xlu0 %v3753, 96
      %v3764 = vpop.permute.xlu0 %3763
      %v3766 = vsel %vm66, %v3750, %v3756
      %vm3767 = vcmask 523264
      %v3768 = vsel %vm3767, %v3766, %v3760
      %vm3769 = vcmask 785408
      %v3770 = vsel %vm3769, %v3768, %v3764
      %3771 = vst [vmem:[#allocation3] sm:$0xff] %v3770
      %vm3772 = vcmask 130048
      %3773 = vst.msk [vmem:[#allocation3 + $0x8] sm:$0xff] %vm3772, %v3749
      %v3774 = vld [vmem:[%s7] sm:$0xff]
      %v3775 = vld [vmem:[%s7 + $0x8] sm:$0xff]
      %v3776 = vld [vmem:[%s7 + $0x10] sm:$0xff]
      %v3777 = vld [vmem:[%s7 + $0x18] sm:$0xff]
      %v3778 = vld [vmem:[%s7 + $0x20] sm:$0xff]
      %v3779 = vld [vmem:[%s7 + $0x28] sm:$0xff]
      %v3780 = vld [vmem:[%s7 + $0x30] sm:$0xff]
      %v3781 = vld [vmem:[%s7 + $0x38] sm:$0xff]
      %v3782 = vld [vmem:[%s7 + $0x40] sm:$0xff]
      %v3783 = vld [vmem:[%s7 + $0x48] sm:$0xff]
      %v3784 = vld [vmem:[%s7 + $0x50] sm:$0xff]
      %v3785 = vld [vmem:[%s7 + $0x58] sm:$0xff]
      %v3786 = vld [vmem:[%s7 + $0x60] sm:$0xff]
      %v3787 = vld [vmem:[%s7 + $0x68] sm:$0xff]
      %v3788 = vld [vmem:[%s7 + $0x70] sm:$0xff]
      %v3789 = vld [vmem:[%s7 + $0x78] sm:$0xff]
      %v3790 = vld [vmem:[%s7 + $0x80] sm:$0xff]
      %v3791 = vld [vmem:[%s7 + $0x88] sm:$0xff]
      %v3792 = vld [vmem:[%s8] sm:$0x1]
      %v3794 = vlaneseq
      %v3795 = vshrl.u32 %v3794, 7
      %v3796 = vsub.s32 0, %v3795
      %v3797 = vrot.slane %v3792, %v3796
      %v3800 = vsel %vm3772, %v3749, 0
      %3802 = vmatprep.subr.mxu0 0.0
      %3803 = vmatpush1.msra.mxu0 %v3774
      %3804 = vmatprep.subr.mxu0 0.0
      %3805 = vmatpush1.msra.mxu0 %v3775
      %3806 = vmatprep.subr.mxu0 0.0
      %3807 = vmatpush1.msra.mxu0 %v3776
      %3808 = vmatprep.subr.mxu0 0.0
      %3809 = vmatpush1.msra.mxu0 %v3777
      %3810 = vmatprep.subr.mxu0 0.0
      %3811 = vmatpush1.msra.mxu0 %v3778
      %3812 = vmatprep.subr.mxu0 0.0
      %3813 = vmatpush1.msra.mxu0 %v3779
      %3814 = vmatprep.subr.mxu0 0.0
      %3815 = vmatpush1.msra.mxu0 %v3780
      %3816 = vmatprep.subr.mxu0 0.0
      %3817 = vmatpush1.msra.mxu0 %v3781
      %3818 = vmatprep.subr.mxu0 0.0
      %3819 = vmatpush1.msra.mxu0 %v3782
      %3820 = vmatprep.subr.mxu0 0.0
      %3821 = vmatpush1.msra.mxu0 %v3783
      %3822 = vmatprep.subr.mxu0 0.0
      %3823 = vmatpush1.msra.mxu0 %v3784
      %3824 = vmatprep.subr.mxu0 0.0
      %3825 = vmatpush1.msra.mxu0 %v3785
      %3826 = vmatprep.subr.mxu0 0.0
      %3827 = vmatpush1.msra.mxu0 %v3786
      %3828 = vmatprep.subr.mxu0 0.0
      %3829 = vmatpush1.msra.mxu0 %v3787
      %3830 = vmatprep.subr.mxu0 0.0
      %3831 = vmatpush1.msra.mxu0 %v3788
      %3832 = vmatprep.subr.mxu0 0.0
      %3833 = vmatpush1.msra.mxu0 %v3789
      %3834 = vmatprep.subr.mxu0 0.0
      %3835 = vmatpush1.msra.mxu0 %v3790
      %3836 = vmatprep.subr.mxu0 0.0
      %3837 = vmatpush1.msra.mxu0 %v3791
      %3838 = vmatprep.subr.mxu0 0.0
      %3839 = vmatpush1.msra.mxu0 0.0
      %3840 = vmatprep.subr.mxu0 0.0
      %3841 = vmatpush1.msra.mxu0 0.0
      %3842 = vmatprep.subr.mxu0 0.0
      %3843 = vmatpush1.msra.mxu0 0.0
      %3844 = vmatprep.subr.mxu0 0.0
      %3845 = vmatpush1.msra.mxu0 0.0
      %3846 = vmatprep.subr.mxu0 0.0
      %3847 = vmatpush1.msra.mxu0 0.0
      %3848 = vmatprep.subr.mxu0 0.0
      %3849 = vmatpush1.msra.mxu0 0.0
      %3850 = vmatprep.subr.mxu0 0.0
      %3851 = vmatpush1.msra.mxu0 0.0
      %3852 = vmatprep.subr.mxu0 0.0
      %3853 = vmatpush1.msra.mxu0 0.0
      %3854 = vmatprep.subr.mxu0 0.0
      %3855 = vmatpush1.msra.mxu0 0.0
      %3856 = vmatprep.subr.mxu0 0.0
      %3857 = vmatpush1.msra.mxu0 0.0
      %3858 = vmatprep.subr.mxu0 0.0
      %3859 = vmatpush1.msra.mxu0 0.0
      %3860 = vmatprep.subr.mxu0 0.0
      %3861 = vmatpush1.msra.mxu0 0.0
      %3862 = vmatprep.subr.mxu0 0.0
      %3863 = vmatpush1.msra.mxu0 0.0
      %3864 = vmatprep.subr.mxu0 0.0
      %3865 = vmatpush1.msra.mxu0 0.0
      %3866 = vmatprep.mubr.f32.mxu0 %v3800
      %3867 = vmatmul.mubr.f32.gmra.mrb[0].mxu0 %v3770
      %v3868 = vpop.f32.mrb[0].mxu0
      %v3869 = vadd.f32 %v3797, %v3868
      %v3870 = vpop.f32.mrb[0].mxu0
      %3871 = vdwg.mxu0
      %v3872 = vmax.f32 %v3869, 0.0
      %v3873 = vld [vmem:[%s9] sm:$0xff]
      %v3874 = vld [vmem:[%s9 + $0x8] sm:$0xff]
      %v3875 = vld [vmem:[%s9 + $0x10] sm:$0xff]
      %v3876 = vld [vmem:[%s9 + $0x18] sm:$0xff]
      %v3877 = vld [vmem:[%s9 + $0x20] sm:$0xff]
      %v3878 = vld [vmem:[%s9 + $0x28] sm:$0xff]
      %v3879 = vld [vmem:[%s9 + $0x30] sm:$0xff]
      %v3880 = vld [vmem:[%s9 + $0x38] sm:$0xff]
      %v3881 = vld [vmem:[%s10] sm:$0x1]
      %v3883 = vlaneseq
      %v3884 = vshrl.u32 %v3883, 7
      %v3885 = vsub.s32 0, %v3884
      %v3886 = vrot.slane %v3881, %v3885
      %v3889 = vsel %vm3767, %v3872, 0
      %3891 = vmatprep.subr.mxu0 0.0
      %3892 = vmatpush1.msra.mxu0 %v3873
      %3893 = vmatprep.subr.mxu0 0.0
      %3894 = vmatpush1.msra.mxu0 %v3874
      %3895 = vmatprep.subr.mxu0 0.0
      %3896 = vmatpush1.msra.mxu0 %v3875
      %3897 = vmatprep.subr.mxu0 0.0
      %3898 = vmatpush1.msra.mxu0 %v3876
      %3899 = vmatprep.subr.mxu0 0.0
      %3900 = vmatpush1.msra.mxu0 %v3877
      %3901 = vmatprep.subr.mxu0 0.0
      %3902 = vmatpush1.msra.mxu0 %v3878
      %3903 = vmatprep.subr.mxu0 0.0
      %3904 = vmatpush1.msra.mxu0 %v3879
      %3905 = vmatprep.subr.mxu0 0.0
      %3906 = vmatpush1.msra.mxu0 %v3880
      %3907 = vmatprep.subr.mxu0 0.0
      %3908 = vmatpush1.msra.mxu0 0.0
      %3909 = vmatprep.subr.mxu0 0.0
      %3910 = vmatpush1.msra.mxu0 0.0
      %3911 = vmatprep.subr.mxu0 0.0
      %3912 = vmatpush1.msra.mxu0 0.0
      %3913 = vmatprep.subr.mxu0 0.0
      %3914 = vmatpush1.msra.mxu0 0.0
      %3915 = vmatprep.subr.mxu0 0.0
      %3916 = vmatpush1.msra.mxu0 0.0
      %3917 = vmatprep.subr.mxu0 0.0
      %3918 = vmatpush1.msra.mxu0 0.0
      %3919 = vmatprep.subr.mxu0 0.0
      %3920 = vmatpush1.msra.mxu0 0.0
      %3921 = vmatprep.subr.mxu0 0.0
      %3922 = vmatpush1.msra.mxu0 0.0
      %3923 = vmatprep.subr.mxu0 0.0
      %3924 = vmatpush1.msra.mxu0 0.0
      %3925 = vmatprep.subr.mxu0 0.0
      %3926 = vmatpush1.msra.mxu0 0.0
      %3927 = vmatprep.subr.mxu0 0.0
      %3928 = vmatpush1.msra.mxu0 0.0
      %3929 = vmatprep.subr.mxu0 0.0
      %3930 = vmatpush1.msra.mxu0 0.0
      %3931 = vmatprep.subr.mxu0 0.0
      %3932 = vmatpush1.msra.mxu0 0.0
      %3933 = vmatprep.subr.mxu0 0.0
      %3934 = vmatpush1.msra.mxu0 0.0
      %3935 = vmatprep.subr.mxu0 0.0
      %3936 = vmatpush1.msra.mxu0 0.0
      %3937 = vmatprep.subr.mxu0 0.0
      %3938 = vmatpush1.msra.mxu0 0.0
      %3939 = vmatprep.subr.mxu0 0.0
      %3940 = vmatpush1.msra.mxu0 0.0
      %3941 = vmatprep.subr.mxu0 0.0
      %3942 = vmatpush1.msra.mxu0 0.0
      %3943 = vmatprep.subr.mxu0 0.0
      %3944 = vmatpush1.msra.mxu0 0.0
      %3945 = vmatprep.subr.mxu0 0.0
      %3946 = vmatpush1.msra.mxu0 0.0
      %3947 = vmatprep.subr.mxu0 0.0
      %3948 = vmatpush1.msra.mxu0 0.0
      %3949 = vmatprep.subr.mxu0 0.0
      %3950 = vmatpush1.msra.mxu0 0.0
      %3951 = vmatprep.subr.mxu0 0.0
      %3952 = vmatpush1.msra.mxu0 0.0
      %3953 = vmatprep.subr.mxu0 0.0
      %3954 = vmatpush1.msra.mxu0 0.0
      %3955 = vmatprep.mubr.f32.mxu0 0.0
      %3956 = vmatmul.mubr.f32.gmra.mrb[0].mxu0 %v3889
      %v3957 = vpop.f32.mrb[0].mxu0
      %v3958 = vadd.f32 %v3886, %v3957
      %v3959 = vpop.f32.mrb[0].mxu0
      %3960 = vdwg.mxu0
      %v3961 = vmax.f32 %v3958, 0.0
      %v3962 = vld [vmem:[%s11] sm:$0xff]
      %v3963 = vld [vmem:[%s11 + $0x8] sm:$0xff]
      %v3964 = vld [vmem:[%s11 + $0x10] sm:$0xff]
      %v3965 = vld [vmem:[%s11 + $0x18] sm:$0xff]
      %v3966 = vld [vmem:[%s12] sm:$0x1]
      %v3968 = vlaneseq
      %v3969 = vshrl.u32 %v3968, 7
      %v3970 = vsub.s32 0, %v3969
      %v3971 = vrot.slane %v3966, %v3970
      %v3974 = vsel %vm66, %v3961, 0
      %3976 = vmatprep.subr.mxu0 0.0
      %3977 = vmatpush1.msra.mxu0 %v3962
      %3978 = vmatprep.subr.mxu0 0.0
      %3979 = vmatpush1.msra.mxu0 %v3963
      %3980 = vmatprep.subr.mxu0 0.0
      %3981 = vmatpush1.msra.mxu0 %v3964
      %3982 = vmatprep.subr.mxu0 0.0
      %3983 = vmatpush1.msra.mxu0 %v3965
      %3984 = vmatprep.subr.mxu0 0.0
      %3985 = vmatpush1.msra.mxu0 0.0
      %3986 = vmatprep.subr.mxu0 0.0
      %3987 = vmatpush1.msra.mxu0 0.0
      %3988 = vmatprep.subr.mxu0 0.0
      %3989 = vmatpush1.msra.mxu0 0.0
      %3990 = vmatprep.subr.mxu0 0.0
      %3991 = vmatpush1.msra.mxu0 0.0
      %3992 = vmatprep.subr.mxu0 0.0
      %3993 = vmatpush1.msra.mxu0 0.0
      %3994 = vmatprep.subr.mxu0 0.0
      %3995 = vmatpush1.msra.mxu0 0.0
      %3996 = vmatprep.subr.mxu0 0.0
      %3997 = vmatpush1.msra.mxu0 0.0
      %3998 = vmatprep.subr.mxu0 0.0
      %3999 = vmatpush1.msra.mxu0 0.0
      %4000 = vmatprep.subr.mxu0 0.0
      %4001 = vmatpush1.msra.mxu0 0.0
      %4002 = vmatprep.subr.mxu0 0.0
      %4003 = vmatpush1.msra.mxu0 0.0
      %4004 = vmatprep.subr.mxu0 0.0
      %4005 = vmatpush1.msra.mxu0 0.0
      %4006 = vmatprep.subr.mxu0 0.0
      %4007 = vmatpush1.msra.mxu0 0.0
      %4008 = vmatprep.subr.mxu0 0.0
      %4009 = vmatpush1.msra.mxu0 0.0
      %4010 = vmatprep.subr.mxu0 0.0
      %4011 = vmatpush1.msra.mxu0 0.0
      %4012 = vmatprep.subr.mxu0 0.0
      %4013 = vmatpush1.msra.mxu0 0.0
      %4014 = vmatprep.subr.mxu0 0.0
      %4015 = vmatpush1.msra.mxu0 0.0
      %4016 = vmatprep.subr.mxu0 0.0
      %4017 = vmatpush1.msra.mxu0 0.0
      %4018 = vmatprep.subr.mxu0 0.0
      %4019 = vmatpush1.msra.mxu0 0.0
      %4020 = vmatprep.subr.mxu0 0.0
      %4021 = vmatpush1.msra.mxu0 0.0
      %4022 = vmatprep.subr.mxu0 0.0
      %4023 = vmatpush1.msra.mxu0 0.0
      %4024 = vmatprep.subr.mxu0 0.0
      %4025 = vmatpush1.msra.mxu0 0.0
      %4026 = vmatprep.subr.mxu0 0.0
      %4027 = vmatpush1.msra.mxu0 0.0
      %4028 = vmatprep.subr.mxu0 0.0
      %4029 = vmatpush1.msra.mxu0 0.0
      %4030 = vmatprep.subr.mxu0 0.0
      %4031 = vmatpush1.msra.mxu0 0.0
      %4032 = vmatprep.subr.mxu0 0.0
      %4033 = vmatpush1.msra.mxu0 0.0
      %4034 = vmatprep.subr.mxu0 0.0
      %4035 = vmatpush1.msra.mxu0 0.0
      %4036 = vmatprep.subr.mxu0 0.0
      %4037 = vmatpush1.msra.mxu0 0.0
      %4038 = vmatprep.subr.mxu0 0.0
      %4039 = vmatpush1.msra.mxu0 0.0
      %4040 = vmatprep.mubr.f32.mxu0 0.0
      %4041 = vmatmul.mubr.f32.gmra.mrb[0].mxu0 %v3974
      %v4042 = vpop.f32.mrb[0].mxu0
      %v4043 = vadd.f32 %v3971, %v4042
      %v4044 = vpop.f32.mrb[0].mxu0
      %4045 = vdwg.mxu0
      %vm4046 = vcmask 15360
      %v4047 = vsel %vm4046, %v4043, -inf
      %4048 = vmax.xlane.f32.xlu0 %v4047
      %v4049 = vpop.xlane.xlu0 %4048
      %v4050 = vsub.f32 %v4043, %v4049
      %v4051 = vmul.f32 %v4050, 1.442695
      %v4052 = vpow.pop %v4051
      %v4053 = vsel %vm4046, %v4052, 0.0
      %4054 = vadd.xlane.f32.xlu0 %v4053
      %v4055 = vpop.xlane.xlu0 %4054
      %v4056 = vrcp.pop %v4055
      %v4057 = vmul.f32 %v4052, %v4056
      %4058 = vst.msk [vmem:[%s13] sm:$0xff] %vm4046, %v4057
    $region61: #{tpu_custom_call.1} parent=1 // pred_fallthru
      _
    // Predicated region
    $region62: #{tpu_custom_call.1} parent=1 // pred_check
      _
    $region63: #{tpu_custom_call.1} parent=1 // pred_check_branch
      %4060 = sbr.rel (0) target = $region65
    $region64: #{tpu_custom_call.1} parent=1 // pred_region
      _
    $region65: #{tpu_custom_call.1} parent=1 // pred_fallthru
      _
    // Predicated region
    $region66: #{tpu_custom_call.1} parent=1 // pred_check
      _
    $region67: #{tpu_custom_call.1} parent=1 // pred_check_branch
      %4062 = sbr.rel (0) target = $region69
    $region68: #{tpu_custom_call.1} parent=1 // pred_region
      %s4064 = ssub.s32 256, 256
      %4065 = vsyncadd [#allocation4], %s4064
      %s4067 = sshll.u32 [#allocation3], 4
      %s4068 = int_to_ptr.vmem [resolvable:$true] %s4067
      %4070 = dma.vmem_to_hbm [thread:$0]  %s4068, 256, %s14, [#allocation4]
    $region69: #{tpu_custom_call.1} parent=1 // pred_fallthru
      _
    // Predicated region
    $region70: #{tpu_custom_call.1} parent=1 // pred_check
      _
    $region71: #{tpu_custom_call.1} parent=1 // pred_check_branch
      %4072 = sbr.rel (0) target = $region73
    $region72: #{tpu_custom_call.1} parent=1 // pred_region
      _
    $region73: #{tpu_custom_call.1} parent=1 // pred_fallthru
      _
    // Predicated region
    $region74: #{tpu_custom_call.1} parent=1 // pred_check
      _
    $region75: #{tpu_custom_call.1} parent=1 // pred_check_branch
      %4074 = sbr.rel (0) target = $region77
    $region76: #{tpu_custom_call.1} parent=1 // pred_region
      %4075 = dma.done [#allocation4], 256
    $region77: #{tpu_custom_call.1} parent=1 // pred_fallthru
      _
    %4076 = vsyncpa [#allocation4], 1

</llo_original>
